<compile_context>
chip_gen: v6e
topology: v6e:2x2x1
jax: 0.10.0
libtpu: 0.0.40
codegen_flags: <defaults>
</compile_context>

<pallas_src>
import math

import jax
import jax.numpy as jnp
from jax.experimental import pallas as pl
from jax.experimental.pallas import tpu as pltpu

# ---------------- config (small, consistent with BertForSequenceClassification) ----
VOCAB = 128
HIDDEN = 32
NUM_LAYERS = 2
NUM_HEADS = 4
HEAD_DIM = HIDDEN // NUM_HEADS
INTERMEDIATE = 64
MAX_POS = 16
TYPE_VOCAB = 2
NUM_LABELS = 2
LN_EPS = 1e-12

BATCH = 2
SEQ = 8
TOKENS = BATCH * SEQ

VEC_WIDTH = 3 * HIDDEN          # widest packed bias row (bq|bk|bv = 96)
OUT_LANES = 128                 # lane-dense packed output slab


# ---------------------------------- helpers ----------------------------------------
def _layernorm(h, g, b):
    mu = jnp.mean(h, axis=-1, keepdims=True)
    var = jnp.mean((h - mu) ** 2, axis=-1, keepdims=True)
    return (h - mu) * jax.lax.rsqrt(var + LN_EPS) * g + b


def _gelu(x):
    # TODO(synk): tanh-approx GELU; HF BERT default hidden_act is the erf form.
    return 0.5 * x * (1.0 + jnp.tanh(0.7978845608028654 * (x + 0.044715 * x * x * x)))


# ---------------------------------- fused kernel -----------------------------------
def _bert_fused_kernel(ids_ref, keep_ref, embtab_ref, wqkv_ref, wo_ref,
                       wi_ref, wo2_ref, wpc_ref, vec_ref, out_ref):
    T, H, D, I = TOKENS, HIDDEN, HEAD_DIM, INTERMEDIATE
    scale = 1.0 / math.sqrt(D)

    ids = ids_ref[...]                       # (T, 4) int32: [token, segment, label, pad]
    tok = ids[:, 0:1]
    seg = ids[:, 1:2]
    lab = ids[:, 2:3]
    vecs = vec_ref[...]                      # (20, 96) packed bias / LayerNorm rows

    # ---- embeddings: word gather as one-hot MXU matmul; pos one-hot; type select ----
    oh_word = (jax.lax.broadcasted_iota(jnp.int32, (T, VOCAB), 1) == tok).astype(jnp.float32)
    we = jnp.dot(oh_word, embtab_ref[0:VOCAB, :], preferred_element_type=jnp.float32)

    # position one-hot without vector int div/mod: unrolled over the BATCH blocks
    row_t = jax.lax.broadcasted_iota(jnp.int32, (T, MAX_POS), 0)
    col_p = jax.lax.broadcasted_iota(jnp.int32, (T, MAX_POS), 1)
    oh_pos = jnp.zeros((T, MAX_POS), jnp.float32)
    for b in range(BATCH):
        in_blk = (row_t >= b * SEQ) & (row_t < (b + 1) * SEQ)
        oh_pos = oh_pos + (in_blk & (row_t == col_p + b * SEQ)).astype(jnp.float32)
    pe = jnp.dot(oh_pos, embtab_ref[VOCAB:VOCAB + MAX_POS, :],
                 preferred_element_type=jnp.float32)

    type_rows = embtab_ref[VOCAB + MAX_POS:VOCAB + MAX_POS + TYPE_VOCAB, :]   # (2, H)
    te = jnp.where(seg == 1, type_rows[1:2, :], type_rows[0:1, :])            # (T, H)

    x = _layernorm(we + pe + te, vecs[0:1, 0:H], vecs[1:2, 0:H])

    # ---- additive attention mask: padded keys AND cross-sequence keys -> -10000 ----
    qi = jax.lax.broadcasted_iota(jnp.int32, (T, T), 0)
    ki = jax.lax.broadcasted_iota(jnp.int32, (T, T), 1)
    same_seq = jnp.zeros((T, T), jnp.float32)
    for b in range(BATCH):
        qin = (qi >= b * SEQ) & (qi < (b + 1) * SEQ)
        kin = (ki >= b * SEQ) & (ki < (b + 1) * SEQ)
        same_seq = same_seq + (qin & kin).astype(jnp.float32)
    mask_add = (1.0 - same_seq * keep_ref[...]) * -10000.0                    # (T, T)

    # ---- encoder layers (unrolled) ----
    for l in range(NUM_LAYERS):
        r = l * H
        vb = 2 + 8 * l
        # fused QKV: one lane-dense (T,H)x(H,3H) matmul, per-head lane slices below
        qkv = jnp.dot(x, wqkv_ref[r:r + H, :],
                      preferred_element_type=jnp.float32) + vecs[vb:vb + 1, 0:3 * H]

        ctx_heads = []
        for h in range(NUM_HEADS):
            q = qkv[:, h * D:(h + 1) * D]
            k = qkv[:, H + h * D:H + (h + 1) * D]
            v = qkv[:, 2 * H + h * D:2 * H + (h + 1) * D]
            s = jnp.einsum("qd,kd->qk", q, k,
                           preferred_element_type=jnp.float32) * scale + mask_add
            # no row-max: scores are bounded; masked entries underflow to exactly 0
            p = jnp.exp(s)
            p = p * pl.reciprocal(jnp.sum(p, axis=-1, keepdims=True), approx=True)
            ctx_heads.append(jnp.dot(p, v, preferred_element_type=jnp.float32))  # (T, D)
        ctx = jnp.concatenate(ctx_heads, axis=-1)                                # (T, H)

        attn = jnp.dot(ctx, wo_ref[r:r + H, :],
                       preferred_element_type=jnp.float32) + vecs[vb + 1:vb + 2, 0:H]
        x = _layernorm(attn + x, vecs[vb + 2:vb + 3, 0:H], vecs[vb + 3:vb + 4, 0:H])

        inter = _gelu(jnp.dot(x, wi_ref[r:r + H, :],
                              preferred_element_type=jnp.float32)
                      + vecs[vb + 4:vb + 5, 0:I])
        ffo = jnp.dot(inter, wo2_ref[l * I:(l + 1) * I, :],
                      preferred_element_type=jnp.float32) + vecs[vb + 5:vb + 6, 0:H]
        x = _layernorm(ffo + x, vecs[vb + 6:vb + 7, 0:H], vecs[vb + 7:vb + 8, 0:H])

    # ---- pooler + classifier (computed for every token; CLS rows picked outside) ----
    wpc = wpc_ref[...]                                        # (H, H + NUM_LABELS)
    bp = vecs[2 + 8 * NUM_LAYERS:3 + 8 * NUM_LAYERS, 0:H]
    bc = vecs[3 + 8 * NUM_LAYERS:4 + 8 * NUM_LAYERS, 0:NUM_LABELS]
    pooled = jnp.tanh(jnp.dot(x, wpc[:, 0:H], preferred_element_type=jnp.float32) + bp)
    logits = jnp.dot(pooled, wpc[:, H:H + NUM_LABELS],
                     preferred_element_type=jnp.float32) + bc                  # (T, C)

    # ---- exact softmax probabilities + per-token cross-entropy ----
    m = jnp.max(logits, axis=-1, keepdims=True)
    e = jnp.exp(logits - m)
    ssum = jnp.sum(e, axis=-1, keepdims=True)
    logp = (logits - m) - jnp.log(ssum)
    probs = e / ssum
    lab_oh = (jax.lax.broadcasted_iota(jnp.int32, (T, NUM_LABELS), 1) == lab
              ).astype(jnp.float32)
    loss_tok = -jnp.sum(lab_oh * logp, axis=-1, keepdims=True)                 # (T, 1)

    # ---- single lane-dense (T, 128) output slab ----
    out_ref[...] = jnp.zeros_like(out_ref)
    out_ref[:, 0:NUM_LABELS] = logits
    out_ref[:, NUM_LABELS:2 * NUM_LABELS] = probs
    out_ref[:, 2 * NUM_LABELS:2 * NUM_LABELS + 1] = loss_tok


# --------------------------- parameter initialization -------------------------------
def init_params(key):
    def nrm(k, shape):
        return jax.random.normal(k, shape, jnp.float32) * 0.02

    keys = jax.random.split(key, 8 + NUM_LAYERS)
    params = {
        "word_emb": nrm(keys[0], (VOCAB, HIDDEN)),
        "pos_emb": nrm(keys[1], (MAX_POS, HIDDEN)),
        "type_emb": nrm(keys[2], (TYPE_VOCAB, HIDDEN)),
        "emb_ln_g": jnp.ones((1, HIDDEN), jnp.float32),
        "emb_ln_b": jnp.zeros((1, HIDDEN), jnp.float32),
        "wp": nrm(keys[3], (HIDDEN, HIDDEN)),
        "bp": jnp.zeros((1, HIDDEN), jnp.float32),
        "wc": nrm(keys[4], (HIDDEN, NUM_LABELS)),
        "bc": jnp.zeros((1, NUM_LABELS), jnp.float32),
        "layers": [],
    }
    for l in range(NUM_LAYERS):
        lk = jax.random.split(keys[8 + l], 6)
        params["layers"].append({
            "wq": nrm(lk[0], (HIDDEN, HIDDEN)), "bq": jnp.zeros((1, HIDDEN), jnp.float32),
            "wk": nrm(lk[1], (HIDDEN, HIDDEN)), "bk": jnp.zeros((1, HIDDEN), jnp.float32),
            "wv": nrm(lk[2], (HIDDEN, HIDDEN)), "bv": jnp.zeros((1, HIDDEN), jnp.float32),
            "wo": nrm(lk[3], (HIDDEN, HIDDEN)), "bo": jnp.zeros((1, HIDDEN), jnp.float32),
            "ln1_g": jnp.ones((1, HIDDEN), jnp.float32),
            "ln1_b": jnp.zeros((1, HIDDEN), jnp.float32),
            "wi": nrm(lk[4], (HIDDEN, INTERMEDIATE)),
            "bi": jnp.zeros((1, INTERMEDIATE), jnp.float32),
            "wo2": nrm(lk[5], (INTERMEDIATE, HIDDEN)),
            "bo2": jnp.zeros((1, HIDDEN), jnp.float32),
            "ln2_g": jnp.ones((1, HIDDEN), jnp.float32),
            "ln2_b": jnp.zeros((1, HIDDEN), jnp.float32),
        })
    return params


def pack_params(params):
    """Run ONCE per params (outside the jitted forward): consolidate ~25 small
    tensors into 7 slabs so the kernel takes few operands / prologue DMAs."""
    H, I = HIDDEN, INTERMEDIATE
    emb_tables = jnp.concatenate(
        [params["word_emb"], params["pos_emb"], params["type_emb"]], axis=0)     # (146, H)

    wqkv = jnp.concatenate(
        [jnp.concatenate([l["wq"], l["wk"], l["wv"]], axis=1) for l in params["layers"]],
        axis=0)                                                                  # (L*H, 3H)
    wo_all = jnp.concatenate([l["wo"] for l in params["layers"]], axis=0)        # (L*H, H)
    wi_all = jnp.concatenate([l["wi"] for l in params["layers"]], axis=0)        # (L*H, I)
    wo2_all = jnp.concatenate([l["wo2"] for l in params["layers"]], axis=0)      # (L*I, H)
    wpc = jnp.concatenate([params["wp"], params["wc"]], axis=1)                  # (H, H+C)

    def row(v):
        v = jnp.asarray(v, jnp.float32).reshape(1, -1)
        return jnp.pad(v, ((0, 0), (0, VEC_WIDTH - v.shape[1])))

    rows = [row(params["emb_ln_g"]), row(params["emb_ln_b"])]
    for l in params["layers"]:
        rows += [row(jnp.concatenate([l["bq"], l["bk"], l["bv"]], axis=1)),
                 row(l["bo"]), row(l["ln1_g"]), row(l["ln1_b"]),
                 row(l["bi"]), row(l["bo2"]), row(l["ln2_g"]), row(l["ln2_b"])]
    rows += [row(params["bp"]), row(params["bc"])]
    vecs = jnp.concatenate(rows, axis=0)                                         # (20, 96)

    return {"emb_tables": emb_tables, "wqkv": wqkv, "wo": wo_all, "wi": wi_all,
            "wo2": wo2_all, "wpc": wpc, "vecs": vecs}


# --------------------------------- forward pass -------------------------------------
def bert_model_test_forward(packed, batch_seqs, batch_seq_masks, batch_seq_segments, labels):
    B, S = batch_seqs.shape
    T = B * S

    label_tok = jnp.repeat(labels.astype(jnp.int32), S)                          # (T,)
    ids = jnp.stack([batch_seqs.reshape(T).astype(jnp.int32),
                     batch_seq_segments.reshape(T).astype(jnp.int32),
                     label_tok,
                     jnp.zeros((T,), jnp.int32)], axis=1)                        # (T, 4)
    key_keep = batch_seq_masks.astype(jnp.float32).reshape(1, T)                 # (1, T)

    out = pl.pallas_call(
        _bert_fused_kernel,
        out_shape=jax.ShapeDtypeStruct((T, OUT_LANES), jnp.float32),
        compiler_params=pltpu.CompilerParams(vmem_limit_bytes=32 * 1024 * 1024),
    )(ids, key_keep, packed["emb_tables"], packed["wqkv"], packed["wo"],
      packed["wi"], packed["wo2"], packed["wpc"], packed["vecs"])

    # --- pick the CLS row of each sequence; batch-mean loss (tiny host glue) ---
    cls_rows = jnp.arange(B) * S
    logits = out[cls_rows, 0:NUM_LABELS]
    probabilities = out[cls_rows, NUM_LABELS:2 * NUM_LABELS]
    loss = jnp.mean(out[cls_rows, 2 * NUM_LABELS])
    return loss, logits, probabilities


# ------------------------------------ main ------------------------------------------
if __name__ == "__main__":
    key = jax.random.PRNGKey(0)
    pkey, ik, mk, sk, lk = jax.random.split(key, 5)

    params = init_params(pkey)
    packed = jax.block_until_ready(pack_params(params))   # hoisted out of the jitted fwd

    batch_seqs = jax.random.randint(ik, (BATCH, SEQ), 0, VOCAB, dtype=jnp.int32)
    batch_seq_masks = jnp.concatenate(
        [jnp.ones((BATCH, SEQ - 2), jnp.int32), jnp.zeros((BATCH, 2), jnp.int32)], axis=1)
    batch_seq_segments = jax.random.randint(sk, (BATCH, SEQ), 0, TYPE_VOCAB, dtype=jnp.int32)
    labels = jax.random.randint(lk, (BATCH,), 0, NUM_LABELS, dtype=jnp.int32)

    fwd = jax.jit(bert_model_test_forward)
    loss, logits, probabilities = fwd(
        packed, batch_seqs, batch_seq_masks, batch_seq_segments, labels)
    jax.block_until_ready((loss, logits, probabilities))

    assert logits.shape == (BATCH, NUM_LABELS)
    assert probabilities.shape == (BATCH, NUM_LABELS)
    assert loss.shape == ()
    print("KERNEL_OK")
</pallas_src>

<mosaic_0001>
module attributes {stable_mosaic.version = 11 : i64} {
  func.func @_bert_fused_kernel(%arg0: memref<16x4xi32, #tpu.memory_space<vmem>>, %arg1: memref<1x16xf32, #tpu.memory_space<vmem>>, %arg2: memref<146x32xf32, #tpu.memory_space<vmem>>, %arg3: memref<64x96xf32, #tpu.memory_space<vmem>>, %arg4: memref<64x32xf32, #tpu.memory_space<vmem>>, %arg5: memref<64x64xf32, #tpu.memory_space<vmem>>, %arg6: memref<128x32xf32, #tpu.memory_space<vmem>>, %arg7: memref<32x34xf32, #tpu.memory_space<vmem>>, %arg8: memref<20x96xf32, #tpu.memory_space<vmem>>, %arg9: memref<16x128xf32, #tpu.memory_space<vmem>>) attributes {dimension_semantics = [], scalar_prefetch = 0 : i64, scratch_operands = 0 : i64, tpu.core_type = #tpu.core_type<tc>} {
    %c0 = arith.constant 0 : index
    %c0_0 = arith.constant 0 : index
    %0 = vector.load %arg0[%c0, %c0_0] : memref<16x4xi32, #tpu.memory_space<vmem>>, vector<16x4xi32>
    %1 = vector.extract_strided_slice %0 {offsets = [0, 0], sizes = [16, 1], strides = [1, 1]} : vector<16x4xi32> to vector<16x1xi32>
    %2 = vector.extract_strided_slice %0 {offsets = [0, 1], sizes = [16, 1], strides = [1, 1]} : vector<16x4xi32> to vector<16x1xi32>
    %3 = vector.extract_strided_slice %0 {offsets = [0, 2], sizes = [16, 1], strides = [1, 1]} : vector<16x4xi32> to vector<16x1xi32>
    %c0_1 = arith.constant 0 : index
    %c0_2 = arith.constant 0 : index
    %4 = vector.load %arg8[%c0_1, %c0_2] : memref<20x96xf32, #tpu.memory_space<vmem>>, vector<20x96xf32>
    %5 = tpu.iota {dimensions = array<i32: 1>} : vector<16x128xi32>
    %6 = vector.broadcast %1 : vector<16x1xi32> to vector<16x128xi32>
    %7 = arith.cmpi eq, %5, %6 : vector<16x128xi32>
    %8 = arith.extui %7 : vector<16x128xi1> to vector<16x128xi32>
    %9 = arith.sitofp %8 : vector<16x128xi32> to vector<16x128xf32>
    %c0_3 = arith.constant 0 : index
    %c0_4 = arith.constant 0 : index
    %10 = vector.load %arg2[%c0_3, %c0_4] : memref<146x32xf32, #tpu.memory_space<vmem>>, vector<128x32xf32>
    %cst = arith.constant dense<0.000000e+00> : vector<16x32xf32>
    %11 = tpu.matmul %9, %10, %cst {dimension_numbers = #tpu.dot_dimension_numbers<[1], [0], [0], [1], [0, 0, 1, 1], [], []>} : vector<16x128xf32>, vector<128x32xf32>, vector<16x32xf32> -> vector<16x32xf32>
    %12 = tpu.iota {dimensions = array<i32: 0>} : vector<16x16xi32>
    %13 = tpu.iota {dimensions = array<i32: 1>} : vector<16x16xi32>
    %cst_5 = arith.constant 0.000000e+00 : f32
    %14 = vector.broadcast %cst_5 : f32 to vector<16x16xf32>
    %c0_i32 = arith.constant 0 : i32
    %15 = vector.broadcast %c0_i32 : i32 to vector<16x16xi32>
    %16 = arith.cmpi sge, %12, %15 : vector<16x16xi32>
    %c8_i32 = arith.constant 8 : i32
    %17 = vector.broadcast %c8_i32 : i32 to vector<16x16xi32>
    %18 = arith.cmpi slt, %12, %17 : vector<16x16xi32>
    %19 = arith.andi %16, %18 : vector<16x16xi1>
    %c0_i32_6 = arith.constant 0 : i32
    %20 = vector.broadcast %c0_i32_6 : i32 to vector<16x16xi32>
    %21 = arith.addi %13, %20 : vector<16x16xi32>
    %22 = arith.cmpi eq, %12, %21 : vector<16x16xi32>
    %23 = arith.andi %19, %22 : vector<16x16xi1>
    %24 = arith.extui %23 : vector<16x16xi1> to vector<16x16xi32>
    %25 = arith.sitofp %24 : vector<16x16xi32> to vector<16x16xf32>
    %26 = arith.addf %14, %25 : vector<16x16xf32>
    %c8_i32_7 = arith.constant 8 : i32
    %27 = vector.broadcast %c8_i32_7 : i32 to vector<16x16xi32>
    %28 = arith.cmpi sge, %12, %27 : vector<16x16xi32>
    %c16_i32 = arith.constant 16 : i32
    %29 = vector.broadcast %c16_i32 : i32 to vector<16x16xi32>
    %30 = arith.cmpi slt, %12, %29 : vector<16x16xi32>
    %31 = arith.andi %28, %30 : vector<16x16xi1>
    %c8_i32_8 = arith.constant 8 : i32
    %32 = vector.broadcast %c8_i32_8 : i32 to vector<16x16xi32>
    %33 = arith.addi %13, %32 : vector<16x16xi32>
    %34 = arith.cmpi eq, %12, %33 : vector<16x16xi32>
    %35 = arith.andi %31, %34 : vector<16x16xi1>
    %36 = arith.extui %35 : vector<16x16xi1> to vector<16x16xi32>
    %37 = arith.sitofp %36 : vector<16x16xi32> to vector<16x16xf32>
    %38 = arith.addf %26, %37 : vector<16x16xf32>
    %c128 = arith.constant 128 : index
    %c0_9 = arith.constant 0 : index
    %39 = vector.load %arg2[%c128, %c0_9] : memref<146x32xf32, #tpu.memory_space<vmem>>, vector<16x32xf32>
    %cst_10 = arith.constant dense<0.000000e+00> : vector<16x32xf32>
    %40 = tpu.matmul %38, %39, %cst_10 {dimension_numbers = #tpu.dot_dimension_numbers<[1], [0], [0], [1], [0, 0, 1, 1], [], []>} : vector<16x16xf32>, vector<16x32xf32>, vector<16x32xf32> -> vector<16x32xf32>
    %c144 = arith.constant 144 : index
    %c0_11 = arith.constant 0 : index
    %41 = vector.load %arg2[%c144, %c0_11] : memref<146x32xf32, #tpu.memory_space<vmem>>, vector<2x32xf32>
    %c1_i32 = arith.constant 1 : i32
    %42 = vector.broadcast %c1_i32 : i32 to vector<16x1xi32>
    %43 = arith.cmpi eq, %2, %42 : vector<16x1xi32>
    %44 = vector.extract_strided_slice %41 {offsets = [1, 0], sizes = [1, 32], strides = [1, 1]} : vector<2x32xf32> to vector<1x32xf32>
    %45 = vector.extract_strided_slice %41 {offsets = [0, 0], sizes = [1, 32], strides = [1, 1]} : vector<2x32xf32> to vector<1x32xf32>
    %46 = vector.shape_cast %43 : vector<16x1xi1> to vector<16x1xi1>
    %47 = vector.broadcast %46 : vector<16x1xi1> to vector<16x32xi1>
    %48 = vector.shape_cast %44 : vector<1x32xf32> to vector<1x32xf32>
    %49 = vector.broadcast %48 : vector<1x32xf32> to vector<16x32xf32>
    %50 = vector.shape_cast %45 : vector<1x32xf32> to vector<1x32xf32>
    %51 = vector.broadcast %50 : vector<1x32xf32> to vector<16x32xf32>
    %52 = arith.select %47, %49, %51 : vector<16x32xi1>, vector<16x32xf32>
    %53 = arith.addf %11, %40 : vector<16x32xf32>
    %54 = arith.addf %53, %52 : vector<16x32xf32>
    %55 = vector.extract_strided_slice %4 {offsets = [0, 0], sizes = [1, 32], strides = [1, 1]} : vector<20x96xf32> to vector<1x32xf32>
    %56 = vector.extract_strided_slice %4 {offsets = [1, 0], sizes = [1, 32], strides = [1, 1]} : vector<20x96xf32> to vector<1x32xf32>
    %cst_12 = arith.constant dense<0.000000e+00> : vector<16xf32>
    %57 = vector.multi_reduction <add>, %54, %cst_12 [1] : vector<16x32xf32> to vector<16xf32>
    %58 = vector.shape_cast %57 : vector<16xf32> to vector<16x1xf32>
    %cst_13 = arith.constant 3.200000e+01 : f32
    %59 = vector.broadcast %cst_13 : f32 to vector<16x1xf32>
    %60 = arith.divf %58, %59 : vector<16x1xf32>
    %61 = vector.broadcast %60 : vector<16x1xf32> to vector<16x32xf32>
    %62 = arith.subf %54, %61 : vector<16x32xf32>
    %63 = arith.mulf %62, %62 : vector<16x32xf32>
    %cst_14 = arith.constant dense<0.000000e+00> : vector<16xf32>
    %64 = vector.multi_reduction <add>, %63, %cst_14 [1] : vector<16x32xf32> to vector<16xf32>
    %65 = vector.shape_cast %64 : vector<16xf32> to vector<16x1xf32>
    %cst_15 = arith.constant 3.200000e+01 : f32
    %66 = vector.broadcast %cst_15 : f32 to vector<16x1xf32>
    %67 = arith.divf %65, %66 : vector<16x1xf32>
    %68 = vector.broadcast %60 : vector<16x1xf32> to vector<16x32xf32>
    %69 = arith.subf %54, %68 : vector<16x32xf32>
    %cst_16 = arith.constant 9.99999996E-13 : f32
    %70 = vector.broadcast %cst_16 : f32 to vector<16x1xf32>
    %71 = arith.addf %67, %70 : vector<16x1xf32>
    %72 = math.rsqrt %71 : vector<16x1xf32>
    %73 = vector.broadcast %72 : vector<16x1xf32> to vector<16x32xf32>
    %74 = arith.mulf %69, %73 : vector<16x32xf32>
    %75 = vector.broadcast %55 : vector<1x32xf32> to vector<16x32xf32>
    %76 = arith.mulf %74, %75 : vector<16x32xf32>
    %77 = vector.broadcast %56 : vector<1x32xf32> to vector<16x32xf32>
    %78 = arith.addf %76, %77 : vector<16x32xf32>
    %79 = tpu.iota {dimensions = array<i32: 0>} : vector<16x16xi32>
    %80 = tpu.iota {dimensions = array<i32: 1>} : vector<16x16xi32>
    %cst_17 = arith.constant 0.000000e+00 : f32
    %81 = vector.broadcast %cst_17 : f32 to vector<16x16xf32>
    %c0_i32_18 = arith.constant 0 : i32
    %82 = vector.broadcast %c0_i32_18 : i32 to vector<16x16xi32>
    %83 = arith.cmpi sge, %79, %82 : vector<16x16xi32>
    %c8_i32_19 = arith.constant 8 : i32
    %84 = vector.broadcast %c8_i32_19 : i32 to vector<16x16xi32>
    %85 = arith.cmpi slt, %79, %84 : vector<16x16xi32>
    %86 = arith.andi %83, %85 : vector<16x16xi1>
    %c0_i32_20 = arith.constant 0 : i32
    %87 = vector.broadcast %c0_i32_20 : i32 to vector<16x16xi32>
    %88 = arith.cmpi sge, %80, %87 : vector<16x16xi32>
    %c8_i32_21 = arith.constant 8 : i32
    %89 = vector.broadcast %c8_i32_21 : i32 to vector<16x16xi32>
    %90 = arith.cmpi slt, %80, %89 : vector<16x16xi32>
    %91 = arith.andi %88, %90 : vector<16x16xi1>
    %92 = arith.andi %86, %91 : vector<16x16xi1>
    %93 = arith.extui %92 : vector<16x16xi1> to vector<16x16xi32>
    %94 = arith.sitofp %93 : vector<16x16xi32> to vector<16x16xf32>
    %95 = arith.addf %81, %94 : vector<16x16xf32>
    %c8_i32_22 = arith.constant 8 : i32
    %96 = vector.broadcast %c8_i32_22 : i32 to vector<16x16xi32>
    %97 = arith.cmpi sge, %79, %96 : vector<16x16xi32>
    %c16_i32_23 = arith.constant 16 : i32
    %98 = vector.broadcast %c16_i32_23 : i32 to vector<16x16xi32>
    %99 = arith.cmpi slt, %79, %98 : vector<16x16xi32>
    %100 = arith.andi %97, %99 : vector<16x16xi1>
    %c8_i32_24 = arith.constant 8 : i32
    %101 = vector.broadcast %c8_i32_24 : i32 to vector<16x16xi32>
    %102 = arith.cmpi sge, %80, %101 : vector<16x16xi32>
    %c16_i32_25 = arith.constant 16 : i32
    %103 = vector.broadcast %c16_i32_25 : i32 to vector<16x16xi32>
    %104 = arith.cmpi slt, %80, %103 : vector<16x16xi32>
    %105 = arith.andi %102, %104 : vector<16x16xi1>
    %106 = arith.andi %100, %105 : vector<16x16xi1>
    %107 = arith.extui %106 : vector<16x16xi1> to vector<16x16xi32>
    %108 = arith.sitofp %107 : vector<16x16xi32> to vector<16x16xf32>
    %109 = arith.addf %95, %108 : vector<16x16xf32>
    %c0_26 = arith.constant 0 : index
    %c0_27 = arith.constant 0 : index
    %110 = vector.load %arg1[%c0_26, %c0_27] : memref<1x16xf32, #tpu.memory_space<vmem>>, vector<1x16xf32>
    %111 = vector.broadcast %110 : vector<1x16xf32> to vector<16x16xf32>
    %112 = arith.mulf %109, %111 : vector<16x16xf32>
    %cst_28 = arith.constant 1.000000e+00 : f32
    %113 = vector.broadcast %cst_28 : f32 to vector<16x16xf32>
    %114 = arith.subf %113, %112 : vector<16x16xf32>
    %cst_29 = arith.constant -1.000000e+04 : f32
    %115 = vector.broadcast %cst_29 : f32 to vector<16x16xf32>
    %116 = arith.mulf %114, %115 : vector<16x16xf32>
    %c0_30 = arith.constant 0 : index
    %c0_31 = arith.constant 0 : index
    %117 = vector.load %arg3[%c0_30, %c0_31] : memref<64x96xf32, #tpu.memory_space<vmem>>, vector<32x96xf32>
    %cst_32 = arith.constant dense<0.000000e+00> : vector<16x96xf32>
    %118 = tpu.matmul %78, %117, %cst_32 {dimension_numbers = #tpu.dot_dimension_numbers<[1], [0], [0], [1], [0, 0, 1, 1], [], []>} : vector<16x32xf32>, vector<32x96xf32>, vector<16x96xf32> -> vector<16x96xf32>
    %119 = vector.extract_strided_slice %4 {offsets = [2, 0], sizes = [1, 96], strides = [1, 1]} : vector<20x96xf32> to vector<1x96xf32>
    %120 = vector.broadcast %119 : vector<1x96xf32> to vector<16x96xf32>
    %121 = arith.addf %118, %120 : vector<16x96xf32>
    %122 = vector.extract_strided_slice %121 {offsets = [0, 0], sizes = [16, 8], strides = [1, 1]} : vector<16x96xf32> to vector<16x8xf32>
    %123 = vector.extract_strided_slice %121 {offsets = [0, 32], sizes = [16, 8], strides = [1, 1]} : vector<16x96xf32> to vector<16x8xf32>
    %124 = vector.extract_strided_slice %121 {offsets = [0, 64], sizes = [16, 8], strides = [1, 1]} : vector<16x96xf32> to vector<16x8xf32>
    "tpu.trace_start"() <{level = 10 : i32, message = "qd,kd->qk"}> : () -> ()
    %cst_33 = arith.constant dense<0.000000e+00> : vector<16x16xf32>
    %125 = tpu.matmul %122, %123, %cst_33 {dimension_numbers = #tpu.dot_dimension_numbers<[1], [1], [0], [0], [0, 0, 1, 0], [], []>} : vector<16x8xf32>, vector<16x8xf32>, vector<16x16xf32> -> vector<16x16xf32>
    "tpu.trace_stop"() : () -> ()
    %cst_34 = arith.constant 0.353553385 : f32
    %126 = vector.broadcast %cst_34 : f32 to vector<16x16xf32>
    %127 = arith.mulf %125, %126 : vector<16x16xf32>
    %128 = arith.addf %127, %116 : vector<16x16xf32>
    %129 = math.exp %128 : vector<16x16xf32>
    %cst_35 = arith.constant dense<0.000000e+00> : vector<16xf32>
    %130 = vector.multi_reduction <add>, %129, %cst_35 [1] : vector<16x16xf32> to vector<16xf32>
    %131 = vector.shape_cast %130 : vector<16xf32> to vector<16x1xf32>
    %132 = tpu.reciprocal %131 {approx = true} : vector<16x1xf32> -> vector<16x1xf32>
    %133 = vector.broadcast %132 : vector<16x1xf32> to vector<16x16xf32>
    %134 = arith.mulf %129, %133 : vector<16x16xf32>
    %cst_36 = arith.constant dense<0.000000e+00> : vector<16x8xf32>
    %135 = tpu.matmul %134, %124, %cst_36 {dimension_numbers = #tpu.dot_dimension_numbers<[1], [0], [0], [1], [0, 0, 1, 1], [], []>} : vector<16x16xf32>, vector<16x8xf32>, vector<16x8xf32> -> vector<16x8xf32>
    %136 = vector.extract_strided_slice %121 {offsets = [0, 8], sizes = [16, 8], strides = [1, 1]} : vector<16x96xf32> to vector<16x8xf32>
    %137 = vector.extract_strided_slice %121 {offsets = [0, 40], sizes = [16, 8], strides = [1, 1]} : vector<16x96xf32> to vector<16x8xf32>
    %138 = vector.extract_strided_slice %121 {offsets = [0, 72], sizes = [16, 8], strides = [1, 1]} : vector<16x96xf32> to vector<16x8xf32>
    "tpu.trace_start"() <{level = 10 : i32, message = "qd,kd->qk"}> : () -> ()
    %cst_37 = arith.constant dense<0.000000e+00> : vector<16x16xf32>
    %139 = tpu.matmul %136, %137, %cst_37 {dimension_numbers = #tpu.dot_dimension_numbers<[1], [1], [0], [0], [0, 0, 1, 0], [], []>} : vector<16x8xf32>, vector<16x8xf32>, vector<16x16xf32> -> vector<16x16xf32>
    "tpu.trace_stop"() : () -> ()
    %cst_38 = arith.constant 0.353553385 : f32
    %140 = vector.broadcast %cst_38 : f32 to vector<16x16xf32>
    %141 = arith.mulf %139, %140 : vector<16x16xf32>
    %142 = arith.addf %141, %116 : vector<16x16xf32>
    %143 = math.exp %142 : vector<16x16xf32>
    %cst_39 = arith.constant dense<0.000000e+00> : vector<16xf32>
    %144 = vector.multi_reduction <add>, %143, %cst_39 [1] : vector<16x16xf32> to vector<16xf32>
    %145 = vector.shape_cast %144 : vector<16xf32> to vector<16x1xf32>
    %146 = tpu.reciprocal %145 {approx = true} : vector<16x1xf32> -> vector<16x1xf32>
    %147 = vector.broadcast %146 : vector<16x1xf32> to vector<16x16xf32>
    %148 = arith.mulf %143, %147 : vector<16x16xf32>
    %cst_40 = arith.constant dense<0.000000e+00> : vector<16x8xf32>
    %149 = tpu.matmul %148, %138, %cst_40 {dimension_numbers = #tpu.dot_dimension_numbers<[1], [0], [0], [1], [0, 0, 1, 1], [], []>} : vector<16x16xf32>, vector<16x8xf32>, vector<16x8xf32> -> vector<16x8xf32>
    %150 = vector.extract_strided_slice %121 {offsets = [0, 16], sizes = [16, 8], strides = [1, 1]} : vector<16x96xf32> to vector<16x8xf32>
    %151 = vector.extract_strided_slice %121 {offsets = [0, 48], sizes = [16, 8], strides = [1, 1]} : vector<16x96xf32> to vector<16x8xf32>
    %152 = vector.extract_strided_slice %121 {offsets = [0, 80], sizes = [16, 8], strides = [1, 1]} : vector<16x96xf32> to vector<16x8xf32>
    "tpu.trace_start"() <{level = 10 : i32, message = "qd,kd->qk"}> : () -> ()
    %cst_41 = arith.constant dense<0.000000e+00> : vector<16x16xf32>
    %153 = tpu.matmul %150, %151, %cst_41 {dimension_numbers = #tpu.dot_dimension_numbers<[1], [1], [0], [0], [0, 0, 1, 0], [], []>} : vector<16x8xf32>, vector<16x8xf32>, vector<16x16xf32> -> vector<16x16xf32>
    "tpu.trace_stop"() : () -> ()
    %cst_42 = arith.constant 0.353553385 : f32
    %154 = vector.broadcast %cst_42 : f32 to vector<16x16xf32>
    %155 = arith.mulf %153, %154 : vector<16x16xf32>
    %156 = arith.addf %155, %116 : vector<16x16xf32>
    %157 = math.exp %156 : vector<16x16xf32>
    %cst_43 = arith.constant dense<0.000000e+00> : vector<16xf32>
    %158 = vector.multi_reduction <add>, %157, %cst_43 [1] : vector<16x16xf32> to vector<16xf32>
    %159 = vector.shape_cast %158 : vector<16xf32> to vector<16x1xf32>
    %160 = tpu.reciprocal %159 {approx = true} : vector<16x1xf32> -> vector<16x1xf32>
    %161 = vector.broadcast %160 : vector<16x1xf32> to vector<16x16xf32>
    %162 = arith.mulf %157, %161 : vector<16x16xf32>
    %cst_44 = arith.constant dense<0.000000e+00> : vector<16x8xf32>
    %163 = tpu.matmul %162, %152, %cst_44 {dimension_numbers = #tpu.dot_dimension_numbers<[1], [0], [0], [1], [0, 0, 1, 1], [], []>} : vector<16x16xf32>, vector<16x8xf32>, vector<16x8xf32> -> vector<16x8xf32>
    %164 = vector.extract_strided_slice %121 {offsets = [0, 24], sizes = [16, 8], strides = [1, 1]} : vector<16x96xf32> to vector<16x8xf32>
    %165 = vector.extract_strided_slice %121 {offsets = [0, 56], sizes = [16, 8], strides = [1, 1]} : vector<16x96xf32> to vector<16x8xf32>
    %166 = vector.extract_strided_slice %121 {offsets = [0, 88], sizes = [16, 8], strides = [1, 1]} : vector<16x96xf32> to vector<16x8xf32>
    "tpu.trace_start"() <{level = 10 : i32, message = "qd,kd->qk"}> : () -> ()
    %cst_45 = arith.constant dense<0.000000e+00> : vector<16x16xf32>
    %167 = tpu.matmul %164, %165, %cst_45 {dimension_numbers = #tpu.dot_dimension_numbers<[1], [1], [0], [0], [0, 0, 1, 0], [], []>} : vector<16x8xf32>, vector<16x8xf32>, vector<16x16xf32> -> vector<16x16xf32>
    "tpu.trace_stop"() : () -> ()
    %cst_46 = arith.constant 0.353553385 : f32
    %168 = vector.broadcast %cst_46 : f32 to vector<16x16xf32>
    %169 = arith.mulf %167, %168 : vector<16x16xf32>
    %170 = arith.addf %169, %116 : vector<16x16xf32>
    %171 = math.exp %170 : vector<16x16xf32>
    %cst_47 = arith.constant dense<0.000000e+00> : vector<16xf32>
    %172 = vector.multi_reduction <add>, %171, %cst_47 [1] : vector<16x16xf32> to vector<16xf32>
    %173 = vector.shape_cast %172 : vector<16xf32> to vector<16x1xf32>
    %174 = tpu.reciprocal %173 {approx = true} : vector<16x1xf32> -> vector<16x1xf32>
    %175 = vector.broadcast %174 : vector<16x1xf32> to vector<16x16xf32>
    %176 = arith.mulf %171, %175 : vector<16x16xf32>
    %cst_48 = arith.constant dense<0.000000e+00> : vector<16x8xf32>
    %177 = tpu.matmul %176, %166, %cst_48 {dimension_numbers = #tpu.dot_dimension_numbers<[1], [0], [0], [1], [0, 0, 1, 1], [], []>} : vector<16x16xf32>, vector<16x8xf32>, vector<16x8xf32> -> vector<16x8xf32>
    %178 = tpu.concatenate %135, %149, %163, %177 in 1 : vector<16x8xf32>, vector<16x8xf32>, vector<16x8xf32>, vector<16x8xf32> -> vector<16x32xf32>
    %c0_49 = arith.constant 0 : index
    %c0_50 = arith.constant 0 : index
    %179 = vector.load %arg4[%c0_49, %c0_50] : memref<64x32xf32, #tpu.memory_space<vmem>>, vector<32x32xf32>
    %cst_51 = arith.constant dense<0.000000e+00> : vector<16x32xf32>
    %180 = tpu.matmul %178, %179, %cst_51 {dimension_numbers = #tpu.dot_dimension_numbers<[1], [0], [0], [1], [0, 0, 1, 1], [], []>} : vector<16x32xf32>, vector<32x32xf32>, vector<16x32xf32> -> vector<16x32xf32>
    %181 = vector.extract_strided_slice %4 {offsets = [3, 0], sizes = [1, 32], strides = [1, 1]} : vector<20x96xf32> to vector<1x32xf32>
    %182 = vector.broadcast %181 : vector<1x32xf32> to vector<16x32xf32>
    %183 = arith.addf %180, %182 : vector<16x32xf32>
    %184 = arith.addf %183, %78 : vector<16x32xf32>
    %185 = vector.extract_strided_slice %4 {offsets = [4, 0], sizes = [1, 32], strides = [1, 1]} : vector<20x96xf32> to vector<1x32xf32>
    %186 = vector.extract_strided_slice %4 {offsets = [5, 0], sizes = [1, 32], strides = [1, 1]} : vector<20x96xf32> to vector<1x32xf32>
    %cst_52 = arith.constant dense<0.000000e+00> : vector<16xf32>
    %187 = vector.multi_reduction <add>, %184, %cst_52 [1] : vector<16x32xf32> to vector<16xf32>
    %188 = vector.shape_cast %187 : vector<16xf32> to vector<16x1xf32>
    %cst_53 = arith.constant 3.200000e+01 : f32
    %189 = vector.broadcast %cst_53 : f32 to vector<16x1xf32>
    %190 = arith.divf %188, %189 : vector<16x1xf32>
    %191 = vector.broadcast %190 : vector<16x1xf32> to vector<16x32xf32>
    %192 = arith.subf %184, %191 : vector<16x32xf32>
    %193 = arith.mulf %192, %192 : vector<16x32xf32>
    %cst_54 = arith.constant dense<0.000000e+00> : vector<16xf32>
    %194 = vector.multi_reduction <add>, %193, %cst_54 [1] : vector<16x32xf32> to vector<16xf32>
    %195 = vector.shape_cast %194 : vector<16xf32> to vector<16x1xf32>
    %cst_55 = arith.constant 3.200000e+01 : f32
    %196 = vector.broadcast %cst_55 : f32 to vector<16x1xf32>
    %197 = arith.divf %195, %196 : vector<16x1xf32>
    %198 = vector.broadcast %190 : vector<16x1xf32> to vector<16x32xf32>
    %199 = arith.subf %184, %198 : vector<16x32xf32>
    %cst_56 = arith.constant 9.99999996E-13 : f32
    %200 = vector.broadcast %cst_56 : f32 to vector<16x1xf32>
    %201 = arith.addf %197, %200 : vector<16x1xf32>
    %202 = math.rsqrt %201 : vector<16x1xf32>
    %203 = vector.broadcast %202 : vector<16x1xf32> to vector<16x32xf32>
    %204 = arith.mulf %199, %203 : vector<16x32xf32>
    %205 = vector.broadcast %185 : vector<1x32xf32> to vector<16x32xf32>
    %206 = arith.mulf %204, %205 : vector<16x32xf32>
    %207 = vector.broadcast %186 : vector<1x32xf32> to vector<16x32xf32>
    %208 = arith.addf %206, %207 : vector<16x32xf32>
    %c0_57 = arith.constant 0 : index
    %c0_58 = arith.constant 0 : index
    %209 = vector.load %arg5[%c0_57, %c0_58] : memref<64x64xf32, #tpu.memory_space<vmem>>, vector<32x64xf32>
    %cst_59 = arith.constant dense<0.000000e+00> : vector<16x64xf32>
    %210 = tpu.matmul %208, %209, %cst_59 {dimension_numbers = #tpu.dot_dimension_numbers<[1], [0], [0], [1], [0, 0, 1, 1], [], []>} : vector<16x32xf32>, vector<32x64xf32>, vector<16x64xf32> -> vector<16x64xf32>
    %211 = vector.extract_strided_slice %4 {offsets = [6, 0], sizes = [1, 64], strides = [1, 1]} : vector<20x96xf32> to vector<1x64xf32>
    %212 = vector.broadcast %211 : vector<1x64xf32> to vector<16x64xf32>
    %213 = arith.addf %210, %212 : vector<16x64xf32>
    %cst_60 = arith.constant 5.000000e-01 : f32
    %214 = vector.broadcast %cst_60 : f32 to vector<16x64xf32>
    %215 = arith.mulf %214, %213 : vector<16x64xf32>
    %cst_61 = arith.constant 4.471500e-02 : f32
    %216 = vector.broadcast %cst_61 : f32 to vector<16x64xf32>
    %217 = arith.mulf %216, %213 : vector<16x64xf32>
    %218 = arith.mulf %217, %213 : vector<16x64xf32>
    %219 = arith.mulf %218, %213 : vector<16x64xf32>
    %220 = arith.addf %213, %219 : vector<16x64xf32>
    %cst_62 = arith.constant 0.797884583 : f32
    %221 = vector.broadcast %cst_62 : f32 to vector<16x64xf32>
    %222 = arith.mulf %221, %220 : vector<16x64xf32>
    %223 = math.tanh %222 : vector<16x64xf32>
    %cst_63 = arith.constant 1.000000e+00 : f32
    %224 = vector.broadcast %cst_63 : f32 to vector<16x64xf32>
    %225 = arith.addf %224, %223 : vector<16x64xf32>
    %226 = arith.mulf %215, %225 : vector<16x64xf32>
    %c0_64 = arith.constant 0 : index
    %c0_65 = arith.constant 0 : index
    %227 = vector.load %arg6[%c0_64, %c0_65] : memref<128x32xf32, #tpu.memory_space<vmem>>, vector<64x32xf32>
    %cst_66 = arith.constant dense<0.000000e+00> : vector<16x32xf32>
    %228 = tpu.matmul %226, %227, %cst_66 {dimension_numbers = #tpu.dot_dimension_numbers<[1], [0], [0], [1], [0, 0, 1, 1], [], []>} : vector<16x64xf32>, vector<64x32xf32>, vector<16x32xf32> -> vector<16x32xf32>
    %229 = vector.extract_strided_slice %4 {offsets = [7, 0], sizes = [1, 32], strides = [1, 1]} : vector<20x96xf32> to vector<1x32xf32>
    %230 = vector.broadcast %229 : vector<1x32xf32> to vector<16x32xf32>
    %231 = arith.addf %228, %230 : vector<16x32xf32>
    %232 = arith.addf %231, %208 : vector<16x32xf32>
    %233 = vector.extract_strided_slice %4 {offsets = [8, 0], sizes = [1, 32], strides = [1, 1]} : vector<20x96xf32> to vector<1x32xf32>
    %234 = vector.extract_strided_slice %4 {offsets = [9, 0], sizes = [1, 32], strides = [1, 1]} : vector<20x96xf32> to vector<1x32xf32>
    %cst_67 = arith.constant dense<0.000000e+00> : vector<16xf32>
    %235 = vector.multi_reduction <add>, %232, %cst_67 [1] : vector<16x32xf32> to vector<16xf32>
    %236 = vector.shape_cast %235 : vector<16xf32> to vector<16x1xf32>
    %cst_68 = arith.constant 3.200000e+01 : f32
    %237 = vector.broadcast %cst_68 : f32 to vector<16x1xf32>
    %238 = arith.divf %236, %237 : vector<16x1xf32>
    %239 = vector.broadcast %238 : vector<16x1xf32> to vector<16x32xf32>
    %240 = arith.subf %232, %239 : vector<16x32xf32>
    %241 = arith.mulf %240, %240 : vector<16x32xf32>
    %cst_69 = arith.constant dense<0.000000e+00> : vector<16xf32>
    %242 = vector.multi_reduction <add>, %241, %cst_69 [1] : vector<16x32xf32> to vector<16xf32>
    %243 = vector.shape_cast %242 : vector<16xf32> to vector<16x1xf32>
    %cst_70 = arith.constant 3.200000e+01 : f32
    %244 = vector.broadcast %cst_70 : f32 to vector<16x1xf32>
    %245 = arith.divf %243, %244 : vector<16x1xf32>
    %246 = vector.broadcast %238 : vector<16x1xf32> to vector<16x32xf32>
    %247 = arith.subf %232, %246 : vector<16x32xf32>
    %cst_71 = arith.constant 9.99999996E-13 : f32
    %248 = vector.broadcast %cst_71 : f32 to vector<16x1xf32>
    %249 = arith.addf %245, %248 : vector<16x1xf32>
    %250 = math.rsqrt %249 : vector<16x1xf32>
    %251 = vector.broadcast %250 : vector<16x1xf32> to vector<16x32xf32>
    %252 = arith.mulf %247, %251 : vector<16x32xf32>
    %253 = vector.broadcast %233 : vector<1x32xf32> to vector<16x32xf32>
    %254 = arith.mulf %252, %253 : vector<16x32xf32>
    %255 = vector.broadcast %234 : vector<1x32xf32> to vector<16x32xf32>
    %256 = arith.addf %254, %255 : vector<16x32xf32>
    %c32 = arith.constant 32 : index
    %c0_72 = arith.constant 0 : index
    %257 = vector.load %arg3[%c32, %c0_72] : memref<64x96xf32, #tpu.memory_space<vmem>>, vector<32x96xf32>
    %cst_73 = arith.constant dense<0.000000e+00> : vector<16x96xf32>
    %258 = tpu.matmul %256, %257, %cst_73 {dimension_numbers = #tpu.dot_dimension_numbers<[1], [0], [0], [1], [0, 0, 1, 1], [], []>} : vector<16x32xf32>, vector<32x96xf32>, vector<16x96xf32> -> vector<16x96xf32>
    %259 = vector.extract_strided_slice %4 {offsets = [10, 0], sizes = [1, 96], strides = [1, 1]} : vector<20x96xf32> to vector<1x96xf32>
    %260 = vector.broadcast %259 : vector<1x96xf32> to vector<16x96xf32>
    %261 = arith.addf %258, %260 : vector<16x96xf32>
    %262 = vector.extract_strided_slice %261 {offsets = [0, 0], sizes = [16, 8], strides = [1, 1]} : vector<16x96xf32> to vector<16x8xf32>
    %263 = vector.extract_strided_slice %261 {offsets = [0, 32], sizes = [16, 8], strides = [1, 1]} : vector<16x96xf32> to vector<16x8xf32>
    %264 = vector.extract_strided_slice %261 {offsets = [0, 64], sizes = [16, 8], strides = [1, 1]} : vector<16x96xf32> to vector<16x8xf32>
    "tpu.trace_start"() <{level = 10 : i32, message = "qd,kd->qk"}> : () -> ()
    %cst_74 = arith.constant dense<0.000000e+00> : vector<16x16xf32>
    %265 = tpu.matmul %262, %263, %cst_74 {dimension_numbers = #tpu.dot_dimension_numbers<[1], [1], [0], [0], [0, 0, 1, 0], [], []>} : vector<16x8xf32>, vector<16x8xf32>, vector<16x16xf32> -> vector<16x16xf32>
    "tpu.trace_stop"() : () -> ()
    %cst_75 = arith.constant 0.353553385 : f32
    %266 = vector.broadcast %cst_75 : f32 to vector<16x16xf32>
    %267 = arith.mulf %265, %266 : vector<16x16xf32>
    %268 = arith.addf %267, %116 : vector<16x16xf32>
    %269 = math.exp %268 : vector<16x16xf32>
    %cst_76 = arith.constant dense<0.000000e+00> : vector<16xf32>
    %270 = vector.multi_reduction <add>, %269, %cst_76 [1] : vector<16x16xf32> to vector<16xf32>
    %271 = vector.shape_cast %270 : vector<16xf32> to vector<16x1xf32>
    %272 = tpu.reciprocal %271 {approx = true} : vector<16x1xf32> -> vector<16x1xf32>
    %273 = vector.broadcast %272 : vector<16x1xf32> to vector<16x16xf32>
    %274 = arith.mulf %269, %273 : vector<16x16xf32>
    %cst_77 = arith.constant dense<0.000000e+00> : vector<16x8xf32>
    %275 = tpu.matmul %274, %264, %cst_77 {dimension_numbers = #tpu.dot_dimension_numbers<[1], [0], [0], [1], [0, 0, 1, 1], [], []>} : vector<16x16xf32>, vector<16x8xf32>, vector<16x8xf32> -> vector<16x8xf32>
    %276 = vector.extract_strided_slice %261 {offsets = [0, 8], sizes = [16, 8], strides = [1, 1]} : vector<16x96xf32> to vector<16x8xf32>
    %277 = vector.extract_strided_slice %261 {offsets = [0, 40], sizes = [16, 8], strides = [1, 1]} : vector<16x96xf32> to vector<16x8xf32>
    %278 = vector.extract_strided_slice %261 {offsets = [0, 72], sizes = [16, 8], strides = [1, 1]} : vector<16x96xf32> to vector<16x8xf32>
    "tpu.trace_start"() <{level = 10 : i32, message = "qd,kd->qk"}> : () -> ()
    %cst_78 = arith.constant dense<0.000000e+00> : vector<16x16xf32>
    %279 = tpu.matmul %276, %277, %cst_78 {dimension_numbers = #tpu.dot_dimension_numbers<[1], [1], [0], [0], [0, 0, 1, 0], [], []>} : vector<16x8xf32>, vector<16x8xf32>, vector<16x16xf32> -> vector<16x16xf32>
    "tpu.trace_stop"() : () -> ()
    %cst_79 = arith.constant 0.353553385 : f32
    %280 = vector.broadcast %cst_79 : f32 to vector<16x16xf32>
    %281 = arith.mulf %279, %280 : vector<16x16xf32>
    %282 = arith.addf %281, %116 : vector<16x16xf32>
    %283 = math.exp %282 : vector<16x16xf32>
    %cst_80 = arith.constant dense<0.000000e+00> : vector<16xf32>
    %284 = vector.multi_reduction <add>, %283, %cst_80 [1] : vector<16x16xf32> to vector<16xf32>
    %285 = vector.shape_cast %284 : vector<16xf32> to vector<16x1xf32>
    %286 = tpu.reciprocal %285 {approx = true} : vector<16x1xf32> -> vector<16x1xf32>
    %287 = vector.broadcast %286 : vector<16x1xf32> to vector<16x16xf32>
    %288 = arith.mulf %283, %287 : vector<16x16xf32>
    %cst_81 = arith.constant dense<0.000000e+00> : vector<16x8xf32>
    %289 = tpu.matmul %288, %278, %cst_81 {dimension_numbers = #tpu.dot_dimension_numbers<[1], [0], [0], [1], [0, 0, 1, 1], [], []>} : vector<16x16xf32>, vector<16x8xf32>, vector<16x8xf32> -> vector<16x8xf32>
    %290 = vector.extract_strided_slice %261 {offsets = [0, 16], sizes = [16, 8], strides = [1, 1]} : vector<16x96xf32> to vector<16x8xf32>
    %291 = vector.extract_strided_slice %261 {offsets = [0, 48], sizes = [16, 8], strides = [1, 1]} : vector<16x96xf32> to vector<16x8xf32>
    %292 = vector.extract_strided_slice %261 {offsets = [0, 80], sizes = [16, 8], strides = [1, 1]} : vector<16x96xf32> to vector<16x8xf32>
    "tpu.trace_start"() <{level = 10 : i32, message = "qd,kd->qk"}> : () -> ()
    %cst_82 = arith.constant dense<0.000000e+00> : vector<16x16xf32>
    %293 = tpu.matmul %290, %291, %cst_82 {dimension_numbers = #tpu.dot_dimension_numbers<[1], [1], [0], [0], [0, 0, 1, 0], [], []>} : vector<16x8xf32>, vector<16x8xf32>, vector<16x16xf32> -> vector<16x16xf32>
    "tpu.trace_stop"() : () -> ()
    %cst_83 = arith.constant 0.353553385 : f32
    %294 = vector.broadcast %cst_83 : f32 to vector<16x16xf32>
    %295 = arith.mulf %293, %294 : vector<16x16xf32>
    %296 = arith.addf %295, %116 : vector<16x16xf32>
    %297 = math.exp %296 : vector<16x16xf32>
    %cst_84 = arith.constant dense<0.000000e+00> : vector<16xf32>
    %298 = vector.multi_reduction <add>, %297, %cst_84 [1] : vector<16x16xf32> to vector<16xf32>
    %299 = vector.shape_cast %298 : vector<16xf32> to vector<16x1xf32>
    %300 = tpu.reciprocal %299 {approx = true} : vector<16x1xf32> -> vector<16x1xf32>
    %301 = vector.broadcast %300 : vector<16x1xf32> to vector<16x16xf32>
    %302 = arith.mulf %297, %301 : vector<16x16xf32>
    %cst_85 = arith.constant dense<0.000000e+00> : vector<16x8xf32>
    %303 = tpu.matmul %302, %292, %cst_85 {dimension_numbers = #tpu.dot_dimension_numbers<[1], [0], [0], [1], [0, 0, 1, 1], [], []>} : vector<16x16xf32>, vector<16x8xf32>, vector<16x8xf32> -> vector<16x8xf32>
    %304 = vector.extract_strided_slice %261 {offsets = [0, 24], sizes = [16, 8], strides = [1, 1]} : vector<16x96xf32> to vector<16x8xf32>
    %305 = vector.extract_strided_slice %261 {offsets = [0, 56], sizes = [16, 8], strides = [1, 1]} : vector<16x96xf32> to vector<16x8xf32>
    %306 = vector.extract_strided_slice %261 {offsets = [0, 88], sizes = [16, 8], strides = [1, 1]} : vector<16x96xf32> to vector<16x8xf32>
    "tpu.trace_start"() <{level = 10 : i32, message = "qd,kd->qk"}> : () -> ()
    %cst_86 = arith.constant dense<0.000000e+00> : vector<16x16xf32>
    %307 = tpu.matmul %304, %305, %cst_86 {dimension_numbers = #tpu.dot_dimension_numbers<[1], [1], [0], [0], [0, 0, 1, 0], [], []>} : vector<16x8xf32>, vector<16x8xf32>, vector<16x16xf32> -> vector<16x16xf32>
    "tpu.trace_stop"() : () -> ()
    %cst_87 = arith.constant 0.353553385 : f32
    %308 = vector.broadcast %cst_87 : f32 to vector<16x16xf32>
    %309 = arith.mulf %307, %308 : vector<16x16xf32>
    %310 = arith.addf %309, %116 : vector<16x16xf32>
    %311 = math.exp %310 : vector<16x16xf32>
    %cst_88 = arith.constant dense<0.000000e+00> : vector<16xf32>
    %312 = vector.multi_reduction <add>, %311, %cst_88 [1] : vector<16x16xf32> to vector<16xf32>
    %313 = vector.shape_cast %312 : vector<16xf32> to vector<16x1xf32>
    %314 = tpu.reciprocal %313 {approx = true} : vector<16x1xf32> -> vector<16x1xf32>
    %315 = vector.broadcast %314 : vector<16x1xf32> to vector<16x16xf32>
    %316 = arith.mulf %311, %315 : vector<16x16xf32>
    %cst_89 = arith.constant dense<0.000000e+00> : vector<16x8xf32>
    %317 = tpu.matmul %316, %306, %cst_89 {dimension_numbers = #tpu.dot_dimension_numbers<[1], [0], [0], [1], [0, 0, 1, 1], [], []>} : vector<16x16xf32>, vector<16x8xf32>, vector<16x8xf32> -> vector<16x8xf32>
    %318 = tpu.concatenate %275, %289, %303, %317 in 1 : vector<16x8xf32>, vector<16x8xf32>, vector<16x8xf32>, vector<16x8xf32> -> vector<16x32xf32>
    %c32_90 = arith.constant 32 : index
    %c0_91 = arith.constant 0 : index
    %319 = vector.load %arg4[%c32_90, %c0_91] : memref<64x32xf32, #tpu.memory_space<vmem>>, vector<32x32xf32>
    %cst_92 = arith.constant dense<0.000000e+00> : vector<16x32xf32>
    %320 = tpu.matmul %318, %319, %cst_92 {dimension_numbers = #tpu.dot_dimension_numbers<[1], [0], [0], [1], [0, 0, 1, 1], [], []>} : vector<16x32xf32>, vector<32x32xf32>, vector<16x32xf32> -> vector<16x32xf32>
    %321 = vector.extract_strided_slice %4 {offsets = [11, 0], sizes = [1, 32], strides = [1, 1]} : vector<20x96xf32> to vector<1x32xf32>
    %322 = vector.broadcast %321 : vector<1x32xf32> to vector<16x32xf32>
    %323 = arith.addf %320, %322 : vector<16x32xf32>
    %324 = arith.addf %323, %256 : vector<16x32xf32>
    %325 = vector.extract_strided_slice %4 {offsets = [12, 0], sizes = [1, 32], strides = [1, 1]} : vector<20x96xf32> to vector<1x32xf32>
    %326 = vector.extract_strided_slice %4 {offsets = [13, 0], sizes = [1, 32], strides = [1, 1]} : vector<20x96xf32> to vector<1x32xf32>
    %cst_93 = arith.constant dense<0.000000e+00> : vector<16xf32>
    %327 = vector.multi_reduction <add>, %324, %cst_93 [1] : vector<16x32xf32> to vector<16xf32>
    %328 = vector.shape_cast %327 : vector<16xf32> to vector<16x1xf32>
    %cst_94 = arith.constant 3.200000e+01 : f32
    %329 = vector.broadcast %cst_94 : f32 to vector<16x1xf32>
    %330 = arith.divf %328, %329 : vector<16x1xf32>
    %331 = vector.broadcast %330 : vector<16x1xf32> to vector<16x32xf32>
    %332 = arith.subf %324, %331 : vector<16x32xf32>
    %333 = arith.mulf %332, %332 : vector<16x32xf32>
    %cst_95 = arith.constant dense<0.000000e+00> : vector<16xf32>
    %334 = vector.multi_reduction <add>, %333, %cst_95 [1] : vector<16x32xf32> to vector<16xf32>
    %335 = vector.shape_cast %334 : vector<16xf32> to vector<16x1xf32>
    %cst_96 = arith.constant 3.200000e+01 : f32
    %336 = vector.broadcast %cst_96 : f32 to vector<16x1xf32>
    %337 = arith.divf %335, %336 : vector<16x1xf32>
    %338 = vector.broadcast %330 : vector<16x1xf32> to vector<16x32xf32>
    %339 = arith.subf %324, %338 : vector<16x32xf32>
    %cst_97 = arith.constant 9.99999996E-13 : f32
    %340 = vector.broadcast %cst_97 : f32 to vector<16x1xf32>
    %341 = arith.addf %337, %340 : vector<16x1xf32>
    %342 = math.rsqrt %341 : vector<16x1xf32>
    %343 = vector.broadcast %342 : vector<16x1xf32> to vector<16x32xf32>
    %344 = arith.mulf %339, %343 : vector<16x32xf32>
    %345 = vector.broadcast %325 : vector<1x32xf32> to vector<16x32xf32>
    %346 = arith.mulf %344, %345 : vector<16x32xf32>
    %347 = vector.broadcast %326 : vector<1x32xf32> to vector<16x32xf32>
    %348 = arith.addf %346, %347 : vector<16x32xf32>
    %c32_98 = arith.constant 32 : index
    %c0_99 = arith.constant 0 : index
    %349 = vector.load %arg5[%c32_98, %c0_99] : memref<64x64xf32, #tpu.memory_space<vmem>>, vector<32x64xf32>
    %cst_100 = arith.constant dense<0.000000e+00> : vector<16x64xf32>
    %350 = tpu.matmul %348, %349, %cst_100 {dimension_numbers = #tpu.dot_dimension_numbers<[1], [0], [0], [1], [0, 0, 1, 1], [], []>} : vector<16x32xf32>, vector<32x64xf32>, vector<16x64xf32> -> vector<16x64xf32>
    %351 = vector.extract_strided_slice %4 {offsets = [14, 0], sizes = [1, 64], strides = [1, 1]} : vector<20x96xf32> to vector<1x64xf32>
    %352 = vector.broadcast %351 : vector<1x64xf32> to vector<16x64xf32>
    %353 = arith.addf %350, %352 : vector<16x64xf32>
    %cst_101 = arith.constant 5.000000e-01 : f32
    %354 = vector.broadcast %cst_101 : f32 to vector<16x64xf32>
    %355 = arith.mulf %354, %353 : vector<16x64xf32>
    %cst_102 = arith.constant 4.471500e-02 : f32
    %356 = vector.broadcast %cst_102 : f32 to vector<16x64xf32>
    %357 = arith.mulf %356, %353 : vector<16x64xf32>
    %358 = arith.mulf %357, %353 : vector<16x64xf32>
    %359 = arith.mulf %358, %353 : vector<16x64xf32>
    %360 = arith.addf %353, %359 : vector<16x64xf32>
    %cst_103 = arith.constant 0.797884583 : f32
    %361 = vector.broadcast %cst_103 : f32 to vector<16x64xf32>
    %362 = arith.mulf %361, %360 : vector<16x64xf32>
    %363 = math.tanh %362 : vector<16x64xf32>
    %cst_104 = arith.constant 1.000000e+00 : f32
    %364 = vector.broadcast %cst_104 : f32 to vector<16x64xf32>
    %365 = arith.addf %364, %363 : vector<16x64xf32>
    %366 = arith.mulf %355, %365 : vector<16x64xf32>
    %c64 = arith.constant 64 : index
    %c0_105 = arith.constant 0 : index
    %367 = vector.load %arg6[%c64, %c0_105] : memref<128x32xf32, #tpu.memory_space<vmem>>, vector<64x32xf32>
    %cst_106 = arith.constant dense<0.000000e+00> : vector<16x32xf32>
    %368 = tpu.matmul %366, %367, %cst_106 {dimension_numbers = #tpu.dot_dimension_numbers<[1], [0], [0], [1], [0, 0, 1, 1], [], []>} : vector<16x64xf32>, vector<64x32xf32>, vector<16x32xf32> -> vector<16x32xf32>
    %369 = vector.extract_strided_slice %4 {offsets = [15, 0], sizes = [1, 32], strides = [1, 1]} : vector<20x96xf32> to vector<1x32xf32>
    %370 = vector.broadcast %369 : vector<1x32xf32> to vector<16x32xf32>
    %371 = arith.addf %368, %370 : vector<16x32xf32>
    %372 = arith.addf %371, %348 : vector<16x32xf32>
    %373 = vector.extract_strided_slice %4 {offsets = [16, 0], sizes = [1, 32], strides = [1, 1]} : vector<20x96xf32> to vector<1x32xf32>
    %374 = vector.extract_strided_slice %4 {offsets = [17, 0], sizes = [1, 32], strides = [1, 1]} : vector<20x96xf32> to vector<1x32xf32>
    %cst_107 = arith.constant dense<0.000000e+00> : vector<16xf32>
    %375 = vector.multi_reduction <add>, %372, %cst_107 [1] : vector<16x32xf32> to vector<16xf32>
    %376 = vector.shape_cast %375 : vector<16xf32> to vector<16x1xf32>
    %cst_108 = arith.constant 3.200000e+01 : f32
    %377 = vector.broadcast %cst_108 : f32 to vector<16x1xf32>
    %378 = arith.divf %376, %377 : vector<16x1xf32>
    %379 = vector.broadcast %378 : vector<16x1xf32> to vector<16x32xf32>
    %380 = arith.subf %372, %379 : vector<16x32xf32>
    %381 = arith.mulf %380, %380 : vector<16x32xf32>
    %cst_109 = arith.constant dense<0.000000e+00> : vector<16xf32>
    %382 = vector.multi_reduction <add>, %381, %cst_109 [1] : vector<16x32xf32> to vector<16xf32>
    %383 = vector.shape_cast %382 : vector<16xf32> to vector<16x1xf32>
    %cst_110 = arith.constant 3.200000e+01 : f32
    %384 = vector.broadcast %cst_110 : f32 to vector<16x1xf32>
    %385 = arith.divf %383, %384 : vector<16x1xf32>
    %386 = vector.broadcast %378 : vector<16x1xf32> to vector<16x32xf32>
    %387 = arith.subf %372, %386 : vector<16x32xf32>
    %cst_111 = arith.constant 9.99999996E-13 : f32
    %388 = vector.broadcast %cst_111 : f32 to vector<16x1xf32>
    %389 = arith.addf %385, %388 : vector<16x1xf32>
    %390 = math.rsqrt %389 : vector<16x1xf32>
    %391 = vector.broadcast %390 : vector<16x1xf32> to vector<16x32xf32>
    %392 = arith.mulf %387, %391 : vector<16x32xf32>
    %393 = vector.broadcast %373 : vector<1x32xf32> to vector<16x32xf32>
    %394 = arith.mulf %392, %393 : vector<16x32xf32>
    %395 = vector.broadcast %374 : vector<1x32xf32> to vector<16x32xf32>
    %396 = arith.addf %394, %395 : vector<16x32xf32>
    %c0_112 = arith.constant 0 : index
    %c0_113 = arith.constant 0 : index
    %397 = vector.load %arg7[%c0_112, %c0_113] : memref<32x34xf32, #tpu.memory_space<vmem>>, vector<32x34xf32>
    %398 = vector.extract_strided_slice %4 {offsets = [18, 0], sizes = [1, 32], strides = [1, 1]} : vector<20x96xf32> to vector<1x32xf32>
    %399 = vector.extract_strided_slice %4 {offsets = [19, 0], sizes = [1, 2], strides = [1, 1]} : vector<20x96xf32> to vector<1x2xf32>
    %400 = vector.extract_strided_slice %397 {offsets = [0, 0], sizes = [32, 32], strides = [1, 1]} : vector<32x34xf32> to vector<32x32xf32>
    %cst_114 = arith.constant dense<0.000000e+00> : vector<16x32xf32>
    %401 = tpu.matmul %396, %400, %cst_114 {dimension_numbers = #tpu.dot_dimension_numbers<[1], [0], [0], [1], [0, 0, 1, 1], [], []>} : vector<16x32xf32>, vector<32x32xf32>, vector<16x32xf32> -> vector<16x32xf32>
    %402 = vector.broadcast %398 : vector<1x32xf32> to vector<16x32xf32>
    %403 = arith.addf %401, %402 : vector<16x32xf32>
    %404 = math.tanh %403 : vector<16x32xf32>
    %405 = vector.extract_strided_slice %397 {offsets = [0, 32], sizes = [32, 2], strides = [1, 1]} : vector<32x34xf32> to vector<32x2xf32>
    %cst_115 = arith.constant dense<0.000000e+00> : vector<16x2xf32>
    %406 = tpu.matmul %404, %405, %cst_115 {dimension_numbers = #tpu.dot_dimension_numbers<[1], [0], [0], [1], [0, 0, 1, 1], [], []>} : vector<16x32xf32>, vector<32x2xf32>, vector<16x2xf32> -> vector<16x2xf32>
    %407 = vector.broadcast %399 : vector<1x2xf32> to vector<16x2xf32>
    %408 = arith.addf %406, %407 : vector<16x2xf32>
    %cst_116 = arith.constant dense<0xFF800000> : vector<16xf32>
    %409 = vector.multi_reduction <maximumf>, %408, %cst_116 [1] : vector<16x2xf32> to vector<16xf32>
    %410 = vector.shape_cast %409 : vector<16xf32> to vector<16x1xf32>
    %411 = vector.broadcast %410 : vector<16x1xf32> to vector<16x2xf32>
    %412 = arith.subf %408, %411 : vector<16x2xf32>
    %413 = math.exp %412 : vector<16x2xf32>
    %cst_117 = arith.constant dense<0.000000e+00> : vector<16xf32>
    %414 = vector.multi_reduction <add>, %413, %cst_117 [1] : vector<16x2xf32> to vector<16xf32>
    %415 = vector.shape_cast %414 : vector<16xf32> to vector<16x1xf32>
    %416 = vector.broadcast %410 : vector<16x1xf32> to vector<16x2xf32>
    %417 = arith.subf %408, %416 : vector<16x2xf32>
    %418 = math.log %415 : vector<16x1xf32>
    %419 = vector.broadcast %418 : vector<16x1xf32> to vector<16x2xf32>
    %420 = arith.subf %417, %419 : vector<16x2xf32>
    %421 = vector.broadcast %415 : vector<16x1xf32> to vector<16x2xf32>
    %422 = arith.divf %413, %421 : vector<16x2xf32>
    %423 = tpu.iota {dimensions = array<i32: 1>} : vector<16x2xi32>
    %424 = vector.broadcast %3 : vector<16x1xi32> to vector<16x2xi32>
    %425 = arith.cmpi eq, %423, %424 : vector<16x2xi32>
    %426 = arith.extui %425 : vector<16x2xi1> to vector<16x2xi32>
    %427 = arith.sitofp %426 : vector<16x2xi32> to vector<16x2xf32>
    %428 = arith.mulf %427, %420 : vector<16x2xf32>
    %cst_118 = arith.constant dense<0.000000e+00> : vector<16xf32>
    %429 = vector.multi_reduction <add>, %428, %cst_118 [1] : vector<16x2xf32> to vector<16xf32>
    %430 = vector.shape_cast %429 : vector<16xf32> to vector<16x1xf32>
    %cst_119 = arith.constant 0.000000e+00 : f32
    %431 = vector.broadcast %cst_119 : f32 to vector<16x1xf32>
    %432 = arith.subf %431, %430 : vector<16x1xf32>
    %cst_120 = arith.constant 0.000000e+00 : f32
    %433 = vector.broadcast %cst_120 : f32 to vector<16x128xf32>
    %c0_121 = arith.constant 0 : index
    %c0_122 = arith.constant 0 : index
    %434 = vector.load %arg9[%c0_121, %c0_122] : memref<16x128xf32, #tpu.memory_space<vmem>>, vector<16x128xf32>
    tpu.vector_store %arg9[%c0_121, %c0_122], %433 {strides = array<i32>} : memref<16x128xf32, #tpu.memory_space<vmem>>, vector<16x128xf32>,
    %c0_123 = arith.constant 0 : index
    %c0_124 = arith.constant 0 : index
    %435 = vector.load %arg9[%c0_123, %c0_124] : memref<16x128xf32, #tpu.memory_space<vmem>>, vector<16x2xf32>
    tpu.vector_store %arg9[%c0_123, %c0_124], %408 {strides = array<i32>} : memref<16x128xf32, #tpu.memory_space<vmem>>, vector<16x2xf32>,
    %c0_125 = arith.constant 0 : index
    %c2 = arith.constant 2 : index
    %436 = vector.load %arg9[%c0_125, %c2] : memref<16x128xf32, #tpu.memory_space<vmem>>, vector<16x2xf32>
    tpu.vector_store %arg9[%c0_125, %c2], %422 {strides = array<i32>} : memref<16x128xf32, #tpu.memory_space<vmem>>, vector<16x2xf32>,
    %c0_126 = arith.constant 0 : index
    %c4 = arith.constant 4 : index
    %437 = vector.load %arg9[%c0_126, %c4] : memref<16x128xf32, #tpu.memory_space<vmem>>, vector<16x1xf32>
    tpu.vector_store %arg9[%c0_126, %c4], %432 {strides = array<i32>} : memref<16x128xf32, #tpu.memory_space<vmem>>, vector<16x1xf32>,
    return
  }
}

</mosaic_0001>

<llo_original>
// kernel: bert_model_test_forward.1
$region0: #{bert_model_test_forward.1}
  #allocation0 [shape = 'u32[]', space=smem, size = 0x4, offset = 0x4, fixed_abs, tag = 'smem constant byte address 0x4 - core index']
  #allocation1 [shape = 'u32[144,128]{1,0:T(1,128)}', space=vmem, size = 0x12000, scoped, tag = 'internal scratch']
  %s0 = inlined_call_operand.vmem [shape: s32[16,4], index: 0, kind: input, shape index: {}]
  %s1 = inlined_call_operand.vmem [shape: f32[1,16], index: 1, kind: input, shape index: {}]
  %s2 = inlined_call_operand.vmem [shape: f32[146,32], index: 2, kind: input, shape index: {}]
  %s3 = inlined_call_operand.vmem [shape: f32[64,96], index: 3, kind: input, shape index: {}]
  %s4 = inlined_call_operand.vmem [shape: f32[64,32], index: 4, kind: input, shape index: {}]
  %s5 = inlined_call_operand.vmem [shape: f32[64,64], index: 5, kind: input, shape index: {}]
  %s6 = inlined_call_operand.vmem [shape: f32[128,32], index: 6, kind: input, shape index: {}]
  %s7 = inlined_call_operand.vmem [shape: f32[32,34], index: 7, kind: input, shape index: {}]
  %s8 = inlined_call_operand.vmem [shape: f32[20,96], index: 8, kind: input, shape index: {}]
  %s9 = inlined_call_operand.vmem [shape: f32[16,128], index: 9, kind: output, shape index: {}]
  %s10 = sld [smem:[#allocation0]]
  $region46: #{bert_model_test_forward.1} parent=0
    _
  %s12 = ssub.s32 1, %s10
  %s13 = scalar_select 0, %s12, %s10
  // Predicated region
  $region2: #{bert_model_test_forward.1} parent=0 // pred_check
    _
  $region3: #{bert_model_test_forward.1} parent=0 // pred_check_branch
    %15 = sbr.rel (0) target = $region5
  $region4: #{bert_model_test_forward.1} parent=0 // pred_region
    _
  $region5: #{bert_model_test_forward.1} parent=0 // pred_fallthru
    _
  // Predicated region
  $region6: #{bert_model_test_forward.1} parent=0 // pred_check
    _
  $region7: #{bert_model_test_forward.1} parent=0 // pred_check_branch
    %17 = sbr.rel (0) target = $region9
  $region8: #{bert_model_test_forward.1} parent=0 // pred_region
    _
  $region9: #{bert_model_test_forward.1} parent=0 // pred_fallthru
    _
  // Predicated region
  $region10: #{bert_model_test_forward.1} parent=0 // pred_check
    _
  $region11: #{bert_model_test_forward.1} parent=0 // pred_check_branch
    %19 = sbr.rel (0) target = $region13
  $region12: #{bert_model_test_forward.1} parent=0 // pred_region
    _
  $region13: #{bert_model_test_forward.1} parent=0 // pred_fallthru
    _
  // Predicated region
  $region14: #{bert_model_test_forward.1} parent=0 // pred_check
    _
  $region15: #{bert_model_test_forward.1} parent=0 // pred_check_branch
    %21 = sbr.rel (0) target = $region17
  $region16: #{bert_model_test_forward.1} parent=0 // pred_region
    _
  $region17: #{bert_model_test_forward.1} parent=0 // pred_fallthru
    _
  // Predicated region
  $region18: #{bert_model_test_forward.1} parent=0 // pred_check
    _
  $region19: #{bert_model_test_forward.1} parent=0 // pred_check_branch
    %23 = sbr.rel (0) target = $region21
  $region20: #{bert_model_test_forward.1} parent=0 // pred_region
    _
  $region21: #{bert_model_test_forward.1} parent=0 // pred_fallthru
    _
  // Predicated region
  $region22: #{bert_model_test_forward.1} parent=0 // pred_check
    _
  $region23: #{bert_model_test_forward.1} parent=0 // pred_check_branch
    %25 = sbr.rel (0) target = $region25
  $region24: #{bert_model_test_forward.1} parent=0 // pred_region
    _
  $region25: #{bert_model_test_forward.1} parent=0 // pred_fallthru
    _
  // Predicated region
  $region26: #{bert_model_test_forward.1} parent=0 // pred_check
    _
  $region27: #{bert_model_test_forward.1} parent=0 // pred_check_branch
    %27 = sbr.rel (0) target = $region29
  $region28: #{bert_model_test_forward.1} parent=0 // pred_region
    _
  $region29: #{bert_model_test_forward.1} parent=0 // pred_fallthru
    _
  // Predicated region
  $region30: #{bert_model_test_forward.1} parent=0 // pred_check
    _
  $region31: #{bert_model_test_forward.1} parent=0 // pred_check_branch
    %29 = sbr.rel (0) target = $region33
  $region32: #{bert_model_test_forward.1} parent=0 // pred_region
    _
  $region33: #{bert_model_test_forward.1} parent=0 // pred_fallthru
    _
  // Predicated region
  $region34: #{bert_model_test_forward.1} parent=0 // pred_check
    _
  $region35: #{bert_model_test_forward.1} parent=0 // pred_check_branch
    %31 = sbr.rel (0) target = $region37
  $region36: #{bert_model_test_forward.1} parent=0 // pred_region
    _
  $region37: #{bert_model_test_forward.1} parent=0 // pred_fallthru
    _
  %v32 = vld [vmem:[%s0] sm:$0xff]
  %v33 = vld [vmem:[%s0 + $0x8] sm:$0xff]
  %v34 = vld [vmem:[%s8] sm:$0xff]
  %v35 = vld [vmem:[%s8 + $0x8] sm:$0xff]
  %v36 = vld [vmem:[%s8 + $0x10] sm:$0xf]
  %v37 = vlaneseq
  %v38 = vand.u32 %v37, 127
  %39 = vset.pattern.permute.xlu0 0
  %40 = vperm.xlu0 %39, %v32
  %v41 = vpop.permute.xlu0 %40
  %42 = vset.pattern.permute.xlu0 0
  %43 = vperm.xlu0 %42, %v33
  %v44 = vpop.permute.xlu0 %43
  %vm45 = vcmp.eq.s32.totalorder %v38, %v41
  %vm46 = vcmp.eq.s32.totalorder %v38, %v44
  %v47 = vsel %vm45, 1, 0
  %v48 = vsel %vm46, 1, 0
  %v49 = vcvt.s32.f32 %v47
  %v50 = vcvt.s32.f32 %v48
  %v51 = vld [vmem:[%s2] sm:$0xff]
  %v52 = vld [vmem:[%s2 + $0x8] sm:$0xff]
  %v53 = vld [vmem:[%s2 + $0x10] sm:$0xff]
  %v54 = vld [vmem:[%s2 + $0x18] sm:$0xff]
  %v55 = vld [vmem:[%s2 + $0x20] sm:$0xff]
  %v56 = vld [vmem:[%s2 + $0x28] sm:$0xff]
  %v57 = vld [vmem:[%s2 + $0x30] sm:$0xff]
  %v58 = vld [vmem:[%s2 + $0x38] sm:$0xff]
  %v59 = vld [vmem:[%s2 + $0x40] sm:$0xff]
  %v60 = vld [vmem:[%s2 + $0x48] sm:$0xff]
  %v61 = vld [vmem:[%s2 + $0x50] sm:$0xff]
  %v62 = vld [vmem:[%s2 + $0x58] sm:$0xff]
  %v63 = vld [vmem:[%s2 + $0x60] sm:$0xff]
  %v64 = vld [vmem:[%s2 + $0x68] sm:$0xff]
  %v65 = vld [vmem:[%s2 + $0x70] sm:$0xff]
  %v66 = vld [vmem:[%s2 + $0x78] sm:$0xff]
  %v67 = vlaneseq
  %v68 = vshrl.u32 %v67, 7
  %v69 = vadd.s32 %v68, 8
  %vm70 = vcmp.ge.s32.totalorder %v68, 0
  %vm71 = vcmp.ge.s32.totalorder %v69, 0
  %vm72 = vcmp.lt.s32.totalorder %v68, 8
  %vm73 = vcmp.lt.s32.totalorder %v69, 8
  %vm74 = vmand %vm70, %vm72
  %vm75 = vmand %vm71, %vm73
  %vm76 = vcmp.eq.s32.totalorder %v68, %v38
  %vm77 = vcmp.eq.s32.totalorder %v69, %v38
  %vm78 = vmand %vm74, %vm76
  %vm79 = vmand %vm75, %vm77
  %v80 = vsel %vm78, 1, 0
  %v81 = vsel %vm79, 1, 0
  %v82 = vcvt.s32.f32 %v80
  %v83 = vcvt.s32.f32 %v81
  %v84 = vadd.f32 %v82, 0.0
  %v85 = vadd.f32 %v83, 0.0
  %vm86 = vcmp.ge.s32.totalorder %v68, 8
  %vm87 = vcmp.ge.s32.totalorder %v69, 8
  %vm88 = vcmp.lt.s32.totalorder %v68, 16
  %vm89 = vcmp.lt.s32.totalorder %v69, 16
  %vm90 = vmand %vm86, %vm88
  %vm91 = vmand %vm87, %vm89
  %v92 = vadd.s32 %v38, 8
  %vm93 = vcmp.eq.s32.totalorder %v68, %v92
  %vm94 = vcmp.eq.s32.totalorder %v69, %v92
  %vm95 = vmand %vm90, %vm93
  %vm96 = vmand %vm91, %vm94
  %v97 = vsel %vm95, 1, 0
  %v98 = vsel %vm96, 1, 0
  %v99 = vcvt.s32.f32 %v97
  %v100 = vcvt.s32.f32 %v98
  %v101 = vadd.f32 %v84, %v99
  %v102 = vadd.f32 %v85, %v100
  %v103 = vld [vmem:[%s2 + $0x80] sm:$0xff]
  %v104 = vld [vmem:[%s2 + $0x88] sm:$0xff]
  %vm105 = vcmask 130048
  %v107 = vsel %vm105, %v101, 0
  %v110 = vsel %vm105, %v102, 0
  %112 = vmatprep.subr.mxu0 0.0
  %113 = vmatpush1.msra.mxu0 0.0
  %114 = vmatprep.subr.mxu0 0.0
  %115 = vmatpush1.msra.mxu0 0.0
  %116 = vmatprep.subr.mxu0 0.0
  %117 = vmatpush1.msra.mxu0 0.0
  %118 = vmatprep.subr.mxu0 0.0
  %119 = vmatpush1.msra.mxu0 0.0
  %120 = vmatprep.subr.mxu0 0.0
  %121 = vmatpush1.msra.mxu0 0.0
  %122 = vmatprep.subr.mxu0 0.0
  %123 = vmatpush1.msra.mxu0 0.0
  %124 = vmatprep.subr.mxu0 0.0
  %125 = vmatpush1.msra.mxu0 0.0
  %126 = vmatprep.subr.mxu0 0.0
  %127 = vmatpush1.msra.mxu0 0.0
  %128 = vmatprep.subr.mxu0 0.0
  %129 = vmatpush1.msra.mxu0 0.0
  %130 = vmatprep.subr.mxu0 0.0
  %131 = vmatpush1.msra.mxu0 0.0
  %132 = vmatprep.subr.mxu0 0.0
  %133 = vmatpush1.msra.mxu0 0.0
  %134 = vmatprep.subr.mxu0 0.0
  %135 = vmatpush1.msra.mxu0 0.0
  %136 = vmatprep.subr.mxu0 0.0
  %137 = vmatpush1.msra.mxu0 0.0
  %138 = vmatprep.subr.mxu0 0.0
  %139 = vmatpush1.msra.mxu0 0.0
  %140 = vmatprep.subr.mxu0 0.0
  %141 = vmatpush1.msra.mxu0 %v104
  %142 = vmatprep.subr.mxu0 0.0
  %143 = vmatpush1.msra.mxu0 %v103
  %144 = vmatprep.subr.mxu0 0.0
  %145 = vmatpush2.msra.mxu0 0.0
  %146 = vmatprep.subr.mxu0 0.0
  %147 = vmatpush2.msra.mxu0 0.0
  %148 = vmatprep.subr.mxu0 0.0
  %149 = vmatpush2.msra.mxu0 0.0
  %150 = vmatprep.subr.mxu0 0.0
  %151 = vmatpush2.msra.mxu0 0.0
  %152 = vmatprep.subr.mxu0 0.0
  %153 = vmatpush2.msra.mxu0 0.0
  %154 = vmatprep.subr.mxu0 0.0
  %155 = vmatpush2.msra.mxu0 0.0
  %156 = vmatprep.subr.mxu0 0.0
  %157 = vmatpush2.msra.mxu0 0.0
  %158 = vmatprep.subr.mxu0 0.0
  %159 = vmatpush2.msra.mxu0 0.0
  %160 = vmatprep.subr.mxu0 0.0
  %161 = vmatpush2.msra.mxu0 0.0
  %162 = vmatprep.subr.mxu0 0.0
  %163 = vmatpush2.msra.mxu0 0.0
  %164 = vmatprep.subr.mxu0 0.0
  %165 = vmatpush2.msra.mxu0 0.0
  %166 = vmatprep.subr.mxu0 0.0
  %167 = vmatpush2.msra.mxu0 0.0
  %168 = vmatprep.subr.mxu0 0.0
  %169 = vmatpush2.msra.mxu0 0.0
  %170 = vmatprep.subr.mxu0 0.0
  %171 = vmatpush2.msra.mxu0 0.0
  %172 = vmatprep.subr.mxu0 0.0
  %173 = vmatpush2.msra.mxu0 0.0
  %174 = vmatprep.subr.mxu0 0.0
  %175 = vmatpush2.msra.mxu0 0.0
  %176 = vmatprep.mubr.f32.mxu0 0.0
  %177 = vmatmul.mubr.f32.gmra.mxu0 %v107
  %v178 = vpop.f32.mrf.mxu0
  %v179 = vadd.f32 0.0, %v178
  %v180 = vpop.f32.mrf.mxu0
  %181 = vmatprep.mubr.f32.mxu0 0.0
  %182 = vmatmul.mubr.f32.gmra.mxu0 %v110
  %v183 = vpop.f32.mrf.mxu0
  %v184 = vadd.f32 0.0, %v183
  %v185 = vpop.f32.mrf.mxu0
  %186 = vdwg.mxu0
  %v187 = vld [vmem:[%s2 + $0x90] sm:$0x3]
  %vm188 = vcmp.eq.s32.totalorder %v32, 1
  %vm189 = vcmp.eq.s32.totalorder %v33, 1
  %v190 = vsel %vm188, 1, 0
  %v191 = vsel %vm189, 1, 0
  %192 = vset.pattern.permute.xlu0 1
  %193 = vperm.xlu0 %192, %v190
  %v194 = vpop.permute.xlu0 %193
  %195 = vset.pattern.permute.xlu0 1
  %196 = vperm.xlu0 %195, %v191
  %v197 = vpop.permute.xlu0 %196
  %vm198 = vcmp.eq.s32.totalorder %v194, 1
  %vm199 = vcmp.eq.s32.totalorder %v197, 1
  %v200 = vlaneseq
  %v201 = vshrl.u32 %v200, 7
  %v202 = vsub.s32 1, %v201
  %v203 = vrot.slane %v187, %v202
  %v204 = vlaneseq
  %v205 = vshrl.u32 %v204, 7
  %v206 = vsub.s32 0, %v205
  %v207 = vrot.slane %v187, %v206
  %v208 = vsel %vm198, %v203, %v207
  %v209 = vsel %vm199, %v203, %v207
  %210 = vmatprep.subr.mxu0 0.0
  %211 = vmatpush1.msra.mxu0 %v66
  %212 = vmatprep.subr.mxu0 0.0
  %213 = vmatpush1.msra.mxu0 %v65
  %214 = vmatprep.subr.mxu0 0.0
  %215 = vmatpush1.msra.mxu0 %v64
  %216 = vmatprep.subr.mxu0 0.0
  %217 = vmatpush1.msra.mxu0 %v63
  %218 = vmatprep.subr.mxu0 0.0
  %219 = vmatpush1.msra.mxu0 %v62
  %220 = vmatprep.subr.mxu0 0.0
  %221 = vmatpush1.msra.mxu0 %v61
  %222 = vmatprep.subr.mxu0 0.0
  %223 = vmatpush1.msra.mxu0 %v60
  %224 = vmatprep.subr.mxu0 0.0
  %225 = vmatpush1.msra.mxu0 %v59
  %226 = vmatprep.subr.mxu0 0.0
  %227 = vmatpush1.msra.mxu0 %v58
  %228 = vmatprep.subr.mxu0 0.0
  %229 = vmatpush1.msra.mxu0 %v57
  %230 = vmatprep.subr.mxu0 0.0
  %231 = vmatpush1.msra.mxu0 %v56
  %232 = vmatprep.subr.mxu0 0.0
  %233 = vmatpush1.msra.mxu0 %v55
  %234 = vmatprep.subr.mxu0 0.0
  %235 = vmatpush1.msra.mxu0 %v54
  %236 = vmatprep.subr.mxu0 0.0
  %237 = vmatpush1.msra.mxu0 %v53
  %238 = vmatprep.subr.mxu0 0.0
  %239 = vmatpush1.msra.mxu0 %v52
  %240 = vmatprep.subr.mxu0 0.0
  %241 = vmatpush1.msra.mxu0 %v51
  %242 = vmatprep.subr.mxu0 0.0
  %243 = vmatpush2.msra.mxu0 0.0
  %244 = vmatprep.subr.mxu0 0.0
  %245 = vmatpush2.msra.mxu0 0.0
  %246 = vmatprep.subr.mxu0 0.0
  %247 = vmatpush2.msra.mxu0 0.0
  %248 = vmatprep.subr.mxu0 0.0
  %249 = vmatpush2.msra.mxu0 0.0
  %250 = vmatprep.subr.mxu0 0.0
  %251 = vmatpush2.msra.mxu0 0.0
  %252 = vmatprep.subr.mxu0 0.0
  %253 = vmatpush2.msra.mxu0 0.0
  %254 = vmatprep.subr.mxu0 0.0
  %255 = vmatpush2.msra.mxu0 0.0
  %256 = vmatprep.subr.mxu0 0.0
  %257 = vmatpush2.msra.mxu0 0.0
  %258 = vmatprep.subr.mxu0 0.0
  %259 = vmatpush2.msra.mxu0 0.0
  %260 = vmatprep.subr.mxu0 0.0
  %261 = vmatpush2.msra.mxu0 0.0
  %262 = vmatprep.subr.mxu0 0.0
  %263 = vmatpush2.msra.mxu0 0.0
  %264 = vmatprep.subr.mxu0 0.0
  %265 = vmatpush2.msra.mxu0 0.0
  %266 = vmatprep.subr.mxu0 0.0
  %267 = vmatpush2.msra.mxu0 0.0
  %268 = vmatprep.subr.mxu0 0.0
  %269 = vmatpush2.msra.mxu0 0.0
  %270 = vmatprep.subr.mxu0 0.0
  %271 = vmatpush2.msra.mxu0 0.0
  %272 = vmatprep.subr.mxu0 0.0
  %273 = vmatpush2.msra.mxu0 0.0
  %274 = vmatprep.mubr.f32.mxu0 0.0
  %275 = vmatmul.mubr.f32.gmra.mxu0 %v49
  %v276 = vpop.f32.mrf.mxu0
  %v277 = vadd.f32 %v179, %v276
  %v278 = vpop.f32.mrf.mxu0
  %279 = vmatprep.mubr.f32.mxu0 0.0
  %280 = vmatmul.mubr.f32.gmra.mxu0 %v50
  %v281 = vpop.f32.mrf.mxu0
  %v282 = vadd.f32 %v184, %v281
  %v283 = vpop.f32.mrf.mxu0
  %284 = vdwg.mxu0
  %v285 = vadd.f32 %v277, %v208
  %v286 = vadd.f32 %v282, %v209
  %vm287 = vcmask 261120
  %v288 = vsel %vm287, %v285, 0.0
  %289 = vadd.xlane.f32.xlu0 %v288
  %v290 = vpop.xlane.xlu0 %289
  %v291 = vsel %vm287, %v286, 0.0
  %292 = vadd.xlane.f32.xlu0 %v291
  %v293 = vpop.xlane.xlu0 %292
  %v294 = vrcp.pop 32.0
  %v295 = vmul.f32 %v290, %v294
  %v296 = vmul.f32 %v293, %v294
  %v297 = vsub.f32 %v285, %v295
  %v298 = vsub.f32 %v286, %v296
  %v299 = vmul.f32 %v297, %v297
  %v300 = vmul.f32 %v298, %v298
  %v301 = vsel %vm287, %v299, 0.0
  %302 = vadd.xlane.f32.xlu0 %v301
  %v303 = vpop.xlane.xlu0 %302
  %v304 = vsel %vm287, %v300, 0.0
  %305 = vadd.xlane.f32.xlu0 %v304
  %v306 = vpop.xlane.xlu0 %305
  %v307 = vmul.f32 %v303, %v294
  %v308 = vmul.f32 %v306, %v294
  %v309 = vadd.f32 %v307, 1e-12
  %v310 = vadd.f32 %v308, 1e-12
  %v311 = vrsqrt.pop %v309
  %v312 = vrsqrt.pop %v310
  %v313 = vmul.f32 %v297, %v311
  %v314 = vmul.f32 %v298, %v312
  %v315 = vlaneseq
  %v316 = vshrl.u32 %v315, 7
  %v317 = vsub.s32 0, %v316
  %v318 = vrot.slane %v34, %v317
  %v319 = vmul.f32 %v313, %v318
  %v320 = vmul.f32 %v314, %v318
  %v321 = vlaneseq
  %v322 = vshrl.u32 %v321, 7
  %v323 = vsub.s32 1, %v322
  %v324 = vrot.slane %v34, %v323
  %v325 = vadd.f32 %v319, %v324
  %v326 = vadd.f32 %v320, %v324
  %vm327 = vcmp.ge.s32.totalorder %v38, 0
  %vm328 = vcmp.lt.s32.totalorder %v38, 8
  %vm329 = vmand %vm327, %vm328
  %vm330 = vmand %vm74, %vm329
  %vm331 = vmand %vm75, %vm329
  %v332 = vsel %vm330, 1, 0
  %v333 = vsel %vm331, 1, 0
  %v334 = vcvt.s32.f32 %v332
  %v335 = vcvt.s32.f32 %v333
  %v336 = vadd.f32 %v334, 0.0
  %v337 = vadd.f32 %v335, 0.0
  %vm338 = vcmp.ge.s32.totalorder %v38, 8
  %vm339 = vcmp.lt.s32.totalorder %v38, 16
  %vm340 = vmand %vm338, %vm339
  %vm341 = vmand %vm90, %vm340
  %vm342 = vmand %vm91, %vm340
  %v343 = vsel %vm341, 1, 0
  %v344 = vsel %vm342, 1, 0
  %v345 = vcvt.s32.f32 %v343
  %v346 = vcvt.s32.f32 %v344
  %v347 = vadd.f32 %v336, %v345
  %v348 = vadd.f32 %v337, %v346
  %v349 = vld [vmem:[%s1] sm:$0x1]
  %v351 = vlaneseq
  %v352 = vshrl.u32 %v351, 7
  %v353 = vsub.s32 0, %v352
  %v354 = vrot.slane %v349, %v353
  %v356 = vmul.f32 %v347, %v354
  %v357 = vmul.f32 %v348, %v354
  %v358 = vsub.f32 1.0, %v356
  %v359 = vsub.f32 1.0, %v357
  %v360 = vmul.f32 %v358, -10000.0
  %v361 = vmul.f32 %v359, -10000.0
  %v362 = vld [vmem:[%s3] sm:$0xff]
  %v363 = vld [vmem:[%s3 + $0x8] sm:$0xff]
  %v364 = vld [vmem:[%s3 + $0x10] sm:$0xff]
  %v365 = vld [vmem:[%s3 + $0x18] sm:$0xff]
  %v366 = vlaneseq
  %v367 = vshrl.u32 %v366, 7
  %v368 = vsub.s32 2, %v367
  %v369 = vrot.slane %v34, %v368
  %v371 = vsel %vm287, %v325, 0
  %v374 = vsel %vm287, %v326, 0
  %376 = vmatprep.subr.mxu0 0.0
  %377 = vmatpush1.msra.mxu0 0.0
  %378 = vmatprep.subr.mxu0 0.0
  %379 = vmatpush1.msra.mxu0 0.0
  %380 = vmatprep.subr.mxu0 0.0
  %381 = vmatpush1.msra.mxu0 0.0
  %382 = vmatprep.subr.mxu0 0.0
  %383 = vmatpush1.msra.mxu0 0.0
  %384 = vmatprep.subr.mxu0 0.0
  %385 = vmatpush1.msra.mxu0 0.0
  %386 = vmatprep.subr.mxu0 0.0
  %387 = vmatpush1.msra.mxu0 0.0
  %388 = vmatprep.subr.mxu0 0.0
  %389 = vmatpush1.msra.mxu0 0.0
  %390 = vmatprep.subr.mxu0 0.0
  %391 = vmatpush1.msra.mxu0 0.0
  %392 = vmatprep.subr.mxu0 0.0
  %393 = vmatpush1.msra.mxu0 0.0
  %394 = vmatprep.subr.mxu0 0.0
  %395 = vmatpush1.msra.mxu0 0.0
  %396 = vmatprep.subr.mxu0 0.0
  %397 = vmatpush1.msra.mxu0 0.0
  %398 = vmatprep.subr.mxu0 0.0
  %399 = vmatpush1.msra.mxu0 0.0
  %400 = vmatprep.subr.mxu0 0.0
  %401 = vmatpush1.msra.mxu0 %v365
  %402 = vmatprep.subr.mxu0 0.0
  %403 = vmatpush1.msra.mxu0 %v364
  %404 = vmatprep.subr.mxu0 0.0
  %405 = vmatpush1.msra.mxu0 %v363
  %406 = vmatprep.subr.mxu0 0.0
  %407 = vmatpush1.msra.mxu0 %v362
  %408 = vmatprep.subr.mxu0 0.0
  %409 = vmatpush2.msra.mxu0 0.0
  %410 = vmatprep.subr.mxu0 0.0
  %411 = vmatpush2.msra.mxu0 0.0
  %412 = vmatprep.subr.mxu0 0.0
  %413 = vmatpush2.msra.mxu0 0.0
  %414 = vmatprep.subr.mxu0 0.0
  %415 = vmatpush2.msra.mxu0 0.0
  %416 = vmatprep.subr.mxu0 0.0
  %417 = vmatpush2.msra.mxu0 0.0
  %418 = vmatprep.subr.mxu0 0.0
  %419 = vmatpush2.msra.mxu0 0.0
  %420 = vmatprep.subr.mxu0 0.0
  %421 = vmatpush2.msra.mxu0 0.0
  %422 = vmatprep.subr.mxu0 0.0
  %423 = vmatpush2.msra.mxu0 0.0
  %424 = vmatprep.subr.mxu0 0.0
  %425 = vmatpush2.msra.mxu0 0.0
  %426 = vmatprep.subr.mxu0 0.0
  %427 = vmatpush2.msra.mxu0 0.0
  %428 = vmatprep.subr.mxu0 0.0
  %429 = vmatpush2.msra.mxu0 0.0
  %430 = vmatprep.subr.mxu0 0.0
  %431 = vmatpush2.msra.mxu0 0.0
  %432 = vmatprep.subr.mxu0 0.0
  %433 = vmatpush2.msra.mxu0 0.0
  %434 = vmatprep.subr.mxu0 0.0
  %435 = vmatpush2.msra.mxu0 0.0
  %436 = vmatprep.subr.mxu0 0.0
  %437 = vmatpush2.msra.mxu0 0.0
  %438 = vmatprep.subr.mxu0 0.0
  %439 = vmatpush2.msra.mxu0 0.0
  %440 = vmatprep.mubr.f32.mxu0 0.0
  %441 = vmatmul.mubr.f32.gmra.mxu0 %v371
  %v442 = vpop.f32.mrf.mxu0
  %v443 = vadd.f32 %v369, %v442
  %v444 = vpop.f32.mrf.mxu0
  %445 = vmatprep.mubr.f32.mxu0 0.0
  %446 = vmatmul.mubr.f32.gmra.mxu0 %v374
  %v447 = vpop.f32.mrf.mxu0
  %v448 = vadd.f32 %v369, %v447
  %v449 = vpop.f32.mrf.mxu0
  %450 = vdwg.mxu0
  %453 = vrot.lane.b32.xlu0 %v443, 96
  %v454 = vpop.permute.xlu0 %453
  %455 = vrot.lane.b32.xlu0 %v448, 96
  %v456 = vpop.permute.xlu0 %455
  %vm457 = vcmask 64512
  %v458 = vsel %vm457, %v443, 0
  %v460 = vsel %vm457, %v448, 0
  %v462 = vsel %vm457, %v454, 0
  %v464 = vsel %vm457, %v456, 0
  %466 = vmatprep.subr.mxu0 0.0
  %467 = vmatpush1.xpose.msra.mxu0 0.0
  %468 = vmatprep.subr.mxu0 0.0
  %469 = vmatpush1.xpose.msra.mxu0 0.0
  %470 = vmatprep.subr.mxu0 0.0
  %471 = vmatpush1.xpose.msra.mxu0 0.0
  %472 = vmatprep.subr.mxu0 0.0
  %473 = vmatpush1.xpose.msra.mxu0 0.0
  %474 = vmatprep.subr.mxu0 0.0
  %475 = vmatpush1.xpose.msra.mxu0 0.0
  %476 = vmatprep.subr.mxu0 0.0
  %477 = vmatpush1.xpose.msra.mxu0 0.0
  %478 = vmatprep.subr.mxu0 0.0
  %479 = vmatpush1.xpose.msra.mxu0 0.0
  %480 = vmatprep.subr.mxu0 0.0
  %481 = vmatpush1.xpose.msra.mxu0 0.0
  %482 = vmatprep.subr.mxu0 0.0
  %483 = vmatpush1.xpose.msra.mxu0 0.0
  %484 = vmatprep.subr.mxu0 0.0
  %485 = vmatpush1.xpose.msra.mxu0 0.0
  %486 = vmatprep.subr.mxu0 0.0
  %487 = vmatpush1.xpose.msra.mxu0 0.0
  %488 = vmatprep.subr.mxu0 0.0
  %489 = vmatpush1.xpose.msra.mxu0 0.0
  %490 = vmatprep.subr.mxu0 0.0
  %491 = vmatpush1.xpose.msra.mxu0 0.0
  %492 = vmatprep.subr.mxu0 0.0
  %493 = vmatpush1.xpose.msra.mxu0 0.0
  %494 = vmatprep.subr.mxu0 0.0
  %495 = vmatpush1.xpose.msra.mxu0 %v464
  %496 = vmatprep.subr.mxu0 0.0
  %497 = vmatpush1.xpose.msra.mxu0 %v462
  %498 = vmatprep.subr.mxu0 0.0
  %499 = vmatpush2.xpose.msra.mxu0 0.0
  %500 = vmatprep.subr.mxu0 0.0
  %501 = vmatpush2.xpose.msra.mxu0 0.0
  %502 = vmatprep.subr.mxu0 0.0
  %503 = vmatpush2.xpose.msra.mxu0 0.0
  %504 = vmatprep.subr.mxu0 0.0
  %505 = vmatpush2.xpose.msra.mxu0 0.0
  %506 = vmatprep.subr.mxu0 0.0
  %507 = vmatpush2.xpose.msra.mxu0 0.0
  %508 = vmatprep.subr.mxu0 0.0
  %509 = vmatpush2.xpose.msra.mxu0 0.0
  %510 = vmatprep.subr.mxu0 0.0
  %511 = vmatpush2.xpose.msra.mxu0 0.0
  %512 = vmatprep.subr.mxu0 0.0
  %513 = vmatpush2.xpose.msra.mxu0 0.0
  %514 = vmatprep.subr.mxu0 0.0
  %515 = vmatpush2.xpose.msra.mxu0 0.0
  %516 = vmatprep.subr.mxu0 0.0
  %517 = vmatpush2.xpose.msra.mxu0 0.0
  %518 = vmatprep.subr.mxu0 0.0
  %519 = vmatpush2.xpose.msra.mxu0 0.0
  %520 = vmatprep.subr.mxu0 0.0
  %521 = vmatpush2.xpose.msra.mxu0 0.0
  %522 = vmatprep.subr.mxu0 0.0
  %523 = vmatpush2.xpose.msra.mxu0 0.0
  %524 = vmatprep.subr.mxu0 0.0
  %525 = vmatpush2.xpose.msra.mxu0 0.0
  %526 = vmatprep.subr.mxu0 0.0
  %527 = vmatpush2.xpose.msra.mxu0 0.0
  %528 = vmatprep.subr.mxu0 0.0
  %529 = vmatpush2.xpose.msra.mxu0 0.0
  %530 = vmatprep.mubr.f32.mxu0 0.0
  %531 = vmatmul.mubr.f32.gmra.mxu0 %v458
  %v532 = vpop.f32.mrf.mxu0
  %v533 = vadd.f32 0.0, %v532
  %v534 = vpop.f32.mrf.mxu0
  %535 = vmatprep.mubr.f32.mxu0 0.0
  %536 = vmatmul.mubr.f32.gmra.mxu0 %v460
  %v537 = vpop.f32.mrf.mxu0
  %v538 = vadd.f32 0.0, %v537
  %v539 = vpop.f32.mrf.mxu0
  %540 = vdwg.mxu0
  %v541 = vmul.f32 %v533, 0.35355338
  %v542 = vmul.f32 %v538, 0.35355338
  %v543 = vadd.f32 %v541, %v360
  %v544 = vadd.f32 %v542, %v361
  %v545 = vmul.f32 %v543, 1.442695
  %v546 = vpow.pop %v545
  %v547 = vmul.f32 %v544, 1.442695
  %v548 = vpow.pop %v547
  %v549 = vsel %vm105, %v546, 0.0
  %550 = vadd.xlane.f32.xlu0 %v549
  %v551 = vpop.xlane.xlu0 %550
  %v552 = vsel %vm105, %v548, 0.0
  %553 = vadd.xlane.f32.xlu0 %v552
  %v554 = vpop.xlane.xlu0 %553
  %v555 = vrcp.pop %v551
  %v556 = vrcp.pop %v554
  %v557 = vmul.f32 %v546, %v555
  %v558 = vmul.f32 %v548, %v556
  %559 = vrot.lane.b32.xlu0 %v443, 64
  %v560 = vpop.permute.xlu0 %559
  %561 = vrot.lane.b32.xlu0 %v448, 64
  %v562 = vpop.permute.xlu0 %561
  %v566 = vsel %vm105, %v557, 0
  %v569 = vsel %vm105, %v558, 0
  %571 = vmatprep.subr.mxu0 0.0
  %572 = vmatpush1.msra.mxu0 0.0
  %573 = vmatprep.subr.mxu0 0.0
  %574 = vmatpush1.msra.mxu0 0.0
  %575 = vmatprep.subr.mxu0 0.0
  %576 = vmatpush1.msra.mxu0 0.0
  %577 = vmatprep.subr.mxu0 0.0
  %578 = vmatpush1.msra.mxu0 0.0
  %579 = vmatprep.subr.mxu0 0.0
  %580 = vmatpush1.msra.mxu0 0.0
  %581 = vmatprep.subr.mxu0 0.0
  %582 = vmatpush1.msra.mxu0 0.0
  %583 = vmatprep.subr.mxu0 0.0
  %584 = vmatpush1.msra.mxu0 0.0
  %585 = vmatprep.subr.mxu0 0.0
  %586 = vmatpush1.msra.mxu0 0.0
  %587 = vmatprep.subr.mxu0 0.0
  %588 = vmatpush1.msra.mxu0 0.0
  %589 = vmatprep.subr.mxu0 0.0
  %590 = vmatpush1.msra.mxu0 0.0
  %591 = vmatprep.subr.mxu0 0.0
  %592 = vmatpush1.msra.mxu0 0.0
  %593 = vmatprep.subr.mxu0 0.0
  %594 = vmatpush1.msra.mxu0 0.0
  %595 = vmatprep.subr.mxu0 0.0
  %596 = vmatpush1.msra.mxu0 0.0
  %597 = vmatprep.subr.mxu0 0.0
  %598 = vmatpush1.msra.mxu0 0.0
  %599 = vmatprep.subr.mxu0 0.0
  %600 = vmatpush1.msra.mxu0 %v562
  %601 = vmatprep.subr.mxu0 0.0
  %602 = vmatpush1.msra.mxu0 %v560
  %603 = vmatprep.subr.mxu0 0.0
  %604 = vmatpush2.msra.mxu0 0.0
  %605 = vmatprep.subr.mxu0 0.0
  %606 = vmatpush2.msra.mxu0 0.0
  %607 = vmatprep.subr.mxu0 0.0
  %608 = vmatpush2.msra.mxu0 0.0
  %609 = vmatprep.subr.mxu0 0.0
  %610 = vmatpush2.msra.mxu0 0.0
  %611 = vmatprep.subr.mxu0 0.0
  %612 = vmatpush2.msra.mxu0 0.0
  %613 = vmatprep.subr.mxu0 0.0
  %614 = vmatpush2.msra.mxu0 0.0
  %615 = vmatprep.subr.mxu0 0.0
  %616 = vmatpush2.msra.mxu0 0.0
  %617 = vmatprep.subr.mxu0 0.0
  %618 = vmatpush2.msra.mxu0 0.0
  %619 = vmatprep.subr.mxu0 0.0
  %620 = vmatpush2.msra.mxu0 0.0
  %621 = vmatprep.subr.mxu0 0.0
  %622 = vmatpush2.msra.mxu0 0.0
  %623 = vmatprep.subr.mxu0 0.0
  %624 = vmatpush2.msra.mxu0 0.0
  %625 = vmatprep.subr.mxu0 0.0
  %626 = vmatpush2.msra.mxu0 0.0
  %627 = vmatprep.subr.mxu0 0.0
  %628 = vmatpush2.msra.mxu0 0.0
  %629 = vmatprep.subr.mxu0 0.0
  %630 = vmatpush2.msra.mxu0 0.0
  %631 = vmatprep.subr.mxu0 0.0
  %632 = vmatpush2.msra.mxu0 0.0
  %633 = vmatprep.subr.mxu0 0.0
  %634 = vmatpush2.msra.mxu0 0.0
  %635 = vmatprep.mubr.f32.mxu0 0.0
  %636 = vmatmul.mubr.f32.gmra.mxu0 %v566
  %v637 = vpop.f32.mrf.mxu0
  %v638 = vadd.f32 0.0, %v637
  %v639 = vpop.f32.mrf.mxu0
  %640 = vmatprep.mubr.f32.mxu0 0.0
  %641 = vmatmul.mubr.f32.gmra.mxu0 %v569
  %v642 = vpop.f32.mrf.mxu0
  %v643 = vadd.f32 0.0, %v642
  %v644 = vpop.f32.mrf.mxu0
  %645 = vdwg.mxu0
  %646 = vrot.lane.b32.xlu0 %v443, 120
  %v647 = vpop.permute.xlu0 %646
  %648 = vrot.lane.b32.xlu0 %v448, 120
  %v649 = vpop.permute.xlu0 %648
  %650 = vrot.lane.b32.xlu0 %v443, 88
  %v651 = vpop.permute.xlu0 %650
  %652 = vrot.lane.b32.xlu0 %v448, 88
  %v653 = vpop.permute.xlu0 %652
  %v654 = vsel %vm457, %v647, 0
  %v656 = vsel %vm457, %v649, 0
  %v658 = vsel %vm457, %v651, 0
  %v660 = vsel %vm457, %v653, 0
  %662 = vmatprep.subr.mxu0 0.0
  %663 = vmatpush1.xpose.msra.mxu0 0.0
  %664 = vmatprep.subr.mxu0 0.0
  %665 = vmatpush1.xpose.msra.mxu0 0.0
  %666 = vmatprep.subr.mxu0 0.0
  %667 = vmatpush1.xpose.msra.mxu0 0.0
  %668 = vmatprep.subr.mxu0 0.0
  %669 = vmatpush1.xpose.msra.mxu0 0.0
  %670 = vmatprep.subr.mxu0 0.0
  %671 = vmatpush1.xpose.msra.mxu0 0.0
  %672 = vmatprep.subr.mxu0 0.0
  %673 = vmatpush1.xpose.msra.mxu0 0.0
  %674 = vmatprep.subr.mxu0 0.0
  %675 = vmatpush1.xpose.msra.mxu0 0.0
  %676 = vmatprep.subr.mxu0 0.0
  %677 = vmatpush1.xpose.msra.mxu0 0.0
  %678 = vmatprep.subr.mxu0 0.0
  %679 = vmatpush1.xpose.msra.mxu0 0.0
  %680 = vmatprep.subr.mxu0 0.0
  %681 = vmatpush1.xpose.msra.mxu0 0.0
  %682 = vmatprep.subr.mxu0 0.0
  %683 = vmatpush1.xpose.msra.mxu0 0.0
  %684 = vmatprep.subr.mxu0 0.0
  %685 = vmatpush1.xpose.msra.mxu0 0.0
  %686 = vmatprep.subr.mxu0 0.0
  %687 = vmatpush1.xpose.msra.mxu0 0.0
  %688 = vmatprep.subr.mxu0 0.0
  %689 = vmatpush1.xpose.msra.mxu0 0.0
  %690 = vmatprep.subr.mxu0 0.0
  %691 = vmatpush1.xpose.msra.mxu0 %v660
  %692 = vmatprep.subr.mxu0 0.0
  %693 = vmatpush1.xpose.msra.mxu0 %v658
  %694 = vmatprep.subr.mxu0 0.0
  %695 = vmatpush2.xpose.msra.mxu0 0.0
  %696 = vmatprep.subr.mxu0 0.0
  %697 = vmatpush2.xpose.msra.mxu0 0.0
  %698 = vmatprep.subr.mxu0 0.0
  %699 = vmatpush2.xpose.msra.mxu0 0.0
  %700 = vmatprep.subr.mxu0 0.0
  %701 = vmatpush2.xpose.msra.mxu0 0.0
  %702 = vmatprep.subr.mxu0 0.0
  %703 = vmatpush2.xpose.msra.mxu0 0.0
  %704 = vmatprep.subr.mxu0 0.0
  %705 = vmatpush2.xpose.msra.mxu0 0.0
  %706 = vmatprep.subr.mxu0 0.0
  %707 = vmatpush2.xpose.msra.mxu0 0.0
  %708 = vmatprep.subr.mxu0 0.0
  %709 = vmatpush2.xpose.msra.mxu0 0.0
  %710 = vmatprep.subr.mxu0 0.0
  %711 = vmatpush2.xpose.msra.mxu0 0.0
  %712 = vmatprep.subr.mxu0 0.0
  %713 = vmatpush2.xpose.msra.mxu0 0.0
  %714 = vmatprep.subr.mxu0 0.0
  %715 = vmatpush2.xpose.msra.mxu0 0.0
  %716 = vmatprep.subr.mxu0 0.0
  %717 = vmatpush2.xpose.msra.mxu0 0.0
  %718 = vmatprep.subr.mxu0 0.0
  %719 = vmatpush2.xpose.msra.mxu0 0.0
  %720 = vmatprep.subr.mxu0 0.0
  %721 = vmatpush2.xpose.msra.mxu0 0.0
  %722 = vmatprep.subr.mxu0 0.0
  %723 = vmatpush2.xpose.msra.mxu0 0.0
  %724 = vmatprep.subr.mxu0 0.0
  %725 = vmatpush2.xpose.msra.mxu0 0.0
  %726 = vmatprep.mubr.f32.mxu0 0.0
  %727 = vmatmul.mubr.f32.gmra.mxu0 %v654
  %v728 = vpop.f32.mrf.mxu0
  %v729 = vadd.f32 0.0, %v728
  %v730 = vpop.f32.mrf.mxu0
  %731 = vmatprep.mubr.f32.mxu0 0.0
  %732 = vmatmul.mubr.f32.gmra.mxu0 %v656
  %v733 = vpop.f32.mrf.mxu0
  %v734 = vadd.f32 0.0, %v733
  %v735 = vpop.f32.mrf.mxu0
  %736 = vdwg.mxu0
  %v737 = vmul.f32 %v729, 0.35355338
  %v738 = vmul.f32 %v734, 0.35355338
  %v739 = vadd.f32 %v737, %v360
  %v740 = vadd.f32 %v738, %v361
  %v741 = vmul.f32 %v739, 1.442695
  %v742 = vpow.pop %v741
  %v743 = vmul.f32 %v740, 1.442695
  %v744 = vpow.pop %v743
  %v745 = vsel %vm105, %v742, 0.0
  %746 = vadd.xlane.f32.xlu0 %v745
  %v747 = vpop.xlane.xlu0 %746
  %v748 = vsel %vm105, %v744, 0.0
  %749 = vadd.xlane.f32.xlu0 %v748
  %v750 = vpop.xlane.xlu0 %749
  %v751 = vrcp.pop %v747
  %v752 = vrcp.pop %v750
  %v753 = vmul.f32 %v742, %v751
  %v754 = vmul.f32 %v744, %v752
  %755 = vrot.lane.b32.xlu0 %v443, 56
  %v756 = vpop.permute.xlu0 %755
  %757 = vrot.lane.b32.xlu0 %v448, 56
  %v758 = vpop.permute.xlu0 %757
  %v762 = vsel %vm105, %v753, 0
  %v765 = vsel %vm105, %v754, 0
  %767 = vmatprep.subr.mxu0 0.0
  %768 = vmatpush1.msra.mxu0 0.0
  %769 = vmatprep.subr.mxu0 0.0
  %770 = vmatpush1.msra.mxu0 0.0
  %771 = vmatprep.subr.mxu0 0.0
  %772 = vmatpush1.msra.mxu0 0.0
  %773 = vmatprep.subr.mxu0 0.0
  %774 = vmatpush1.msra.mxu0 0.0
  %775 = vmatprep.subr.mxu0 0.0
  %776 = vmatpush1.msra.mxu0 0.0
  %777 = vmatprep.subr.mxu0 0.0
  %778 = vmatpush1.msra.mxu0 0.0
  %779 = vmatprep.subr.mxu0 0.0
  %780 = vmatpush1.msra.mxu0 0.0
  %781 = vmatprep.subr.mxu0 0.0
  %782 = vmatpush1.msra.mxu0 0.0
  %783 = vmatprep.subr.mxu0 0.0
  %784 = vmatpush1.msra.mxu0 0.0
  %785 = vmatprep.subr.mxu0 0.0
  %786 = vmatpush1.msra.mxu0 0.0
  %787 = vmatprep.subr.mxu0 0.0
  %788 = vmatpush1.msra.mxu0 0.0
  %789 = vmatprep.subr.mxu0 0.0
  %790 = vmatpush1.msra.mxu0 0.0
  %791 = vmatprep.subr.mxu0 0.0
  %792 = vmatpush1.msra.mxu0 0.0
  %793 = vmatprep.subr.mxu0 0.0
  %794 = vmatpush1.msra.mxu0 0.0
  %795 = vmatprep.subr.mxu0 0.0
  %796 = vmatpush1.msra.mxu0 %v758
  %797 = vmatprep.subr.mxu0 0.0
  %798 = vmatpush1.msra.mxu0 %v756
  %799 = vmatprep.subr.mxu0 0.0
  %800 = vmatpush2.msra.mxu0 0.0
  %801 = vmatprep.subr.mxu0 0.0
  %802 = vmatpush2.msra.mxu0 0.0
  %803 = vmatprep.subr.mxu0 0.0
  %804 = vmatpush2.msra.mxu0 0.0
  %805 = vmatprep.subr.mxu0 0.0
  %806 = vmatpush2.msra.mxu0 0.0
  %807 = vmatprep.subr.mxu0 0.0
  %808 = vmatpush2.msra.mxu0 0.0
  %809 = vmatprep.subr.mxu0 0.0
  %810 = vmatpush2.msra.mxu0 0.0
  %811 = vmatprep.subr.mxu0 0.0
  %812 = vmatpush2.msra.mxu0 0.0
  %813 = vmatprep.subr.mxu0 0.0
  %814 = vmatpush2.msra.mxu0 0.0
  %815 = vmatprep.subr.mxu0 0.0
  %816 = vmatpush2.msra.mxu0 0.0
  %817 = vmatprep.subr.mxu0 0.0
  %818 = vmatpush2.msra.mxu0 0.0
  %819 = vmatprep.subr.mxu0 0.0
  %820 = vmatpush2.msra.mxu0 0.0
  %821 = vmatprep.subr.mxu0 0.0
  %822 = vmatpush2.msra.mxu0 0.0
  %823 = vmatprep.subr.mxu0 0.0
  %824 = vmatpush2.msra.mxu0 0.0
  %825 = vmatprep.subr.mxu0 0.0
  %826 = vmatpush2.msra.mxu0 0.0
  %827 = vmatprep.subr.mxu0 0.0
  %828 = vmatpush2.msra.mxu0 0.0
  %829 = vmatprep.subr.mxu0 0.0
  %830 = vmatpush2.msra.mxu0 0.0
  %831 = vmatprep.mubr.f32.mxu0 0.0
  %832 = vmatmul.mubr.f32.gmra.mxu0 %v762
  %v833 = vpop.f32.mrf.mxu0
  %v834 = vadd.f32 0.0, %v833
  %v835 = vpop.f32.mrf.mxu0
  %836 = vmatprep.mubr.f32.mxu0 0.0
  %837 = vmatmul.mubr.f32.gmra.mxu0 %v765
  %v838 = vpop.f32.mrf.mxu0
  %v839 = vadd.f32 0.0, %v838
  %v840 = vpop.f32.mrf.mxu0
  %841 = vdwg.mxu0
  %842 = vrot.lane.b32.xlu0 %v443, 112
  %v843 = vpop.permute.xlu0 %842
  %844 = vrot.lane.b32.xlu0 %v448, 112
  %v845 = vpop.permute.xlu0 %844
  %846 = vrot.lane.b32.xlu0 %v443, 80
  %v847 = vpop.permute.xlu0 %846
  %848 = vrot.lane.b32.xlu0 %v448, 80
  %v849 = vpop.permute.xlu0 %848
  %v850 = vsel %vm457, %v843, 0
  %v852 = vsel %vm457, %v845, 0
  %v854 = vsel %vm457, %v847, 0
  %v856 = vsel %vm457, %v849, 0
  %858 = vmatprep.subr.mxu0 0.0
  %859 = vmatpush1.xpose.msra.mxu0 0.0
  %860 = vmatprep.subr.mxu0 0.0
  %861 = vmatpush1.xpose.msra.mxu0 0.0
  %862 = vmatprep.subr.mxu0 0.0
  %863 = vmatpush1.xpose.msra.mxu0 0.0
  %864 = vmatprep.subr.mxu0 0.0
  %865 = vmatpush1.xpose.msra.mxu0 0.0
  %866 = vmatprep.subr.mxu0 0.0
  %867 = vmatpush1.xpose.msra.mxu0 0.0
  %868 = vmatprep.subr.mxu0 0.0
  %869 = vmatpush1.xpose.msra.mxu0 0.0
  %870 = vmatprep.subr.mxu0 0.0
  %871 = vmatpush1.xpose.msra.mxu0 0.0
  %872 = vmatprep.subr.mxu0 0.0
  %873 = vmatpush1.xpose.msra.mxu0 0.0
  %874 = vmatprep.subr.mxu0 0.0
  %875 = vmatpush1.xpose.msra.mxu0 0.0
  %876 = vmatprep.subr.mxu0 0.0
  %877 = vmatpush1.xpose.msra.mxu0 0.0
  %878 = vmatprep.subr.mxu0 0.0
  %879 = vmatpush1.xpose.msra.mxu0 0.0
  %880 = vmatprep.subr.mxu0 0.0
  %881 = vmatpush1.xpose.msra.mxu0 0.0
  %882 = vmatprep.subr.mxu0 0.0
  %883 = vmatpush1.xpose.msra.mxu0 0.0
  %884 = vmatprep.subr.mxu0 0.0
  %885 = vmatpush1.xpose.msra.mxu0 0.0
  %886 = vmatprep.subr.mxu0 0.0
  %887 = vmatpush1.xpose.msra.mxu0 %v856
  %888 = vmatprep.subr.mxu0 0.0
  %889 = vmatpush1.xpose.msra.mxu0 %v854
  %890 = vmatprep.subr.mxu0 0.0
  %891 = vmatpush2.xpose.msra.mxu0 0.0
  %892 = vmatprep.subr.mxu0 0.0
  %893 = vmatpush2.xpose.msra.mxu0 0.0
  %894 = vmatprep.subr.mxu0 0.0
  %895 = vmatpush2.xpose.msra.mxu0 0.0
  %896 = vmatprep.subr.mxu0 0.0
  %897 = vmatpush2.xpose.msra.mxu0 0.0
  %898 = vmatprep.subr.mxu0 0.0
  %899 = vmatpush2.xpose.msra.mxu0 0.0
  %900 = vmatprep.subr.mxu0 0.0
  %901 = vmatpush2.xpose.msra.mxu0 0.0
  %902 = vmatprep.subr.mxu0 0.0
  %903 = vmatpush2.xpose.msra.mxu0 0.0
  %904 = vmatprep.subr.mxu0 0.0
  %905 = vmatpush2.xpose.msra.mxu0 0.0
  %906 = vmatprep.subr.mxu0 0.0
  %907 = vmatpush2.xpose.msra.mxu0 0.0
  %908 = vmatprep.subr.mxu0 0.0
  %909 = vmatpush2.xpose.msra.mxu0 0.0
  %910 = vmatprep.subr.mxu0 0.0
  %911 = vmatpush2.xpose.msra.mxu0 0.0
  %912 = vmatprep.subr.mxu0 0.0
  %913 = vmatpush2.xpose.msra.mxu0 0.0
  %914 = vmatprep.subr.mxu0 0.0
  %915 = vmatpush2.xpose.msra.mxu0 0.0
  %916 = vmatprep.subr.mxu0 0.0
  %917 = vmatpush2.xpose.msra.mxu0 0.0
  %918 = vmatprep.subr.mxu0 0.0
  %919 = vmatpush2.xpose.msra.mxu0 0.0
  %920 = vmatprep.subr.mxu0 0.0
  %921 = vmatpush2.xpose.msra.mxu0 0.0
  %922 = vmatprep.mubr.f32.mxu0 0.0
  %923 = vmatmul.mubr.f32.gmra.mxu0 %v850
  %v924 = vpop.f32.mrf.mxu0
  %v925 = vadd.f32 0.0, %v924
  %v926 = vpop.f32.mrf.mxu0
  %927 = vmatprep.mubr.f32.mxu0 0.0
  %928 = vmatmul.mubr.f32.gmra.mxu0 %v852
  %v929 = vpop.f32.mrf.mxu0
  %v930 = vadd.f32 0.0, %v929
  %v931 = vpop.f32.mrf.mxu0
  %932 = vdwg.mxu0
  %v933 = vmul.f32 %v925, 0.35355338
  %v934 = vmul.f32 %v930, 0.35355338
  %v935 = vadd.f32 %v933, %v360
  %v936 = vadd.f32 %v934, %v361
  %v937 = vmul.f32 %v935, 1.442695
  %v938 = vpow.pop %v937
  %v939 = vmul.f32 %v936, 1.442695
  %v940 = vpow.pop %v939
  %v941 = vsel %vm105, %v938, 0.0
  %942 = vadd.xlane.f32.xlu0 %v941
  %v943 = vpop.xlane.xlu0 %942
  %v944 = vsel %vm105, %v940, 0.0
  %945 = vadd.xlane.f32.xlu0 %v944
  %v946 = vpop.xlane.xlu0 %945
  %v947 = vrcp.pop %v943
  %v948 = vrcp.pop %v946
  %v949 = vmul.f32 %v938, %v947
  %v950 = vmul.f32 %v940, %v948
  %951 = vrot.lane.b32.xlu0 %v443, 48
  %v952 = vpop.permute.xlu0 %951
  %953 = vrot.lane.b32.xlu0 %v448, 48
  %v954 = vpop.permute.xlu0 %953
  %v958 = vsel %vm105, %v949, 0
  %v961 = vsel %vm105, %v950, 0
  %963 = vmatprep.subr.mxu0 0.0
  %964 = vmatpush1.msra.mxu0 0.0
  %965 = vmatprep.subr.mxu0 0.0
  %966 = vmatpush1.msra.mxu0 0.0
  %967 = vmatprep.subr.mxu0 0.0
  %968 = vmatpush1.msra.mxu0 0.0
  %969 = vmatprep.subr.mxu0 0.0
  %970 = vmatpush1.msra.mxu0 0.0
  %971 = vmatprep.subr.mxu0 0.0
  %972 = vmatpush1.msra.mxu0 0.0
  %973 = vmatprep.subr.mxu0 0.0
  %974 = vmatpush1.msra.mxu0 0.0
  %975 = vmatprep.subr.mxu0 0.0
  %976 = vmatpush1.msra.mxu0 0.0
  %977 = vmatprep.subr.mxu0 0.0
  %978 = vmatpush1.msra.mxu0 0.0
  %979 = vmatprep.subr.mxu0 0.0
  %980 = vmatpush1.msra.mxu0 0.0
  %981 = vmatprep.subr.mxu0 0.0
  %982 = vmatpush1.msra.mxu0 0.0
  %983 = vmatprep.subr.mxu0 0.0
  %984 = vmatpush1.msra.mxu0 0.0
  %985 = vmatprep.subr.mxu0 0.0
  %986 = vmatpush1.msra.mxu0 0.0
  %987 = vmatprep.subr.mxu0 0.0
  %988 = vmatpush1.msra.mxu0 0.0
  %989 = vmatprep.subr.mxu0 0.0
  %990 = vmatpush1.msra.mxu0 0.0
  %991 = vmatprep.subr.mxu0 0.0
  %992 = vmatpush1.msra.mxu0 %v954
  %993 = vmatprep.subr.mxu0 0.0
  %994 = vmatpush1.msra.mxu0 %v952
  %995 = vmatprep.subr.mxu0 0.0
  %996 = vmatpush2.msra.mxu0 0.0
  %997 = vmatprep.subr.mxu0 0.0
  %998 = vmatpush2.msra.mxu0 0.0
  %999 = vmatprep.subr.mxu0 0.0
  %1000 = vmatpush2.msra.mxu0 0.0
  %1001 = vmatprep.subr.mxu0 0.0
  %1002 = vmatpush2.msra.mxu0 0.0
  %1003 = vmatprep.subr.mxu0 0.0
  %1004 = vmatpush2.msra.mxu0 0.0
  %1005 = vmatprep.subr.mxu0 0.0
  %1006 = vmatpush2.msra.mxu0 0.0
  %1007 = vmatprep.subr.mxu0 0.0
  %1008 = vmatpush2.msra.mxu0 0.0
  %1009 = vmatprep.subr.mxu0 0.0
  %1010 = vmatpush2.msra.mxu0 0.0
  %1011 = vmatprep.subr.mxu0 0.0
  %1012 = vmatpush2.msra.mxu0 0.0
  %1013 = vmatprep.subr.mxu0 0.0
  %1014 = vmatpush2.msra.mxu0 0.0
  %1015 = vmatprep.subr.mxu0 0.0
  %1016 = vmatpush2.msra.mxu0 0.0
  %1017 = vmatprep.subr.mxu0 0.0
  %1018 = vmatpush2.msra.mxu0 0.0
  %1019 = vmatprep.subr.mxu0 0.0
  %1020 = vmatpush2.msra.mxu0 0.0
  %1021 = vmatprep.subr.mxu0 0.0
  %1022 = vmatpush2.msra.mxu0 0.0
  %1023 = vmatprep.subr.mxu0 0.0
  %1024 = vmatpush2.msra.mxu0 0.0
  %1025 = vmatprep.subr.mxu0 0.0
  %1026 = vmatpush2.msra.mxu0 0.0
  %1027 = vmatprep.mubr.f32.mxu0 0.0
  %1028 = vmatmul.mubr.f32.gmra.mxu0 %v958
  %v1029 = vpop.f32.mrf.mxu0
  %v1030 = vadd.f32 0.0, %v1029
  %v1031 = vpop.f32.mrf.mxu0
  %1032 = vmatprep.mubr.f32.mxu0 0.0
  %1033 = vmatmul.mubr.f32.gmra.mxu0 %v961
  %v1034 = vpop.f32.mrf.mxu0
  %v1035 = vadd.f32 0.0, %v1034
  %v1036 = vpop.f32.mrf.mxu0
  %1037 = vdwg.mxu0
  %1038 = vrot.lane.b32.xlu0 %v443, 104
  %v1039 = vpop.permute.xlu0 %1038
  %1040 = vrot.lane.b32.xlu0 %v448, 104
  %v1041 = vpop.permute.xlu0 %1040
  %1042 = vrot.lane.b32.xlu0 %v443, 72
  %v1043 = vpop.permute.xlu0 %1042
  %1044 = vrot.lane.b32.xlu0 %v448, 72
  %v1045 = vpop.permute.xlu0 %1044
  %v1046 = vsel %vm457, %v1039, 0
  %v1048 = vsel %vm457, %v1041, 0
  %v1050 = vsel %vm457, %v1043, 0
  %v1052 = vsel %vm457, %v1045, 0
  %1054 = vmatprep.subr.mxu0 0.0
  %1055 = vmatpush1.xpose.msra.mxu0 0.0
  %1056 = vmatprep.subr.mxu0 0.0
  %1057 = vmatpush1.xpose.msra.mxu0 0.0
  %1058 = vmatprep.subr.mxu0 0.0
  %1059 = vmatpush1.xpose.msra.mxu0 0.0
  %1060 = vmatprep.subr.mxu0 0.0
  %1061 = vmatpush1.xpose.msra.mxu0 0.0
  %1062 = vmatprep.subr.mxu0 0.0
  %1063 = vmatpush1.xpose.msra.mxu0 0.0
  %1064 = vmatprep.subr.mxu0 0.0
  %1065 = vmatpush1.xpose.msra.mxu0 0.0
  %1066 = vmatprep.subr.mxu0 0.0
  %1067 = vmatpush1.xpose.msra.mxu0 0.0
  %1068 = vmatprep.subr.mxu0 0.0
  %1069 = vmatpush1.xpose.msra.mxu0 0.0
  %1070 = vmatprep.subr.mxu0 0.0
  %1071 = vmatpush1.xpose.msra.mxu0 0.0
  %1072 = vmatprep.subr.mxu0 0.0
  %1073 = vmatpush1.xpose.msra.mxu0 0.0
  %1074 = vmatprep.subr.mxu0 0.0
  %1075 = vmatpush1.xpose.msra.mxu0 0.0
  %1076 = vmatprep.subr.mxu0 0.0
  %1077 = vmatpush1.xpose.msra.mxu0 0.0
  %1078 = vmatprep.subr.mxu0 0.0
  %1079 = vmatpush1.xpose.msra.mxu0 0.0
  %1080 = vmatprep.subr.mxu0 0.0
  %1081 = vmatpush1.xpose.msra.mxu0 0.0
  %1082 = vmatprep.subr.mxu0 0.0
  %1083 = vmatpush1.xpose.msra.mxu0 %v1052
  %1084 = vmatprep.subr.mxu0 0.0
  %1085 = vmatpush1.xpose.msra.mxu0 %v1050
  %1086 = vmatprep.subr.mxu0 0.0
  %1087 = vmatpush2.xpose.msra.mxu0 0.0
  %1088 = vmatprep.subr.mxu0 0.0
  %1089 = vmatpush2.xpose.msra.mxu0 0.0
  %1090 = vmatprep.subr.mxu0 0.0
  %1091 = vmatpush2.xpose.msra.mxu0 0.0
  %1092 = vmatprep.subr.mxu0 0.0
  %1093 = vmatpush2.xpose.msra.mxu0 0.0
  %1094 = vmatprep.subr.mxu0 0.0
  %1095 = vmatpush2.xpose.msra.mxu0 0.0
  %1096 = vmatprep.subr.mxu0 0.0
  %1097 = vmatpush2.xpose.msra.mxu0 0.0
  %1098 = vmatprep.subr.mxu0 0.0
  %1099 = vmatpush2.xpose.msra.mxu0 0.0
  %1100 = vmatprep.subr.mxu0 0.0
  %1101 = vmatpush2.xpose.msra.mxu0 0.0
  %1102 = vmatprep.subr.mxu0 0.0
  %1103 = vmatpush2.xpose.msra.mxu0 0.0
  %1104 = vmatprep.subr.mxu0 0.0
  %1105 = vmatpush2.xpose.msra.mxu0 0.0
  %1106 = vmatprep.subr.mxu0 0.0
  %1107 = vmatpush2.xpose.msra.mxu0 0.0
  %1108 = vmatprep.subr.mxu0 0.0
  %1109 = vmatpush2.xpose.msra.mxu0 0.0
  %1110 = vmatprep.subr.mxu0 0.0
  %1111 = vmatpush2.xpose.msra.mxu0 0.0
  %1112 = vmatprep.subr.mxu0 0.0
  %1113 = vmatpush2.xpose.msra.mxu0 0.0
  %1114 = vmatprep.subr.mxu0 0.0
  %1115 = vmatpush2.xpose.msra.mxu0 0.0
  %1116 = vmatprep.subr.mxu0 0.0
  %1117 = vmatpush2.xpose.msra.mxu0 0.0
  %1118 = vmatprep.mubr.f32.mxu0 0.0
  %1119 = vmatmul.mubr.f32.gmra.mxu0 %v1046
  %v1120 = vpop.f32.mrf.mxu0
  %v1121 = vadd.f32 0.0, %v1120
  %v1122 = vpop.f32.mrf.mxu0
  %1123 = vmatprep.mubr.f32.mxu0 0.0
  %1124 = vmatmul.mubr.f32.gmra.mxu0 %v1048
  %v1125 = vpop.f32.mrf.mxu0
  %v1126 = vadd.f32 0.0, %v1125
  %v1127 = vpop.f32.mrf.mxu0
  %1128 = vdwg.mxu0
  %v1129 = vmul.f32 %v1121, 0.35355338
  %v1130 = vmul.f32 %v1126, 0.35355338
  %v1131 = vadd.f32 %v1129, %v360
  %v1132 = vadd.f32 %v1130, %v361
  %v1133 = vmul.f32 %v1131, 1.442695
  %v1134 = vpow.pop %v1133
  %v1135 = vmul.f32 %v1132, 1.442695
  %v1136 = vpow.pop %v1135
  %v1137 = vsel %vm105, %v1134, 0.0
  %1138 = vadd.xlane.f32.xlu0 %v1137
  %v1139 = vpop.xlane.xlu0 %1138
  %v1140 = vsel %vm105, %v1136, 0.0
  %1141 = vadd.xlane.f32.xlu0 %v1140
  %v1142 = vpop.xlane.xlu0 %1141
  %v1143 = vrcp.pop %v1139
  %v1144 = vrcp.pop %v1142
  %v1145 = vmul.f32 %v1134, %v1143
  %v1146 = vmul.f32 %v1136, %v1144
  %1147 = vrot.lane.b32.xlu0 %v443, 40
  %v1148 = vpop.permute.xlu0 %1147
  %1149 = vrot.lane.b32.xlu0 %v448, 40
  %v1150 = vpop.permute.xlu0 %1149
  %v1154 = vsel %vm105, %v1145, 0
  %v1157 = vsel %vm105, %v1146, 0
  %1159 = vmatprep.subr.mxu0 0.0
  %1160 = vmatpush1.msra.mxu0 0.0
  %1161 = vmatprep.subr.mxu0 0.0
  %1162 = vmatpush1.msra.mxu0 0.0
  %1163 = vmatprep.subr.mxu0 0.0
  %1164 = vmatpush1.msra.mxu0 0.0
  %1165 = vmatprep.subr.mxu0 0.0
  %1166 = vmatpush1.msra.mxu0 0.0
  %1167 = vmatprep.subr.mxu0 0.0
  %1168 = vmatpush1.msra.mxu0 0.0
  %1169 = vmatprep.subr.mxu0 0.0
  %1170 = vmatpush1.msra.mxu0 0.0
  %1171 = vmatprep.subr.mxu0 0.0
  %1172 = vmatpush1.msra.mxu0 0.0
  %1173 = vmatprep.subr.mxu0 0.0
  %1174 = vmatpush1.msra.mxu0 0.0
  %1175 = vmatprep.subr.mxu0 0.0
  %1176 = vmatpush1.msra.mxu0 0.0
  %1177 = vmatprep.subr.mxu0 0.0
  %1178 = vmatpush1.msra.mxu0 0.0
  %1179 = vmatprep.subr.mxu0 0.0
  %1180 = vmatpush1.msra.mxu0 0.0
  %1181 = vmatprep.subr.mxu0 0.0
  %1182 = vmatpush1.msra.mxu0 0.0
  %1183 = vmatprep.subr.mxu0 0.0
  %1184 = vmatpush1.msra.mxu0 0.0
  %1185 = vmatprep.subr.mxu0 0.0
  %1186 = vmatpush1.msra.mxu0 0.0
  %1187 = vmatprep.subr.mxu0 0.0
  %1188 = vmatpush1.msra.mxu0 %v1150
  %1189 = vmatprep.subr.mxu0 0.0
  %1190 = vmatpush1.msra.mxu0 %v1148
  %1191 = vmatprep.subr.mxu0 0.0
  %1192 = vmatpush2.msra.mxu0 0.0
  %1193 = vmatprep.subr.mxu0 0.0
  %1194 = vmatpush2.msra.mxu0 0.0
  %1195 = vmatprep.subr.mxu0 0.0
  %1196 = vmatpush2.msra.mxu0 0.0
  %1197 = vmatprep.subr.mxu0 0.0
  %1198 = vmatpush2.msra.mxu0 0.0
  %1199 = vmatprep.subr.mxu0 0.0
  %1200 = vmatpush2.msra.mxu0 0.0
  %1201 = vmatprep.subr.mxu0 0.0
  %1202 = vmatpush2.msra.mxu0 0.0
  %1203 = vmatprep.subr.mxu0 0.0
  %1204 = vmatpush2.msra.mxu0 0.0
  %1205 = vmatprep.subr.mxu0 0.0
  %1206 = vmatpush2.msra.mxu0 0.0
  %1207 = vmatprep.subr.mxu0 0.0
  %1208 = vmatpush2.msra.mxu0 0.0
  %1209 = vmatprep.subr.mxu0 0.0
  %1210 = vmatpush2.msra.mxu0 0.0
  %1211 = vmatprep.subr.mxu0 0.0
  %1212 = vmatpush2.msra.mxu0 0.0
  %1213 = vmatprep.subr.mxu0 0.0
  %1214 = vmatpush2.msra.mxu0 0.0
  %1215 = vmatprep.subr.mxu0 0.0
  %1216 = vmatpush2.msra.mxu0 0.0
  %1217 = vmatprep.subr.mxu0 0.0
  %1218 = vmatpush2.msra.mxu0 0.0
  %1219 = vmatprep.subr.mxu0 0.0
  %1220 = vmatpush2.msra.mxu0 0.0
  %1221 = vmatprep.subr.mxu0 0.0
  %1222 = vmatpush2.msra.mxu0 0.0
  %1223 = vmatprep.mubr.f32.mxu0 0.0
  %1224 = vmatmul.mubr.f32.gmra.mxu0 %v1154
  %v1225 = vpop.f32.mrf.mxu0
  %v1226 = vadd.f32 0.0, %v1225
  %v1227 = vpop.f32.mrf.mxu0
  %1228 = vmatprep.mubr.f32.mxu0 0.0
  %1229 = vmatmul.mubr.f32.gmra.mxu0 %v1157
  %v1230 = vpop.f32.mrf.mxu0
  %v1231 = vadd.f32 0.0, %v1230
  %v1232 = vpop.f32.mrf.mxu0
  %1233 = vdwg.mxu0
  %1236 = vrot.lane.b32.xlu0 %v834, 8
  %v1237 = vpop.permute.xlu0 %1236
  %1238 = vrot.lane.b32.xlu0 %v839, 8
  %v1239 = vpop.permute.xlu0 %1238
  %1244 = vrot.lane.b32.xlu0 %v1030, 16
  %v1245 = vpop.permute.xlu0 %1244
  %1246 = vrot.lane.b32.xlu0 %v1035, 16
  %v1247 = vpop.permute.xlu0 %1246
  %1252 = vrot.lane.b32.xlu0 %v1226, 24
  %v1253 = vpop.permute.xlu0 %1252
  %1254 = vrot.lane.b32.xlu0 %v1231, 24
  %v1255 = vpop.permute.xlu0 %1254
  %v1258 = vsel %vm457, %v638, %v1237
  %v1259 = vsel %vm457, %v643, %v1239
  %v1260 = vsel %vm105, %v1258, %v1245
  %v1261 = vsel %vm105, %v1259, %v1247
  %vm1262 = vcmask 195584
  %v1263 = vsel %vm1262, %v1260, %v1253
  %v1264 = vsel %vm1262, %v1261, %v1255
  %v1265 = vld [vmem:[%s4] sm:$0xff]
  %v1266 = vld [vmem:[%s4 + $0x8] sm:$0xff]
  %v1267 = vld [vmem:[%s4 + $0x10] sm:$0xff]
  %v1268 = vld [vmem:[%s4 + $0x18] sm:$0xff]
  %v1269 = vlaneseq
  %v1270 = vshrl.u32 %v1269, 7
  %v1271 = vsub.s32 3, %v1270
  %v1272 = vrot.slane %v34, %v1271
  %v1274 = vsel %vm287, %v1263, 0
  %v1277 = vsel %vm287, %v1264, 0
  %1279 = vmatprep.subr.mxu0 0.0
  %1280 = vmatpush1.msra.mxu0 0.0
  %1281 = vmatprep.subr.mxu0 0.0
  %1282 = vmatpush1.msra.mxu0 0.0
  %1283 = vmatprep.subr.mxu0 0.0
  %1284 = vmatpush1.msra.mxu0 0.0
  %1285 = vmatprep.subr.mxu0 0.0
  %1286 = vmatpush1.msra.mxu0 0.0
  %1287 = vmatprep.subr.mxu0 0.0
  %1288 = vmatpush1.msra.mxu0 0.0
  %1289 = vmatprep.subr.mxu0 0.0
  %1290 = vmatpush1.msra.mxu0 0.0
  %1291 = vmatprep.subr.mxu0 0.0
  %1292 = vmatpush1.msra.mxu0 0.0
  %1293 = vmatprep.subr.mxu0 0.0
  %1294 = vmatpush1.msra.mxu0 0.0
  %1295 = vmatprep.subr.mxu0 0.0
  %1296 = vmatpush1.msra.mxu0 0.0
  %1297 = vmatprep.subr.mxu0 0.0
  %1298 = vmatpush1.msra.mxu0 0.0
  %1299 = vmatprep.subr.mxu0 0.0
  %1300 = vmatpush1.msra.mxu0 0.0
  %1301 = vmatprep.subr.mxu0 0.0
  %1302 = vmatpush1.msra.mxu0 0.0
  %1303 = vmatprep.subr.mxu0 0.0
  %1304 = vmatpush1.msra.mxu0 %v1268
  %1305 = vmatprep.subr.mxu0 0.0
  %1306 = vmatpush1.msra.mxu0 %v1267
  %1307 = vmatprep.subr.mxu0 0.0
  %1308 = vmatpush1.msra.mxu0 %v1266
  %1309 = vmatprep.subr.mxu0 0.0
  %1310 = vmatpush1.msra.mxu0 %v1265
  %1311 = vmatprep.subr.mxu0 0.0
  %1312 = vmatpush2.msra.mxu0 0.0
  %1313 = vmatprep.subr.mxu0 0.0
  %1314 = vmatpush2.msra.mxu0 0.0
  %1315 = vmatprep.subr.mxu0 0.0
  %1316 = vmatpush2.msra.mxu0 0.0
  %1317 = vmatprep.subr.mxu0 0.0
  %1318 = vmatpush2.msra.mxu0 0.0
  %1319 = vmatprep.subr.mxu0 0.0
  %1320 = vmatpush2.msra.mxu0 0.0
  %1321 = vmatprep.subr.mxu0 0.0
  %1322 = vmatpush2.msra.mxu0 0.0
  %1323 = vmatprep.subr.mxu0 0.0
  %1324 = vmatpush2.msra.mxu0 0.0
  %1325 = vmatprep.subr.mxu0 0.0
  %1326 = vmatpush2.msra.mxu0 0.0
  %1327 = vmatprep.subr.mxu0 0.0
  %1328 = vmatpush2.msra.mxu0 0.0
  %1329 = vmatprep.subr.mxu0 0.0
  %1330 = vmatpush2.msra.mxu0 0.0
  %1331 = vmatprep.subr.mxu0 0.0
  %1332 = vmatpush2.msra.mxu0 0.0
  %1333 = vmatprep.subr.mxu0 0.0
  %1334 = vmatpush2.msra.mxu0 0.0
  %1335 = vmatprep.subr.mxu0 0.0
  %1336 = vmatpush2.msra.mxu0 0.0
  %1337 = vmatprep.subr.mxu0 0.0
  %1338 = vmatpush2.msra.mxu0 0.0
  %1339 = vmatprep.subr.mxu0 0.0
  %1340 = vmatpush2.msra.mxu0 0.0
  %1341 = vmatprep.subr.mxu0 0.0
  %1342 = vmatpush2.msra.mxu0 0.0
  %1343 = vmatprep.mubr.f32.mxu0 0.0
  %1344 = vmatmul.mubr.f32.gmra.mxu0 %v1274
  %v1345 = vpop.f32.mrf.mxu0
  %v1346 = vadd.f32 %v1272, %v1345
  %v1347 = vpop.f32.mrf.mxu0
  %1348 = vmatprep.mubr.f32.mxu0 0.0
  %1349 = vmatmul.mubr.f32.gmra.mxu0 %v1277
  %v1350 = vpop.f32.mrf.mxu0
  %v1351 = vadd.f32 %v1272, %v1350
  %v1352 = vpop.f32.mrf.mxu0
  %1353 = vdwg.mxu0
  %v1354 = vadd.f32 %v1346, %v325
  %v1355 = vadd.f32 %v1351, %v326
  %v1356 = vsel %vm287, %v1354, 0.0
  %1357 = vadd.xlane.f32.xlu0 %v1356
  %v1358 = vpop.xlane.xlu0 %1357
  %v1359 = vsel %vm287, %v1355, 0.0
  %1360 = vadd.xlane.f32.xlu0 %v1359
  %v1361 = vpop.xlane.xlu0 %1360
  %v1362 = vmul.f32 %v1358, %v294
  %v1363 = vmul.f32 %v1361, %v294
  %v1364 = vsub.f32 %v1354, %v1362
  %v1365 = vsub.f32 %v1355, %v1363
  %v1366 = vmul.f32 %v1364, %v1364
  %v1367 = vmul.f32 %v1365, %v1365
  %v1368 = vsel %vm287, %v1366, 0.0
  %1369 = vadd.xlane.f32.xlu0 %v1368
  %v1370 = vpop.xlane.xlu0 %1369
  %v1371 = vsel %vm287, %v1367, 0.0
  %1372 = vadd.xlane.f32.xlu0 %v1371
  %v1373 = vpop.xlane.xlu0 %1372
  %v1374 = vmul.f32 %v1370, %v294
  %v1375 = vmul.f32 %v1373, %v294
  %v1376 = vadd.f32 %v1374, 1e-12
  %v1377 = vadd.f32 %v1375, 1e-12
  %v1378 = vrsqrt.pop %v1376
  %v1379 = vrsqrt.pop %v1377
  %v1380 = vmul.f32 %v1364, %v1378
  %v1381 = vmul.f32 %v1365, %v1379
  %v1382 = vlaneseq
  %v1383 = vshrl.u32 %v1382, 7
  %v1384 = vsub.s32 4, %v1383
  %v1385 = vrot.slane %v34, %v1384
  %v1386 = vmul.f32 %v1380, %v1385
  %v1387 = vmul.f32 %v1381, %v1385
  %v1388 = vlaneseq
  %v1389 = vshrl.u32 %v1388, 7
  %v1390 = vsub.s32 5, %v1389
  %v1391 = vrot.slane %v34, %v1390
  %v1392 = vadd.f32 %v1386, %v1391
  %v1393 = vadd.f32 %v1387, %v1391
  %v1394 = vld [vmem:[%s5] sm:$0xff]
  %v1395 = vld [vmem:[%s5 + $0x8] sm:$0xff]
  %v1396 = vld [vmem:[%s5 + $0x10] sm:$0xff]
  %v1397 = vld [vmem:[%s5 + $0x18] sm:$0xff]
  %v1398 = vlaneseq
  %v1399 = vshrl.u32 %v1398, 7
  %v1400 = vsub.s32 6, %v1399
  %v1401 = vrot.slane %v34, %v1400
  %v1403 = vsel %vm287, %v1392, 0
  %v1406 = vsel %vm287, %v1393, 0
  %1408 = vmatprep.subr.mxu0 0.0
  %1409 = vmatpush1.msra.mxu0 0.0
  %1410 = vmatprep.subr.mxu0 0.0
  %1411 = vmatpush1.msra.mxu0 0.0
  %1412 = vmatprep.subr.mxu0 0.0
  %1413 = vmatpush1.msra.mxu0 0.0
  %1414 = vmatprep.subr.mxu0 0.0
  %1415 = vmatpush1.msra.mxu0 0.0
  %1416 = vmatprep.subr.mxu0 0.0
  %1417 = vmatpush1.msra.mxu0 0.0
  %1418 = vmatprep.subr.mxu0 0.0
  %1419 = vmatpush1.msra.mxu0 0.0
  %1420 = vmatprep.subr.mxu0 0.0
  %1421 = vmatpush1.msra.mxu0 0.0
  %1422 = vmatprep.subr.mxu0 0.0
  %1423 = vmatpush1.msra.mxu0 0.0
  %1424 = vmatprep.subr.mxu0 0.0
  %1425 = vmatpush1.msra.mxu0 0.0
  %1426 = vmatprep.subr.mxu0 0.0
  %1427 = vmatpush1.msra.mxu0 0.0
  %1428 = vmatprep.subr.mxu0 0.0
  %1429 = vmatpush1.msra.mxu0 0.0
  %1430 = vmatprep.subr.mxu0 0.0
  %1431 = vmatpush1.msra.mxu0 0.0
  %1432 = vmatprep.subr.mxu0 0.0
  %1433 = vmatpush1.msra.mxu0 %v1397
  %1434 = vmatprep.subr.mxu0 0.0
  %1435 = vmatpush1.msra.mxu0 %v1396
  %1436 = vmatprep.subr.mxu0 0.0
  %1437 = vmatpush1.msra.mxu0 %v1395
  %1438 = vmatprep.subr.mxu0 0.0
  %1439 = vmatpush1.msra.mxu0 %v1394
  %1440 = vmatprep.subr.mxu0 0.0
  %1441 = vmatpush2.msra.mxu0 0.0
  %1442 = vmatprep.subr.mxu0 0.0
  %1443 = vmatpush2.msra.mxu0 0.0
  %1444 = vmatprep.subr.mxu0 0.0
  %1445 = vmatpush2.msra.mxu0 0.0
  %1446 = vmatprep.subr.mxu0 0.0
  %1447 = vmatpush2.msra.mxu0 0.0
  %1448 = vmatprep.subr.mxu0 0.0
  %1449 = vmatpush2.msra.mxu0 0.0
  %1450 = vmatprep.subr.mxu0 0.0
  %1451 = vmatpush2.msra.mxu0 0.0
  %1452 = vmatprep.subr.mxu0 0.0
  %1453 = vmatpush2.msra.mxu0 0.0
  %1454 = vmatprep.subr.mxu0 0.0
  %1455 = vmatpush2.msra.mxu0 0.0
  %1456 = vmatprep.subr.mxu0 0.0
  %1457 = vmatpush2.msra.mxu0 0.0
  %1458 = vmatprep.subr.mxu0 0.0
  %1459 = vmatpush2.msra.mxu0 0.0
  %1460 = vmatprep.subr.mxu0 0.0
  %1461 = vmatpush2.msra.mxu0 0.0
  %1462 = vmatprep.subr.mxu0 0.0
  %1463 = vmatpush2.msra.mxu0 0.0
  %1464 = vmatprep.subr.mxu0 0.0
  %1465 = vmatpush2.msra.mxu0 0.0
  %1466 = vmatprep.subr.mxu0 0.0
  %1467 = vmatpush2.msra.mxu0 0.0
  %1468 = vmatprep.subr.mxu0 0.0
  %1469 = vmatpush2.msra.mxu0 0.0
  %1470 = vmatprep.subr.mxu0 0.0
  %1471 = vmatpush2.msra.mxu0 0.0
  %1472 = vmatprep.mubr.f32.mxu0 0.0
  %1473 = vmatmul.mubr.f32.gmra.mxu0 %v1403
  %v1474 = vpop.f32.mrf.mxu0
  %v1475 = vadd.f32 %v1401, %v1474
  %v1476 = vpop.f32.mrf.mxu0
  %1477 = vmatprep.mubr.f32.mxu0 0.0
  %1478 = vmatmul.mubr.f32.gmra.mxu0 %v1406
  %v1479 = vpop.f32.mrf.mxu0
  %v1480 = vadd.f32 %v1401, %v1479
  %v1481 = vpop.f32.mrf.mxu0
  %1482 = vdwg.mxu0
  %v1483 = vmul.f32 %v1475, 0.5
  %v1484 = vmul.f32 %v1480, 0.5
  %v1485 = vmul.f32 %v1475, 0.044715
  %v1486 = vmul.f32 %v1480, 0.044715
  %v1487 = vmul.f32 %v1485, %v1475
  %v1488 = vmul.f32 %v1486, %v1480
  %v1489 = vmul.f32 %v1487, %v1475
  %v1490 = vmul.f32 %v1488, %v1480
  %v1491 = vadd.f32 %v1475, %v1489
  %v1492 = vadd.f32 %v1480, %v1490
  %v1493 = vmul.f32 %v1491, 0.7978846
  %v1494 = vmul.f32 %v1492, 0.7978846
  %v1495 = vtanh.pop %v1493
  %v1496 = vtanh.pop %v1494
  %v1497 = vadd.f32 %v1495, 1.0
  %v1498 = vadd.f32 %v1496, 1.0
  %v1499 = vmul.f32 %v1483, %v1497
  %v1500 = vmul.f32 %v1484, %v1498
  %v1501 = vld [vmem:[%s6] sm:$0xff]
  %v1502 = vld [vmem:[%s6 + $0x8] sm:$0xff]
  %v1503 = vld [vmem:[%s6 + $0x10] sm:$0xff]
  %v1504 = vld [vmem:[%s6 + $0x18] sm:$0xff]
  %v1505 = vld [vmem:[%s6 + $0x20] sm:$0xff]
  %v1506 = vld [vmem:[%s6 + $0x28] sm:$0xff]
  %v1507 = vld [vmem:[%s6 + $0x30] sm:$0xff]
  %v1508 = vld [vmem:[%s6 + $0x38] sm:$0xff]
  %v1509 = vlaneseq
  %v1510 = vshrl.u32 %v1509, 7
  %v1511 = vsub.s32 7, %v1510
  %v1512 = vrot.slane %v34, %v1511
  %vm1513 = vcmask 523264
  %v1515 = vsel %vm1513, %v1499, 0
  %v1518 = vsel %vm1513, %v1500, 0
  %1520 = vmatprep.subr.mxu0 0.0
  %1521 = vmatpush1.msra.mxu0 0.0
  %1522 = vmatprep.subr.mxu0 0.0
  %1523 = vmatpush1.msra.mxu0 0.0
  %1524 = vmatprep.subr.mxu0 0.0
  %1525 = vmatpush1.msra.mxu0 0.0
  %1526 = vmatprep.subr.mxu0 0.0
  %1527 = vmatpush1.msra.mxu0 0.0
  %1528 = vmatprep.subr.mxu0 0.0
  %1529 = vmatpush1.msra.mxu0 0.0
  %1530 = vmatprep.subr.mxu0 0.0
  %1531 = vmatpush1.msra.mxu0 0.0
  %1532 = vmatprep.subr.mxu0 0.0
  %1533 = vmatpush1.msra.mxu0 0.0
  %1534 = vmatprep.subr.mxu0 0.0
  %1535 = vmatpush1.msra.mxu0 0.0
  %1536 = vmatprep.subr.mxu0 0.0
  %1537 = vmatpush1.msra.mxu0 %v1508
  %1538 = vmatprep.subr.mxu0 0.0
  %1539 = vmatpush1.msra.mxu0 %v1507
  %1540 = vmatprep.subr.mxu0 0.0
  %1541 = vmatpush1.msra.mxu0 %v1506
  %1542 = vmatprep.subr.mxu0 0.0
  %1543 = vmatpush1.msra.mxu0 %v1505
  %1544 = vmatprep.subr.mxu0 0.0
  %1545 = vmatpush1.msra.mxu0 %v1504
  %1546 = vmatprep.subr.mxu0 0.0
  %1547 = vmatpush1.msra.mxu0 %v1503
  %1548 = vmatprep.subr.mxu0 0.0
  %1549 = vmatpush1.msra.mxu0 %v1502
  %1550 = vmatprep.subr.mxu0 0.0
  %1551 = vmatpush1.msra.mxu0 %v1501
  %1552 = vmatprep.subr.mxu0 0.0
  %1553 = vmatpush2.msra.mxu0 0.0
  %1554 = vmatprep.subr.mxu0 0.0
  %1555 = vmatpush2.msra.mxu0 0.0
  %1556 = vmatprep.subr.mxu0 0.0
  %1557 = vmatpush2.msra.mxu0 0.0
  %1558 = vmatprep.subr.mxu0 0.0
  %1559 = vmatpush2.msra.mxu0 0.0
  %1560 = vmatprep.subr.mxu0 0.0
  %1561 = vmatpush2.msra.mxu0 0.0
  %1562 = vmatprep.subr.mxu0 0.0
  %1563 = vmatpush2.msra.mxu0 0.0
  %1564 = vmatprep.subr.mxu0 0.0
  %1565 = vmatpush2.msra.mxu0 0.0
  %1566 = vmatprep.subr.mxu0 0.0
  %1567 = vmatpush2.msra.mxu0 0.0
  %1568 = vmatprep.subr.mxu0 0.0
  %1569 = vmatpush2.msra.mxu0 0.0
  %1570 = vmatprep.subr.mxu0 0.0
  %1571 = vmatpush2.msra.mxu0 0.0
  %1572 = vmatprep.subr.mxu0 0.0
  %1573 = vmatpush2.msra.mxu0 0.0
  %1574 = vmatprep.subr.mxu0 0.0
  %1575 = vmatpush2.msra.mxu0 0.0
  %1576 = vmatprep.subr.mxu0 0.0
  %1577 = vmatpush2.msra.mxu0 0.0
  %1578 = vmatprep.subr.mxu0 0.0
  %1579 = vmatpush2.msra.mxu0 0.0
  %1580 = vmatprep.subr.mxu0 0.0
  %1581 = vmatpush2.msra.mxu0 0.0
  %1582 = vmatprep.subr.mxu0 0.0
  %1583 = vmatpush2.msra.mxu0 0.0
  %1584 = vmatprep.mubr.f32.mxu0 0.0
  %1585 = vmatmul.mubr.f32.gmra.mxu0 %v1515
  %v1586 = vpop.f32.mrf.mxu0
  %v1587 = vadd.f32 %v1512, %v1586
  %v1588 = vpop.f32.mrf.mxu0
  %1589 = vmatprep.mubr.f32.mxu0 0.0
  %1590 = vmatmul.mubr.f32.gmra.mxu0 %v1518
  %v1591 = vpop.f32.mrf.mxu0
  %v1592 = vadd.f32 %v1512, %v1591
  %v1593 = vpop.f32.mrf.mxu0
  %1594 = vdwg.mxu0
  %v1595 = vadd.f32 %v1587, %v1392
  %v1596 = vadd.f32 %v1592, %v1393
  %v1597 = vsel %vm287, %v1595, 0.0
  %1598 = vadd.xlane.f32.xlu0 %v1597
  %v1599 = vpop.xlane.xlu0 %1598
  %v1600 = vsel %vm287, %v1596, 0.0
  %1601 = vadd.xlane.f32.xlu0 %v1600
  %v1602 = vpop.xlane.xlu0 %1601
  %v1603 = vmul.f32 %v1599, %v294
  %v1604 = vmul.f32 %v1602, %v294
  %v1605 = vsub.f32 %v1595, %v1603
  %v1606 = vsub.f32 %v1596, %v1604
  %v1607 = vmul.f32 %v1605, %v1605
  %v1608 = vmul.f32 %v1606, %v1606
  %v1609 = vsel %vm287, %v1607, 0.0
  %1610 = vadd.xlane.f32.xlu0 %v1609
  %v1611 = vpop.xlane.xlu0 %1610
  %v1612 = vsel %vm287, %v1608, 0.0
  %1613 = vadd.xlane.f32.xlu0 %v1612
  %v1614 = vpop.xlane.xlu0 %1613
  %v1615 = vmul.f32 %v1611, %v294
  %v1616 = vmul.f32 %v1614, %v294
  %v1617 = vadd.f32 %v1615, 1e-12
  %v1618 = vadd.f32 %v1616, 1e-12
  %v1619 = vrsqrt.pop %v1617
  %v1620 = vrsqrt.pop %v1618
  %v1621 = vmul.f32 %v1605, %v1619
  %v1622 = vmul.f32 %v1606, %v1620
  %v1623 = vlaneseq
  %v1624 = vshrl.u32 %v1623, 7
  %v1625 = vsub.s32 0, %v1624
  %v1626 = vrot.slane %v35, %v1625
  %v1627 = vmul.f32 %v1621, %v1626
  %v1628 = vmul.f32 %v1622, %v1626
  %v1629 = vlaneseq
  %v1630 = vshrl.u32 %v1629, 7
  %v1631 = vsub.s32 1, %v1630
  %v1632 = vrot.slane %v35, %v1631
  %v1633 = vadd.f32 %v1627, %v1632
  %v1634 = vadd.f32 %v1628, %v1632
  %v1635 = vld [vmem:[%s3 + $0x20] sm:$0xff]
  %v1636 = vld [vmem:[%s3 + $0x28] sm:$0xff]
  %v1637 = vld [vmem:[%s3 + $0x30] sm:$0xff]
  %v1638 = vld [vmem:[%s3 + $0x38] sm:$0xff]
  %v1639 = vlaneseq
  %v1640 = vshrl.u32 %v1639, 7
  %v1641 = vsub.s32 2, %v1640
  %v1642 = vrot.slane %v35, %v1641
  %v1644 = vsel %vm287, %v1633, 0
  %v1647 = vsel %vm287, %v1634, 0
  %1649 = vmatprep.subr.mxu0 0.0
  %1650 = vmatpush1.msra.mxu0 0.0
  %1651 = vmatprep.subr.mxu0 0.0
  %1652 = vmatpush1.msra.mxu0 0.0
  %1653 = vmatprep.subr.mxu0 0.0
  %1654 = vmatpush1.msra.mxu0 0.0
  %1655 = vmatprep.subr.mxu0 0.0
  %1656 = vmatpush1.msra.mxu0 0.0
  %1657 = vmatprep.subr.mxu0 0.0
  %1658 = vmatpush1.msra.mxu0 0.0
  %1659 = vmatprep.subr.mxu0 0.0
  %1660 = vmatpush1.msra.mxu0 0.0
  %1661 = vmatprep.subr.mxu0 0.0
  %1662 = vmatpush1.msra.mxu0 0.0
  %1663 = vmatprep.subr.mxu0 0.0
  %1664 = vmatpush1.msra.mxu0 0.0
  %1665 = vmatprep.subr.mxu0 0.0
  %1666 = vmatpush1.msra.mxu0 0.0
  %1667 = vmatprep.subr.mxu0 0.0
  %1668 = vmatpush1.msra.mxu0 0.0
  %1669 = vmatprep.subr.mxu0 0.0
  %1670 = vmatpush1.msra.mxu0 0.0
  %1671 = vmatprep.subr.mxu0 0.0
  %1672 = vmatpush1.msra.mxu0 0.0
  %1673 = vmatprep.subr.mxu0 0.0
  %1674 = vmatpush1.msra.mxu0 %v1638
  %1675 = vmatprep.subr.mxu0 0.0
  %1676 = vmatpush1.msra.mxu0 %v1637
  %1677 = vmatprep.subr.mxu0 0.0
  %1678 = vmatpush1.msra.mxu0 %v1636
  %1679 = vmatprep.subr.mxu0 0.0
  %1680 = vmatpush1.msra.mxu0 %v1635
  %1681 = vmatprep.subr.mxu0 0.0
  %1682 = vmatpush2.msra.mxu0 0.0
  %1683 = vmatprep.subr.mxu0 0.0
  %1684 = vmatpush2.msra.mxu0 0.0
  %1685 = vmatprep.subr.mxu0 0.0
  %1686 = vmatpush2.msra.mxu0 0.0
  %1687 = vmatprep.subr.mxu0 0.0
  %1688 = vmatpush2.msra.mxu0 0.0
  %1689 = vmatprep.subr.mxu0 0.0
  %1690 = vmatpush2.msra.mxu0 0.0
  %1691 = vmatprep.subr.mxu0 0.0
  %1692 = vmatpush2.msra.mxu0 0.0
  %1693 = vmatprep.subr.mxu0 0.0
  %1694 = vmatpush2.msra.mxu0 0.0
  %1695 = vmatprep.subr.mxu0 0.0
  %1696 = vmatpush2.msra.mxu0 0.0
  %1697 = vmatprep.subr.mxu0 0.0
  %1698 = vmatpush2.msra.mxu0 0.0
  %1699 = vmatprep.subr.mxu0 0.0
  %1700 = vmatpush2.msra.mxu0 0.0
  %1701 = vmatprep.subr.mxu0 0.0
  %1702 = vmatpush2.msra.mxu0 0.0
  %1703 = vmatprep.subr.mxu0 0.0
  %1704 = vmatpush2.msra.mxu0 0.0
  %1705 = vmatprep.subr.mxu0 0.0
  %1706 = vmatpush2.msra.mxu0 0.0
  %1707 = vmatprep.subr.mxu0 0.0
  %1708 = vmatpush2.msra.mxu0 0.0
  %1709 = vmatprep.subr.mxu0 0.0
  %1710 = vmatpush2.msra.mxu0 0.0
  %1711 = vmatprep.subr.mxu0 0.0
  %1712 = vmatpush2.msra.mxu0 0.0
  %1713 = vmatprep.mubr.f32.mxu0 0.0
  %1714 = vmatmul.mubr.f32.gmra.mxu0 %v1644
  %v1715 = vpop.f32.mrf.mxu0
  %v1716 = vadd.f32 %v1642, %v1715
  %v1717 = vpop.f32.mrf.mxu0
  %1718 = vmatprep.mubr.f32.mxu0 0.0
  %1719 = vmatmul.mubr.f32.gmra.mxu0 %v1647
  %v1720 = vpop.f32.mrf.mxu0
  %v1721 = vadd.f32 %v1642, %v1720
  %v1722 = vpop.f32.mrf.mxu0
  %1723 = vdwg.mxu0
  %1726 = vrot.lane.b32.xlu0 %v1716, 96
  %v1727 = vpop.permute.xlu0 %1726
  %1728 = vrot.lane.b32.xlu0 %v1721, 96
  %v1729 = vpop.permute.xlu0 %1728
  %v1730 = vsel %vm457, %v1716, 0
  %v1732 = vsel %vm457, %v1721, 0
  %v1734 = vsel %vm457, %v1727, 0
  %v1736 = vsel %vm457, %v1729, 0
  %1738 = vmatprep.subr.mxu0 0.0
  %1739 = vmatpush1.xpose.msra.mxu0 0.0
  %1740 = vmatprep.subr.mxu0 0.0
  %1741 = vmatpush1.xpose.msra.mxu0 0.0
  %1742 = vmatprep.subr.mxu0 0.0
  %1743 = vmatpush1.xpose.msra.mxu0 0.0
  %1744 = vmatprep.subr.mxu0 0.0
  %1745 = vmatpush1.xpose.msra.mxu0 0.0
  %1746 = vmatprep.subr.mxu0 0.0
  %1747 = vmatpush1.xpose.msra.mxu0 0.0
  %1748 = vmatprep.subr.mxu0 0.0
  %1749 = vmatpush1.xpose.msra.mxu0 0.0
  %1750 = vmatprep.subr.mxu0 0.0
  %1751 = vmatpush1.xpose.msra.mxu0 0.0
  %1752 = vmatprep.subr.mxu0 0.0
  %1753 = vmatpush1.xpose.msra.mxu0 0.0
  %1754 = vmatprep.subr.mxu0 0.0
  %1755 = vmatpush1.xpose.msra.mxu0 0.0
  %1756 = vmatprep.subr.mxu0 0.0
  %1757 = vmatpush1.xpose.msra.mxu0 0.0
  %1758 = vmatprep.subr.mxu0 0.0
  %1759 = vmatpush1.xpose.msra.mxu0 0.0
  %1760 = vmatprep.subr.mxu0 0.0
  %1761 = vmatpush1.xpose.msra.mxu0 0.0
  %1762 = vmatprep.subr.mxu0 0.0
  %1763 = vmatpush1.xpose.msra.mxu0 0.0
  %1764 = vmatprep.subr.mxu0 0.0
  %1765 = vmatpush1.xpose.msra.mxu0 0.0
  %1766 = vmatprep.subr.mxu0 0.0
  %1767 = vmatpush1.xpose.msra.mxu0 %v1736
  %1768 = vmatprep.subr.mxu0 0.0
  %1769 = vmatpush1.xpose.msra.mxu0 %v1734
  %1770 = vmatprep.subr.mxu0 0.0
  %1771 = vmatpush2.xpose.msra.mxu0 0.0
  %1772 = vmatprep.subr.mxu0 0.0
  %1773 = vmatpush2.xpose.msra.mxu0 0.0
  %1774 = vmatprep.subr.mxu0 0.0
  %1775 = vmatpush2.xpose.msra.mxu0 0.0
  %1776 = vmatprep.subr.mxu0 0.0
  %1777 = vmatpush2.xpose.msra.mxu0 0.0
  %1778 = vmatprep.subr.mxu0 0.0
  %1779 = vmatpush2.xpose.msra.mxu0 0.0
  %1780 = vmatprep.subr.mxu0 0.0
  %1781 = vmatpush2.xpose.msra.mxu0 0.0
  %1782 = vmatprep.subr.mxu0 0.0
  %1783 = vmatpush2.xpose.msra.mxu0 0.0
  %1784 = vmatprep.subr.mxu0 0.0
  %1785 = vmatpush2.xpose.msra.mxu0 0.0
  %1786 = vmatprep.subr.mxu0 0.0
  %1787 = vmatpush2.xpose.msra.mxu0 0.0
  %1788 = vmatprep.subr.mxu0 0.0
  %1789 = vmatpush2.xpose.msra.mxu0 0.0
  %1790 = vmatprep.subr.mxu0 0.0
  %1791 = vmatpush2.xpose.msra.mxu0 0.0
  %1792 = vmatprep.subr.mxu0 0.0
  %1793 = vmatpush2.xpose.msra.mxu0 0.0
  %1794 = vmatprep.subr.mxu0 0.0
  %1795 = vmatpush2.xpose.msra.mxu0 0.0
  %1796 = vmatprep.subr.mxu0 0.0
  %1797 = vmatpush2.xpose.msra.mxu0 0.0
  %1798 = vmatprep.subr.mxu0 0.0
  %1799 = vmatpush2.xpose.msra.mxu0 0.0
  %1800 = vmatprep.subr.mxu0 0.0
  %1801 = vmatpush2.xpose.msra.mxu0 0.0
  %1802 = vmatprep.mubr.f32.mxu0 0.0
  %1803 = vmatmul.mubr.f32.gmra.mxu0 %v1730
  %v1804 = vpop.f32.mrf.mxu0
  %v1805 = vadd.f32 0.0, %v1804
  %v1806 = vpop.f32.mrf.mxu0
  %1807 = vmatprep.mubr.f32.mxu0 0.0
  %1808 = vmatmul.mubr.f32.gmra.mxu0 %v1732
  %v1809 = vpop.f32.mrf.mxu0
  %v1810 = vadd.f32 0.0, %v1809
  %v1811 = vpop.f32.mrf.mxu0
  %1812 = vdwg.mxu0
  %v1813 = vmul.f32 %v1805, 0.35355338
  %v1814 = vmul.f32 %v1810, 0.35355338
  %v1815 = vadd.f32 %v1813, %v360
  %v1816 = vadd.f32 %v1814, %v361
  %v1817 = vmul.f32 %v1815, 1.442695
  %v1818 = vpow.pop %v1817
  %v1819 = vmul.f32 %v1816, 1.442695
  %v1820 = vpow.pop %v1819
  %v1821 = vsel %vm105, %v1818, 0.0
  %1822 = vadd.xlane.f32.xlu0 %v1821
  %v1823 = vpop.xlane.xlu0 %1822
  %v1824 = vsel %vm105, %v1820, 0.0
  %1825 = vadd.xlane.f32.xlu0 %v1824
  %v1826 = vpop.xlane.xlu0 %1825
  %v1827 = vrcp.pop %v1823
  %v1828 = vrcp.pop %v1826
  %v1829 = vmul.f32 %v1818, %v1827
  %v1830 = vmul.f32 %v1820, %v1828
  %1831 = vrot.lane.b32.xlu0 %v1716, 64
  %v1832 = vpop.permute.xlu0 %1831
  %1833 = vrot.lane.b32.xlu0 %v1721, 64
  %v1834 = vpop.permute.xlu0 %1833
  %v1838 = vsel %vm105, %v1829, 0
  %v1841 = vsel %vm105, %v1830, 0
  %1843 = vmatprep.subr.mxu0 0.0
  %1844 = vmatpush1.msra.mxu0 0.0
  %1845 = vmatprep.subr.mxu0 0.0
  %1846 = vmatpush1.msra.mxu0 0.0
  %1847 = vmatprep.subr.mxu0 0.0
  %1848 = vmatpush1.msra.mxu0 0.0
  %1849 = vmatprep.subr.mxu0 0.0
  %1850 = vmatpush1.msra.mxu0 0.0
  %1851 = vmatprep.subr.mxu0 0.0
  %1852 = vmatpush1.msra.mxu0 0.0
  %1853 = vmatprep.subr.mxu0 0.0
  %1854 = vmatpush1.msra.mxu0 0.0
  %1855 = vmatprep.subr.mxu0 0.0
  %1856 = vmatpush1.msra.mxu0 0.0
  %1857 = vmatprep.subr.mxu0 0.0
  %1858 = vmatpush1.msra.mxu0 0.0
  %1859 = vmatprep.subr.mxu0 0.0
  %1860 = vmatpush1.msra.mxu0 0.0
  %1861 = vmatprep.subr.mxu0 0.0
  %1862 = vmatpush1.msra.mxu0 0.0
  %1863 = vmatprep.subr.mxu0 0.0
  %1864 = vmatpush1.msra.mxu0 0.0
  %1865 = vmatprep.subr.mxu0 0.0
  %1866 = vmatpush1.msra.mxu0 0.0
  %1867 = vmatprep.subr.mxu0 0.0
  %1868 = vmatpush1.msra.mxu0 0.0
  %1869 = vmatprep.subr.mxu0 0.0
  %1870 = vmatpush1.msra.mxu0 0.0
  %1871 = vmatprep.subr.mxu0 0.0
  %1872 = vmatpush1.msra.mxu0 %v1834
  %1873 = vmatprep.subr.mxu0 0.0
  %1874 = vmatpush1.msra.mxu0 %v1832
  %1875 = vmatprep.subr.mxu0 0.0
  %1876 = vmatpush2.msra.mxu0 0.0
  %1877 = vmatprep.subr.mxu0 0.0
  %1878 = vmatpush2.msra.mxu0 0.0
  %1879 = vmatprep.subr.mxu0 0.0
  %1880 = vmatpush2.msra.mxu0 0.0
  %1881 = vmatprep.subr.mxu0 0.0
  %1882 = vmatpush2.msra.mxu0 0.0
  %1883 = vmatprep.subr.mxu0 0.0
  %1884 = vmatpush2.msra.mxu0 0.0
  %1885 = vmatprep.subr.mxu0 0.0
  %1886 = vmatpush2.msra.mxu0 0.0
  %1887 = vmatprep.subr.mxu0 0.0
  %1888 = vmatpush2.msra.mxu0 0.0
  %1889 = vmatprep.subr.mxu0 0.0
  %1890 = vmatpush2.msra.mxu0 0.0
  %1891 = vmatprep.subr.mxu0 0.0
  %1892 = vmatpush2.msra.mxu0 0.0
  %1893 = vmatprep.subr.mxu0 0.0
  %1894 = vmatpush2.msra.mxu0 0.0
  %1895 = vmatprep.subr.mxu0 0.0
  %1896 = vmatpush2.msra.mxu0 0.0
  %1897 = vmatprep.subr.mxu0 0.0
  %1898 = vmatpush2.msra.mxu0 0.0
  %1899 = vmatprep.subr.mxu0 0.0
  %1900 = vmatpush2.msra.mxu0 0.0
  %1901 = vmatprep.subr.mxu0 0.0
  %1902 = vmatpush2.msra.mxu0 0.0
  %1903 = vmatprep.subr.mxu0 0.0
  %1904 = vmatpush2.msra.mxu0 0.0
  %1905 = vmatprep.subr.mxu0 0.0
  %1906 = vmatpush2.msra.mxu0 0.0
  %1907 = vmatprep.mubr.f32.mxu0 0.0
  %1908 = vmatmul.mubr.f32.gmra.mxu0 %v1838
  %v1909 = vpop.f32.mrf.mxu0
  %v1910 = vadd.f32 0.0, %v1909
  %v1911 = vpop.f32.mrf.mxu0
  %1912 = vmatprep.mubr.f32.mxu0 0.0
  %1913 = vmatmul.mubr.f32.gmra.mxu0 %v1841
  %v1914 = vpop.f32.mrf.mxu0
  %v1915 = vadd.f32 0.0, %v1914
  %v1916 = vpop.f32.mrf.mxu0
  %1917 = vdwg.mxu0
  %1918 = vrot.lane.b32.xlu0 %v1716, 120
  %v1919 = vpop.permute.xlu0 %1918
  %1920 = vrot.lane.b32.xlu0 %v1721, 120
  %v1921 = vpop.permute.xlu0 %1920
  %1922 = vrot.lane.b32.xlu0 %v1716, 88
  %v1923 = vpop.permute.xlu0 %1922
  %1924 = vrot.lane.b32.xlu0 %v1721, 88
  %v1925 = vpop.permute.xlu0 %1924
  %v1926 = vsel %vm457, %v1919, 0
  %v1928 = vsel %vm457, %v1921, 0
  %v1930 = vsel %vm457, %v1923, 0
  %v1932 = vsel %vm457, %v1925, 0
  %1934 = vmatprep.subr.mxu0 0.0
  %1935 = vmatpush1.xpose.msra.mxu0 0.0
  %1936 = vmatprep.subr.mxu0 0.0
  %1937 = vmatpush1.xpose.msra.mxu0 0.0
  %1938 = vmatprep.subr.mxu0 0.0
  %1939 = vmatpush1.xpose.msra.mxu0 0.0
  %1940 = vmatprep.subr.mxu0 0.0
  %1941 = vmatpush1.xpose.msra.mxu0 0.0
  %1942 = vmatprep.subr.mxu0 0.0
  %1943 = vmatpush1.xpose.msra.mxu0 0.0
  %1944 = vmatprep.subr.mxu0 0.0
  %1945 = vmatpush1.xpose.msra.mxu0 0.0
  %1946 = vmatprep.subr.mxu0 0.0
  %1947 = vmatpush1.xpose.msra.mxu0 0.0
  %1948 = vmatprep.subr.mxu0 0.0
  %1949 = vmatpush1.xpose.msra.mxu0 0.0
  %1950 = vmatprep.subr.mxu0 0.0
  %1951 = vmatpush1.xpose.msra.mxu0 0.0
  %1952 = vmatprep.subr.mxu0 0.0
  %1953 = vmatpush1.xpose.msra.mxu0 0.0
  %1954 = vmatprep.subr.mxu0 0.0
  %1955 = vmatpush1.xpose.msra.mxu0 0.0
  %1956 = vmatprep.subr.mxu0 0.0
  %1957 = vmatpush1.xpose.msra.mxu0 0.0
  %1958 = vmatprep.subr.mxu0 0.0
  %1959 = vmatpush1.xpose.msra.mxu0 0.0
  %1960 = vmatprep.subr.mxu0 0.0
  %1961 = vmatpush1.xpose.msra.mxu0 0.0
  %1962 = vmatprep.subr.mxu0 0.0
  %1963 = vmatpush1.xpose.msra.mxu0 %v1932
  %1964 = vmatprep.subr.mxu0 0.0
  %1965 = vmatpush1.xpose.msra.mxu0 %v1930
  %1966 = vmatprep.subr.mxu0 0.0
  %1967 = vmatpush2.xpose.msra.mxu0 0.0
  %1968 = vmatprep.subr.mxu0 0.0
  %1969 = vmatpush2.xpose.msra.mxu0 0.0
  %1970 = vmatprep.subr.mxu0 0.0
  %1971 = vmatpush2.xpose.msra.mxu0 0.0
  %1972 = vmatprep.subr.mxu0 0.0
  %1973 = vmatpush2.xpose.msra.mxu0 0.0
  %1974 = vmatprep.subr.mxu0 0.0
  %1975 = vmatpush2.xpose.msra.mxu0 0.0
  %1976 = vmatprep.subr.mxu0 0.0
  %1977 = vmatpush2.xpose.msra.mxu0 0.0
  %1978 = vmatprep.subr.mxu0 0.0
  %1979 = vmatpush2.xpose.msra.mxu0 0.0
  %1980 = vmatprep.subr.mxu0 0.0
  %1981 = vmatpush2.xpose.msra.mxu0 0.0
  %1982 = vmatprep.subr.mxu0 0.0
  %1983 = vmatpush2.xpose.msra.mxu0 0.0
  %1984 = vmatprep.subr.mxu0 0.0
  %1985 = vmatpush2.xpose.msra.mxu0 0.0
  %1986 = vmatprep.subr.mxu0 0.0
  %1987 = vmatpush2.xpose.msra.mxu0 0.0
  %1988 = vmatprep.subr.mxu0 0.0
  %1989 = vmatpush2.xpose.msra.mxu0 0.0
  %1990 = vmatprep.subr.mxu0 0.0
  %1991 = vmatpush2.xpose.msra.mxu0 0.0
  %1992 = vmatprep.subr.mxu0 0.0
  %1993 = vmatpush2.xpose.msra.mxu0 0.0
  %1994 = vmatprep.subr.mxu0 0.0
  %1995 = vmatpush2.xpose.msra.mxu0 0.0
  %1996 = vmatprep.subr.mxu0 0.0
  %1997 = vmatpush2.xpose.msra.mxu0 0.0
  %1998 = vmatprep.mubr.f32.mxu0 0.0
  %1999 = vmatmul.mubr.f32.gmra.mxu0 %v1926
  %v2000 = vpop.f32.mrf.mxu0
  %v2001 = vadd.f32 0.0, %v2000
  %v2002 = vpop.f32.mrf.mxu0
  %2003 = vmatprep.mubr.f32.mxu0 0.0
  %2004 = vmatmul.mubr.f32.gmra.mxu0 %v1928
  %v2005 = vpop.f32.mrf.mxu0
  %v2006 = vadd.f32 0.0, %v2005
  %v2007 = vpop.f32.mrf.mxu0
  %2008 = vdwg.mxu0
  %v2009 = vmul.f32 %v2001, 0.35355338
  %v2010 = vmul.f32 %v2006, 0.35355338
  %v2011 = vadd.f32 %v2009, %v360
  %v2012 = vadd.f32 %v2010, %v361
  %v2013 = vmul.f32 %v2011, 1.442695
  %v2014 = vpow.pop %v2013
  %v2015 = vmul.f32 %v2012, 1.442695
  %v2016 = vpow.pop %v2015
  %v2017 = vsel %vm105, %v2014, 0.0
  %2018 = vadd.xlane.f32.xlu0 %v2017
  %v2019 = vpop.xlane.xlu0 %2018
  %v2020 = vsel %vm105, %v2016, 0.0
  %2021 = vadd.xlane.f32.xlu0 %v2020
  %v2022 = vpop.xlane.xlu0 %2021
  %v2023 = vrcp.pop %v2019
  %v2024 = vrcp.pop %v2022
  %v2025 = vmul.f32 %v2014, %v2023
  %v2026 = vmul.f32 %v2016, %v2024
  %2027 = vrot.lane.b32.xlu0 %v1716, 56
  %v2028 = vpop.permute.xlu0 %2027
  %2029 = vrot.lane.b32.xlu0 %v1721, 56
  %v2030 = vpop.permute.xlu0 %2029
  %v2034 = vsel %vm105, %v2025, 0
  %v2037 = vsel %vm105, %v2026, 0
  %2039 = vmatprep.subr.mxu0 0.0
  %2040 = vmatpush1.msra.mxu0 0.0
  %2041 = vmatprep.subr.mxu0 0.0
  %2042 = vmatpush1.msra.mxu0 0.0
  %2043 = vmatprep.subr.mxu0 0.0
  %2044 = vmatpush1.msra.mxu0 0.0
  %2045 = vmatprep.subr.mxu0 0.0
  %2046 = vmatpush1.msra.mxu0 0.0
  %2047 = vmatprep.subr.mxu0 0.0
  %2048 = vmatpush1.msra.mxu0 0.0
  %2049 = vmatprep.subr.mxu0 0.0
  %2050 = vmatpush1.msra.mxu0 0.0
  %2051 = vmatprep.subr.mxu0 0.0
  %2052 = vmatpush1.msra.mxu0 0.0
  %2053 = vmatprep.subr.mxu0 0.0
  %2054 = vmatpush1.msra.mxu0 0.0
  %2055 = vmatprep.subr.mxu0 0.0
  %2056 = vmatpush1.msra.mxu0 0.0
  %2057 = vmatprep.subr.mxu0 0.0
  %2058 = vmatpush1.msra.mxu0 0.0
  %2059 = vmatprep.subr.mxu0 0.0
  %2060 = vmatpush1.msra.mxu0 0.0
  %2061 = vmatprep.subr.mxu0 0.0
  %2062 = vmatpush1.msra.mxu0 0.0
  %2063 = vmatprep.subr.mxu0 0.0
  %2064 = vmatpush1.msra.mxu0 0.0
  %2065 = vmatprep.subr.mxu0 0.0
  %2066 = vmatpush1.msra.mxu0 0.0
  %2067 = vmatprep.subr.mxu0 0.0
  %2068 = vmatpush1.msra.mxu0 %v2030
  %2069 = vmatprep.subr.mxu0 0.0
  %2070 = vmatpush1.msra.mxu0 %v2028
  %2071 = vmatprep.subr.mxu0 0.0
  %2072 = vmatpush2.msra.mxu0 0.0
  %2073 = vmatprep.subr.mxu0 0.0
  %2074 = vmatpush2.msra.mxu0 0.0
  %2075 = vmatprep.subr.mxu0 0.0
  %2076 = vmatpush2.msra.mxu0 0.0
  %2077 = vmatprep.subr.mxu0 0.0
  %2078 = vmatpush2.msra.mxu0 0.0
  %2079 = vmatprep.subr.mxu0 0.0
  %2080 = vmatpush2.msra.mxu0 0.0
  %2081 = vmatprep.subr.mxu0 0.0
  %2082 = vmatpush2.msra.mxu0 0.0
  %2083 = vmatprep.subr.mxu0 0.0
  %2084 = vmatpush2.msra.mxu0 0.0
  %2085 = vmatprep.subr.mxu0 0.0
  %2086 = vmatpush2.msra.mxu0 0.0
  %2087 = vmatprep.subr.mxu0 0.0
  %2088 = vmatpush2.msra.mxu0 0.0
  %2089 = vmatprep.subr.mxu0 0.0
  %2090 = vmatpush2.msra.mxu0 0.0
  %2091 = vmatprep.subr.mxu0 0.0
  %2092 = vmatpush2.msra.mxu0 0.0
  %2093 = vmatprep.subr.mxu0 0.0
  %2094 = vmatpush2.msra.mxu0 0.0
  %2095 = vmatprep.subr.mxu0 0.0
  %2096 = vmatpush2.msra.mxu0 0.0
  %2097 = vmatprep.subr.mxu0 0.0
  %2098 = vmatpush2.msra.mxu0 0.0
  %2099 = vmatprep.subr.mxu0 0.0
  %2100 = vmatpush2.msra.mxu0 0.0
  %2101 = vmatprep.subr.mxu0 0.0
  %2102 = vmatpush2.msra.mxu0 0.0
  %2103 = vmatprep.mubr.f32.mxu0 0.0
  %2104 = vmatmul.mubr.f32.gmra.mxu0 %v2034
  %v2105 = vpop.f32.mrf.mxu0
  %v2106 = vadd.f32 0.0, %v2105
  %v2107 = vpop.f32.mrf.mxu0
  %2108 = vmatprep.mubr.f32.mxu0 0.0
  %2109 = vmatmul.mubr.f32.gmra.mxu0 %v2037
  %v2110 = vpop.f32.mrf.mxu0
  %v2111 = vadd.f32 0.0, %v2110
  %v2112 = vpop.f32.mrf.mxu0
  %2113 = vdwg.mxu0
  %2114 = vrot.lane.b32.xlu0 %v1716, 112
  %v2115 = vpop.permute.xlu0 %2114
  %2116 = vrot.lane.b32.xlu0 %v1721, 112
  %v2117 = vpop.permute.xlu0 %2116
  %2118 = vrot.lane.b32.xlu0 %v1716, 80
  %v2119 = vpop.permute.xlu0 %2118
  %2120 = vrot.lane.b32.xlu0 %v1721, 80
  %v2121 = vpop.permute.xlu0 %2120
  %v2122 = vsel %vm457, %v2115, 0
  %v2124 = vsel %vm457, %v2117, 0
  %v2126 = vsel %vm457, %v2119, 0
  %v2128 = vsel %vm457, %v2121, 0
  %2130 = vmatprep.subr.mxu0 0.0
  %2131 = vmatpush1.xpose.msra.mxu0 0.0
  %2132 = vmatprep.subr.mxu0 0.0
  %2133 = vmatpush1.xpose.msra.mxu0 0.0
  %2134 = vmatprep.subr.mxu0 0.0
  %2135 = vmatpush1.xpose.msra.mxu0 0.0
  %2136 = vmatprep.subr.mxu0 0.0
  %2137 = vmatpush1.xpose.msra.mxu0 0.0
  %2138 = vmatprep.subr.mxu0 0.0
  %2139 = vmatpush1.xpose.msra.mxu0 0.0
  %2140 = vmatprep.subr.mxu0 0.0
  %2141 = vmatpush1.xpose.msra.mxu0 0.0
  %2142 = vmatprep.subr.mxu0 0.0
  %2143 = vmatpush1.xpose.msra.mxu0 0.0
  %2144 = vmatprep.subr.mxu0 0.0
  %2145 = vmatpush1.xpose.msra.mxu0 0.0
  %2146 = vmatprep.subr.mxu0 0.0
  %2147 = vmatpush1.xpose.msra.mxu0 0.0
  %2148 = vmatprep.subr.mxu0 0.0
  %2149 = vmatpush1.xpose.msra.mxu0 0.0
  %2150 = vmatprep.subr.mxu0 0.0
  %2151 = vmatpush1.xpose.msra.mxu0 0.0
  %2152 = vmatprep.subr.mxu0 0.0
  %2153 = vmatpush1.xpose.msra.mxu0 0.0
  %2154 = vmatprep.subr.mxu0 0.0
  %2155 = vmatpush1.xpose.msra.mxu0 0.0
  %2156 = vmatprep.subr.mxu0 0.0
  %2157 = vmatpush1.xpose.msra.mxu0 0.0
  %2158 = vmatprep.subr.mxu0 0.0
  %2159 = vmatpush1.xpose.msra.mxu0 %v2128
  %2160 = vmatprep.subr.mxu0 0.0
  %2161 = vmatpush1.xpose.msra.mxu0 %v2126
  %2162 = vmatprep.subr.mxu0 0.0
  %2163 = vmatpush2.xpose.msra.mxu0 0.0
  %2164 = vmatprep.subr.mxu0 0.0
  %2165 = vmatpush2.xpose.msra.mxu0 0.0
  %2166 = vmatprep.subr.mxu0 0.0
  %2167 = vmatpush2.xpose.msra.mxu0 0.0
  %2168 = vmatprep.subr.mxu0 0.0
  %2169 = vmatpush2.xpose.msra.mxu0 0.0
  %2170 = vmatprep.subr.mxu0 0.0
  %2171 = vmatpush2.xpose.msra.mxu0 0.0
  %2172 = vmatprep.subr.mxu0 0.0
  %2173 = vmatpush2.xpose.msra.mxu0 0.0
  %2174 = vmatprep.subr.mxu0 0.0
  %2175 = vmatpush2.xpose.msra.mxu0 0.0
  %2176 = vmatprep.subr.mxu0 0.0
  %2177 = vmatpush2.xpose.msra.mxu0 0.0
  %2178 = vmatprep.subr.mxu0 0.0
  %2179 = vmatpush2.xpose.msra.mxu0 0.0
  %2180 = vmatprep.subr.mxu0 0.0
  %2181 = vmatpush2.xpose.msra.mxu0 0.0
  %2182 = vmatprep.subr.mxu0 0.0
  %2183 = vmatpush2.xpose.msra.mxu0 0.0
  %2184 = vmatprep.subr.mxu0 0.0
  %2185 = vmatpush2.xpose.msra.mxu0 0.0
  %2186 = vmatprep.subr.mxu0 0.0
  %2187 = vmatpush2.xpose.msra.mxu0 0.0
  %2188 = vmatprep.subr.mxu0 0.0
  %2189 = vmatpush2.xpose.msra.mxu0 0.0
  %2190 = vmatprep.subr.mxu0 0.0
  %2191 = vmatpush2.xpose.msra.mxu0 0.0
  %2192 = vmatprep.subr.mxu0 0.0
  %2193 = vmatpush2.xpose.msra.mxu0 0.0
  %2194 = vmatprep.mubr.f32.mxu0 0.0
  %2195 = vmatmul.mubr.f32.gmra.mxu0 %v2122
  %v2196 = vpop.f32.mrf.mxu0
  %v2197 = vadd.f32 0.0, %v2196
  %v2198 = vpop.f32.mrf.mxu0
  %2199 = vmatprep.mubr.f32.mxu0 0.0
  %2200 = vmatmul.mubr.f32.gmra.mxu0 %v2124
  %v2201 = vpop.f32.mrf.mxu0
  %v2202 = vadd.f32 0.0, %v2201
  %v2203 = vpop.f32.mrf.mxu0
  %2204 = vdwg.mxu0
  %v2205 = vmul.f32 %v2197, 0.35355338
  %v2206 = vmul.f32 %v2202, 0.35355338
  %v2207 = vadd.f32 %v2205, %v360
  %v2208 = vadd.f32 %v2206, %v361
  %v2209 = vmul.f32 %v2207, 1.442695
  %v2210 = vpow.pop %v2209
  %v2211 = vmul.f32 %v2208, 1.442695
  %v2212 = vpow.pop %v2211
  %v2213 = vsel %vm105, %v2210, 0.0
  %2214 = vadd.xlane.f32.xlu0 %v2213
  %v2215 = vpop.xlane.xlu0 %2214
  %v2216 = vsel %vm105, %v2212, 0.0
  %2217 = vadd.xlane.f32.xlu0 %v2216
  %v2218 = vpop.xlane.xlu0 %2217
  %v2219 = vrcp.pop %v2215
  %v2220 = vrcp.pop %v2218
  %v2221 = vmul.f32 %v2210, %v2219
  %v2222 = vmul.f32 %v2212, %v2220
  %2223 = vrot.lane.b32.xlu0 %v1716, 48
  %v2224 = vpop.permute.xlu0 %2223
  %2225 = vrot.lane.b32.xlu0 %v1721, 48
  %v2226 = vpop.permute.xlu0 %2225
  %v2230 = vsel %vm105, %v2221, 0
  %v2233 = vsel %vm105, %v2222, 0
  %2235 = vmatprep.subr.mxu0 0.0
  %2236 = vmatpush1.msra.mxu0 0.0
  %2237 = vmatprep.subr.mxu0 0.0
  %2238 = vmatpush1.msra.mxu0 0.0
  %2239 = vmatprep.subr.mxu0 0.0
  %2240 = vmatpush1.msra.mxu0 0.0
  %2241 = vmatprep.subr.mxu0 0.0
  %2242 = vmatpush1.msra.mxu0 0.0
  %2243 = vmatprep.subr.mxu0 0.0
  %2244 = vmatpush1.msra.mxu0 0.0
  %2245 = vmatprep.subr.mxu0 0.0
  %2246 = vmatpush1.msra.mxu0 0.0
  %2247 = vmatprep.subr.mxu0 0.0
  %2248 = vmatpush1.msra.mxu0 0.0
  %2249 = vmatprep.subr.mxu0 0.0
  %2250 = vmatpush1.msra.mxu0 0.0
  %2251 = vmatprep.subr.mxu0 0.0
  %2252 = vmatpush1.msra.mxu0 0.0
  %2253 = vmatprep.subr.mxu0 0.0
  %2254 = vmatpush1.msra.mxu0 0.0
  %2255 = vmatprep.subr.mxu0 0.0
  %2256 = vmatpush1.msra.mxu0 0.0
  %2257 = vmatprep.subr.mxu0 0.0
  %2258 = vmatpush1.msra.mxu0 0.0
  %2259 = vmatprep.subr.mxu0 0.0
  %2260 = vmatpush1.msra.mxu0 0.0
  %2261 = vmatprep.subr.mxu0 0.0
  %2262 = vmatpush1.msra.mxu0 0.0
  %2263 = vmatprep.subr.mxu0 0.0
  %2264 = vmatpush1.msra.mxu0 %v2226
  %2265 = vmatprep.subr.mxu0 0.0
  %2266 = vmatpush1.msra.mxu0 %v2224
  %2267 = vmatprep.subr.mxu0 0.0
  %2268 = vmatpush2.msra.mxu0 0.0
  %2269 = vmatprep.subr.mxu0 0.0
  %2270 = vmatpush2.msra.mxu0 0.0
  %2271 = vmatprep.subr.mxu0 0.0
  %2272 = vmatpush2.msra.mxu0 0.0
  %2273 = vmatprep.subr.mxu0 0.0
  %2274 = vmatpush2.msra.mxu0 0.0
  %2275 = vmatprep.subr.mxu0 0.0
  %2276 = vmatpush2.msra.mxu0 0.0
  %2277 = vmatprep.subr.mxu0 0.0
  %2278 = vmatpush2.msra.mxu0 0.0
  %2279 = vmatprep.subr.mxu0 0.0
  %2280 = vmatpush2.msra.mxu0 0.0
  %2281 = vmatprep.subr.mxu0 0.0
  %2282 = vmatpush2.msra.mxu0 0.0
  %2283 = vmatprep.subr.mxu0 0.0
  %2284 = vmatpush2.msra.mxu0 0.0
  %2285 = vmatprep.subr.mxu0 0.0
  %2286 = vmatpush2.msra.mxu0 0.0
  %2287 = vmatprep.subr.mxu0 0.0
  %2288 = vmatpush2.msra.mxu0 0.0
  %2289 = vmatprep.subr.mxu0 0.0
  %2290 = vmatpush2.msra.mxu0 0.0
  %2291 = vmatprep.subr.mxu0 0.0
  %2292 = vmatpush2.msra.mxu0 0.0
  %2293 = vmatprep.subr.mxu0 0.0
  %2294 = vmatpush2.msra.mxu0 0.0
  %2295 = vmatprep.subr.mxu0 0.0
  %2296 = vmatpush2.msra.mxu0 0.0
  %2297 = vmatprep.subr.mxu0 0.0
  %2298 = vmatpush2.msra.mxu0 0.0
  %2299 = vmatprep.mubr.f32.mxu0 0.0
  %2300 = vmatmul.mubr.f32.gmra.mxu0 %v2230
  %v2301 = vpop.f32.mrf.mxu0
  %v2302 = vadd.f32 0.0, %v2301
  %v2303 = vpop.f32.mrf.mxu0
  %2304 = vmatprep.mubr.f32.mxu0 0.0
  %2305 = vmatmul.mubr.f32.gmra.mxu0 %v2233
  %v2306 = vpop.f32.mrf.mxu0
  %v2307 = vadd.f32 0.0, %v2306
  %v2308 = vpop.f32.mrf.mxu0
  %2309 = vdwg.mxu0
  %2310 = vrot.lane.b32.xlu0 %v1716, 104
  %v2311 = vpop.permute.xlu0 %2310
  %2312 = vrot.lane.b32.xlu0 %v1721, 104
  %v2313 = vpop.permute.xlu0 %2312
  %2314 = vrot.lane.b32.xlu0 %v1716, 72
  %v2315 = vpop.permute.xlu0 %2314
  %2316 = vrot.lane.b32.xlu0 %v1721, 72
  %v2317 = vpop.permute.xlu0 %2316
  %v2318 = vsel %vm457, %v2311, 0
  %v2320 = vsel %vm457, %v2313, 0
  %v2322 = vsel %vm457, %v2315, 0
  %v2324 = vsel %vm457, %v2317, 0
  %2326 = vmatprep.subr.mxu0 0.0
  %2327 = vmatpush1.xpose.msra.mxu0 0.0
  %2328 = vmatprep.subr.mxu0 0.0
  %2329 = vmatpush1.xpose.msra.mxu0 0.0
  %2330 = vmatprep.subr.mxu0 0.0
  %2331 = vmatpush1.xpose.msra.mxu0 0.0
  %2332 = vmatprep.subr.mxu0 0.0
  %2333 = vmatpush1.xpose.msra.mxu0 0.0
  %2334 = vmatprep.subr.mxu0 0.0
  %2335 = vmatpush1.xpose.msra.mxu0 0.0
  %2336 = vmatprep.subr.mxu0 0.0
  %2337 = vmatpush1.xpose.msra.mxu0 0.0
  %2338 = vmatprep.subr.mxu0 0.0
  %2339 = vmatpush1.xpose.msra.mxu0 0.0
  %2340 = vmatprep.subr.mxu0 0.0
  %2341 = vmatpush1.xpose.msra.mxu0 0.0
  %2342 = vmatprep.subr.mxu0 0.0
  %2343 = vmatpush1.xpose.msra.mxu0 0.0
  %2344 = vmatprep.subr.mxu0 0.0
  %2345 = vmatpush1.xpose.msra.mxu0 0.0
  %2346 = vmatprep.subr.mxu0 0.0
  %2347 = vmatpush1.xpose.msra.mxu0 0.0
  %2348 = vmatprep.subr.mxu0 0.0
  %2349 = vmatpush1.xpose.msra.mxu0 0.0
  %2350 = vmatprep.subr.mxu0 0.0
  %2351 = vmatpush1.xpose.msra.mxu0 0.0
  %2352 = vmatprep.subr.mxu0 0.0
  %2353 = vmatpush1.xpose.msra.mxu0 0.0
  %2354 = vmatprep.subr.mxu0 0.0
  %2355 = vmatpush1.xpose.msra.mxu0 %v2324
  %2356 = vmatprep.subr.mxu0 0.0
  %2357 = vmatpush1.xpose.msra.mxu0 %v2322
  %2358 = vmatprep.subr.mxu0 0.0
  %2359 = vmatpush2.xpose.msra.mxu0 0.0
  %2360 = vmatprep.subr.mxu0 0.0
  %2361 = vmatpush2.xpose.msra.mxu0 0.0
  %2362 = vmatprep.subr.mxu0 0.0
  %2363 = vmatpush2.xpose.msra.mxu0 0.0
  %2364 = vmatprep.subr.mxu0 0.0
  %2365 = vmatpush2.xpose.msra.mxu0 0.0
  %2366 = vmatprep.subr.mxu0 0.0
  %2367 = vmatpush2.xpose.msra.mxu0 0.0
  %2368 = vmatprep.subr.mxu0 0.0
  %2369 = vmatpush2.xpose.msra.mxu0 0.0
  %2370 = vmatprep.subr.mxu0 0.0
  %2371 = vmatpush2.xpose.msra.mxu0 0.0
  %2372 = vmatprep.subr.mxu0 0.0
  %2373 = vmatpush2.xpose.msra.mxu0 0.0
  %2374 = vmatprep.subr.mxu0 0.0
  %2375 = vmatpush2.xpose.msra.mxu0 0.0
  %2376 = vmatprep.subr.mxu0 0.0
  %2377 = vmatpush2.xpose.msra.mxu0 0.0
  %2378 = vmatprep.subr.mxu0 0.0
  %2379 = vmatpush2.xpose.msra.mxu0 0.0
  %2380 = vmatprep.subr.mxu0 0.0
  %2381 = vmatpush2.xpose.msra.mxu0 0.0
  %2382 = vmatprep.subr.mxu0 0.0
  %2383 = vmatpush2.xpose.msra.mxu0 0.0
  %2384 = vmatprep.subr.mxu0 0.0
  %2385 = vmatpush2.xpose.msra.mxu0 0.0
  %2386 = vmatprep.subr.mxu0 0.0
  %2387 = vmatpush2.xpose.msra.mxu0 0.0
  %2388 = vmatprep.subr.mxu0 0.0
  %2389 = vmatpush2.xpose.msra.mxu0 0.0
  %2390 = vmatprep.mubr.f32.mxu0 0.0
  %2391 = vmatmul.mubr.f32.gmra.mxu0 %v2318
  %v2392 = vpop.f32.mrf.mxu0
  %v2393 = vadd.f32 0.0, %v2392
  %v2394 = vpop.f32.mrf.mxu0
  %2395 = vmatprep.mubr.f32.mxu0 0.0
  %2396 = vmatmul.mubr.f32.gmra.mxu0 %v2320
  %v2397 = vpop.f32.mrf.mxu0
  %v2398 = vadd.f32 0.0, %v2397
  %v2399 = vpop.f32.mrf.mxu0
  %2400 = vdwg.mxu0
  %v2401 = vmul.f32 %v2393, 0.35355338
  %v2402 = vmul.f32 %v2398, 0.35355338
  %v2403 = vadd.f32 %v2401, %v360
  %v2404 = vadd.f32 %v2402, %v361
  %v2405 = vmul.f32 %v2403, 1.442695
  %v2406 = vpow.pop %v2405
  %v2407 = vmul.f32 %v2404, 1.442695
  %v2408 = vpow.pop %v2407
  %v2409 = vsel %vm105, %v2406, 0.0
  %2410 = vadd.xlane.f32.xlu0 %v2409
  %v2411 = vpop.xlane.xlu0 %2410
  %v2412 = vsel %vm105, %v2408, 0.0
  %2413 = vadd.xlane.f32.xlu0 %v2412
  %v2414 = vpop.xlane.xlu0 %2413
  %v2415 = vrcp.pop %v2411
  %v2416 = vrcp.pop %v2414
  %v2417 = vmul.f32 %v2406, %v2415
  %v2418 = vmul.f32 %v2408, %v2416
  %2419 = vrot.lane.b32.xlu0 %v1716, 40
  %v2420 = vpop.permute.xlu0 %2419
  %2421 = vrot.lane.b32.xlu0 %v1721, 40
  %v2422 = vpop.permute.xlu0 %2421
  %v2426 = vsel %vm105, %v2417, 0
  %v2429 = vsel %vm105, %v2418, 0
  %2431 = vmatprep.subr.mxu0 0.0
  %2432 = vmatpush1.msra.mxu0 0.0
  %2433 = vmatprep.subr.mxu0 0.0
  %2434 = vmatpush1.msra.mxu0 0.0
  %2435 = vmatprep.subr.mxu0 0.0
  %2436 = vmatpush1.msra.mxu0 0.0
  %2437 = vmatprep.subr.mxu0 0.0
  %2438 = vmatpush1.msra.mxu0 0.0
  %2439 = vmatprep.subr.mxu0 0.0
  %2440 = vmatpush1.msra.mxu0 0.0
  %2441 = vmatprep.subr.mxu0 0.0
  %2442 = vmatpush1.msra.mxu0 0.0
  %2443 = vmatprep.subr.mxu0 0.0
  %2444 = vmatpush1.msra.mxu0 0.0
  %2445 = vmatprep.subr.mxu0 0.0
  %2446 = vmatpush1.msra.mxu0 0.0
  %2447 = vmatprep.subr.mxu0 0.0
  %2448 = vmatpush1.msra.mxu0 0.0
  %2449 = vmatprep.subr.mxu0 0.0
  %2450 = vmatpush1.msra.mxu0 0.0
  %2451 = vmatprep.subr.mxu0 0.0
  %2452 = vmatpush1.msra.mxu0 0.0
  %2453 = vmatprep.subr.mxu0 0.0
  %2454 = vmatpush1.msra.mxu0 0.0
  %2455 = vmatprep.subr.mxu0 0.0
  %2456 = vmatpush1.msra.mxu0 0.0
  %2457 = vmatprep.subr.mxu0 0.0
  %2458 = vmatpush1.msra.mxu0 0.0
  %2459 = vmatprep.subr.mxu0 0.0
  %2460 = vmatpush1.msra.mxu0 %v2422
  %2461 = vmatprep.subr.mxu0 0.0
  %2462 = vmatpush1.msra.mxu0 %v2420
  %2463 = vmatprep.subr.mxu0 0.0
  %2464 = vmatpush2.msra.mxu0 0.0
  %2465 = vmatprep.subr.mxu0 0.0
  %2466 = vmatpush2.msra.mxu0 0.0
  %2467 = vmatprep.subr.mxu0 0.0
  %2468 = vmatpush2.msra.mxu0 0.0
  %2469 = vmatprep.subr.mxu0 0.0
  %2470 = vmatpush2.msra.mxu0 0.0
  %2471 = vmatprep.subr.mxu0 0.0
  %2472 = vmatpush2.msra.mxu0 0.0
  %2473 = vmatprep.subr.mxu0 0.0
  %2474 = vmatpush2.msra.mxu0 0.0
  %2475 = vmatprep.subr.mxu0 0.0
  %2476 = vmatpush2.msra.mxu0 0.0
  %2477 = vmatprep.subr.mxu0 0.0
  %2478 = vmatpush2.msra.mxu0 0.0
  %2479 = vmatprep.subr.mxu0 0.0
  %2480 = vmatpush2.msra.mxu0 0.0
  %2481 = vmatprep.subr.mxu0 0.0
  %2482 = vmatpush2.msra.mxu0 0.0
  %2483 = vmatprep.subr.mxu0 0.0
  %2484 = vmatpush2.msra.mxu0 0.0
  %2485 = vmatprep.subr.mxu0 0.0
  %2486 = vmatpush2.msra.mxu0 0.0
  %2487 = vmatprep.subr.mxu0 0.0
  %2488 = vmatpush2.msra.mxu0 0.0
  %2489 = vmatprep.subr.mxu0 0.0
  %2490 = vmatpush2.msra.mxu0 0.0
  %2491 = vmatprep.subr.mxu0 0.0
  %2492 = vmatpush2.msra.mxu0 0.0
  %2493 = vmatprep.subr.mxu0 0.0
  %2494 = vmatpush2.msra.mxu0 0.0
  %2495 = vmatprep.mubr.f32.mxu0 0.0
  %2496 = vmatmul.mubr.f32.gmra.mxu0 %v2426
  %v2497 = vpop.f32.mrf.mxu0
  %v2498 = vadd.f32 0.0, %v2497
  %v2499 = vpop.f32.mrf.mxu0
  %2500 = vmatprep.mubr.f32.mxu0 0.0
  %2501 = vmatmul.mubr.f32.gmra.mxu0 %v2429
  %v2502 = vpop.f32.mrf.mxu0
  %v2503 = vadd.f32 0.0, %v2502
  %v2504 = vpop.f32.mrf.mxu0
  %2505 = vdwg.mxu0
  %2508 = vrot.lane.b32.xlu0 %v2106, 8
  %v2509 = vpop.permute.xlu0 %2508
  %2510 = vrot.lane.b32.xlu0 %v2111, 8
  %v2511 = vpop.permute.xlu0 %2510
  %2516 = vrot.lane.b32.xlu0 %v2302, 16
  %v2517 = vpop.permute.xlu0 %2516
  %2518 = vrot.lane.b32.xlu0 %v2307, 16
  %v2519 = vpop.permute.xlu0 %2518
  %2524 = vrot.lane.b32.xlu0 %v2498, 24
  %v2525 = vpop.permute.xlu0 %2524
  %2526 = vrot.lane.b32.xlu0 %v2503, 24
  %v2527 = vpop.permute.xlu0 %2526
  %v2530 = vsel %vm457, %v1910, %v2509
  %v2531 = vsel %vm457, %v1915, %v2511
  %v2532 = vsel %vm105, %v2530, %v2517
  %v2533 = vsel %vm105, %v2531, %v2519
  %v2534 = vsel %vm1262, %v2532, %v2525
  %v2535 = vsel %vm1262, %v2533, %v2527
  %v2536 = vld [vmem:[%s4 + $0x20] sm:$0xff]
  %v2537 = vld [vmem:[%s4 + $0x28] sm:$0xff]
  %v2538 = vld [vmem:[%s4 + $0x30] sm:$0xff]
  %v2539 = vld [vmem:[%s4 + $0x38] sm:$0xff]
  %v2540 = vlaneseq
  %v2541 = vshrl.u32 %v2540, 7
  %v2542 = vsub.s32 3, %v2541
  %v2543 = vrot.slane %v35, %v2542
  %v2545 = vsel %vm287, %v2534, 0
  %v2548 = vsel %vm287, %v2535, 0
  %2550 = vmatprep.subr.mxu0 0.0
  %2551 = vmatpush1.msra.mxu0 0.0
  %2552 = vmatprep.subr.mxu0 0.0
  %2553 = vmatpush1.msra.mxu0 0.0
  %2554 = vmatprep.subr.mxu0 0.0
  %2555 = vmatpush1.msra.mxu0 0.0
  %2556 = vmatprep.subr.mxu0 0.0
  %2557 = vmatpush1.msra.mxu0 0.0
  %2558 = vmatprep.subr.mxu0 0.0
  %2559 = vmatpush1.msra.mxu0 0.0
  %2560 = vmatprep.subr.mxu0 0.0
  %2561 = vmatpush1.msra.mxu0 0.0
  %2562 = vmatprep.subr.mxu0 0.0
  %2563 = vmatpush1.msra.mxu0 0.0
  %2564 = vmatprep.subr.mxu0 0.0
  %2565 = vmatpush1.msra.mxu0 0.0
  %2566 = vmatprep.subr.mxu0 0.0
  %2567 = vmatpush1.msra.mxu0 0.0
  %2568 = vmatprep.subr.mxu0 0.0
  %2569 = vmatpush1.msra.mxu0 0.0
  %2570 = vmatprep.subr.mxu0 0.0
  %2571 = vmatpush1.msra.mxu0 0.0
  %2572 = vmatprep.subr.mxu0 0.0
  %2573 = vmatpush1.msra.mxu0 0.0
  %2574 = vmatprep.subr.mxu0 0.0
  %2575 = vmatpush1.msra.mxu0 %v2539
  %2576 = vmatprep.subr.mxu0 0.0
  %2577 = vmatpush1.msra.mxu0 %v2538
  %2578 = vmatprep.subr.mxu0 0.0
  %2579 = vmatpush1.msra.mxu0 %v2537
  %2580 = vmatprep.subr.mxu0 0.0
  %2581 = vmatpush1.msra.mxu0 %v2536
  %2582 = vmatprep.subr.mxu0 0.0
  %2583 = vmatpush2.msra.mxu0 0.0
  %2584 = vmatprep.subr.mxu0 0.0
  %2585 = vmatpush2.msra.mxu0 0.0
  %2586 = vmatprep.subr.mxu0 0.0
  %2587 = vmatpush2.msra.mxu0 0.0
  %2588 = vmatprep.subr.mxu0 0.0
  %2589 = vmatpush2.msra.mxu0 0.0
  %2590 = vmatprep.subr.mxu0 0.0
  %2591 = vmatpush2.msra.mxu0 0.0
  %2592 = vmatprep.subr.mxu0 0.0
  %2593 = vmatpush2.msra.mxu0 0.0
  %2594 = vmatprep.subr.mxu0 0.0
  %2595 = vmatpush2.msra.mxu0 0.0
  %2596 = vmatprep.subr.mxu0 0.0
  %2597 = vmatpush2.msra.mxu0 0.0
  %2598 = vmatprep.subr.mxu0 0.0
  %2599 = vmatpush2.msra.mxu0 0.0
  %2600 = vmatprep.subr.mxu0 0.0
  %2601 = vmatpush2.msra.mxu0 0.0
  %2602 = vmatprep.subr.mxu0 0.0
  %2603 = vmatpush2.msra.mxu0 0.0
  %2604 = vmatprep.subr.mxu0 0.0
  %2605 = vmatpush2.msra.mxu0 0.0
  %2606 = vmatprep.subr.mxu0 0.0
  %2607 = vmatpush2.msra.mxu0 0.0
  %2608 = vmatprep.subr.mxu0 0.0
  %2609 = vmatpush2.msra.mxu0 0.0
  %2610 = vmatprep.subr.mxu0 0.0
  %2611 = vmatpush2.msra.mxu0 0.0
  %2612 = vmatprep.subr.mxu0 0.0
  %2613 = vmatpush2.msra.mxu0 0.0
  %2614 = vmatprep.mubr.f32.mxu0 0.0
  %2615 = vmatmul.mubr.f32.gmra.mxu0 %v2545
  %v2616 = vpop.f32.mrf.mxu0
  %v2617 = vadd.f32 %v2543, %v2616
  %v2618 = vpop.f32.mrf.mxu0
  %2619 = vmatprep.mubr.f32.mxu0 0.0
  %2620 = vmatmul.mubr.f32.gmra.mxu0 %v2548
  %v2621 = vpop.f32.mrf.mxu0
  %v2622 = vadd.f32 %v2543, %v2621
  %v2623 = vpop.f32.mrf.mxu0
  %2624 = vdwg.mxu0
  %v2625 = vadd.f32 %v2617, %v1633
  %v2626 = vadd.f32 %v2622, %v1634
  %v2627 = vsel %vm287, %v2625, 0.0
  %2628 = vadd.xlane.f32.xlu0 %v2627
  %v2629 = vpop.xlane.xlu0 %2628
  %v2630 = vsel %vm287, %v2626, 0.0
  %2631 = vadd.xlane.f32.xlu0 %v2630
  %v2632 = vpop.xlane.xlu0 %2631
  %v2633 = vmul.f32 %v2629, %v294
  %v2634 = vmul.f32 %v2632, %v294
  %v2635 = vsub.f32 %v2625, %v2633
  %v2636 = vsub.f32 %v2626, %v2634
  %v2637 = vmul.f32 %v2635, %v2635
  %v2638 = vmul.f32 %v2636, %v2636
  %v2639 = vsel %vm287, %v2637, 0.0
  %2640 = vadd.xlane.f32.xlu0 %v2639
  %v2641 = vpop.xlane.xlu0 %2640
  %v2642 = vsel %vm287, %v2638, 0.0
  %2643 = vadd.xlane.f32.xlu0 %v2642
  %v2644 = vpop.xlane.xlu0 %2643
  %v2645 = vmul.f32 %v2641, %v294
  %v2646 = vmul.f32 %v2644, %v294
  %v2647 = vadd.f32 %v2645, 1e-12
  %v2648 = vadd.f32 %v2646, 1e-12
  %v2649 = vrsqrt.pop %v2647
  %v2650 = vrsqrt.pop %v2648
  %v2651 = vmul.f32 %v2635, %v2649
  %v2652 = vmul.f32 %v2636, %v2650
  %v2653 = vlaneseq
  %v2654 = vshrl.u32 %v2653, 7
  %v2655 = vsub.s32 4, %v2654
  %v2656 = vrot.slane %v35, %v2655
  %v2657 = vmul.f32 %v2651, %v2656
  %v2658 = vmul.f32 %v2652, %v2656
  %v2659 = vlaneseq
  %v2660 = vshrl.u32 %v2659, 7
  %v2661 = vsub.s32 5, %v2660
  %v2662 = vrot.slane %v35, %v2661
  %v2663 = vadd.f32 %v2657, %v2662
  %v2664 = vadd.f32 %v2658, %v2662
  %v2665 = vld [vmem:[%s5 + $0x20] sm:$0xff]
  %v2666 = vld [vmem:[%s5 + $0x28] sm:$0xff]
  %v2667 = vld [vmem:[%s5 + $0x30] sm:$0xff]
  %v2668 = vld [vmem:[%s5 + $0x38] sm:$0xff]
  %v2669 = vlaneseq
  %v2670 = vshrl.u32 %v2669, 7
  %v2671 = vsub.s32 6, %v2670
  %v2672 = vrot.slane %v35, %v2671
  %v2674 = vsel %vm287, %v2663, 0
  %v2677 = vsel %vm287, %v2664, 0
  %2679 = vmatprep.subr.mxu0 0.0
  %2680 = vmatpush1.msra.mxu0 0.0
  %2681 = vmatprep.subr.mxu0 0.0
  %2682 = vmatpush1.msra.mxu0 0.0
  %2683 = vmatprep.subr.mxu0 0.0
  %2684 = vmatpush1.msra.mxu0 0.0
  %2685 = vmatprep.subr.mxu0 0.0
  %2686 = vmatpush1.msra.mxu0 0.0
  %2687 = vmatprep.subr.mxu0 0.0
  %2688 = vmatpush1.msra.mxu0 0.0
  %2689 = vmatprep.subr.mxu0 0.0
  %2690 = vmatpush1.msra.mxu0 0.0
  %2691 = vmatprep.subr.mxu0 0.0
  %2692 = vmatpush1.msra.mxu0 0.0
  %2693 = vmatprep.subr.mxu0 0.0
  %2694 = vmatpush1.msra.mxu0 0.0
  %2695 = vmatprep.subr.mxu0 0.0
  %2696 = vmatpush1.msra.mxu0 0.0
  %2697 = vmatprep.subr.mxu0 0.0
  %2698 = vmatpush1.msra.mxu0 0.0
  %2699 = vmatprep.subr.mxu0 0.0
  %2700 = vmatpush1.msra.mxu0 0.0
  %2701 = vmatprep.subr.mxu0 0.0
  %2702 = vmatpush1.msra.mxu0 0.0
  %2703 = vmatprep.subr.mxu0 0.0
  %2704 = vmatpush1.msra.mxu0 %v2668
  %2705 = vmatprep.subr.mxu0 0.0
  %2706 = vmatpush1.msra.mxu0 %v2667
  %2707 = vmatprep.subr.mxu0 0.0
  %2708 = vmatpush1.msra.mxu0 %v2666
  %2709 = vmatprep.subr.mxu0 0.0
  %2710 = vmatpush1.msra.mxu0 %v2665
  %2711 = vmatprep.subr.mxu0 0.0
  %2712 = vmatpush2.msra.mxu0 0.0
  %2713 = vmatprep.subr.mxu0 0.0
  %2714 = vmatpush2.msra.mxu0 0.0
  %2715 = vmatprep.subr.mxu0 0.0
  %2716 = vmatpush2.msra.mxu0 0.0
  %2717 = vmatprep.subr.mxu0 0.0
  %2718 = vmatpush2.msra.mxu0 0.0
  %2719 = vmatprep.subr.mxu0 0.0
  %2720 = vmatpush2.msra.mxu0 0.0
  %2721 = vmatprep.subr.mxu0 0.0
  %2722 = vmatpush2.msra.mxu0 0.0
  %2723 = vmatprep.subr.mxu0 0.0
  %2724 = vmatpush2.msra.mxu0 0.0
  %2725 = vmatprep.subr.mxu0 0.0
  %2726 = vmatpush2.msra.mxu0 0.0
  %2727 = vmatprep.subr.mxu0 0.0
  %2728 = vmatpush2.msra.mxu0 0.0
  %2729 = vmatprep.subr.mxu0 0.0
  %2730 = vmatpush2.msra.mxu0 0.0
  %2731 = vmatprep.subr.mxu0 0.0
  %2732 = vmatpush2.msra.mxu0 0.0
  %2733 = vmatprep.subr.mxu0 0.0
  %2734 = vmatpush2.msra.mxu0 0.0
  %2735 = vmatprep.subr.mxu0 0.0
  %2736 = vmatpush2.msra.mxu0 0.0
  %2737 = vmatprep.subr.mxu0 0.0
  %2738 = vmatpush2.msra.mxu0 0.0
  %2739 = vmatprep.subr.mxu0 0.0
  %2740 = vmatpush2.msra.mxu0 0.0
  %2741 = vmatprep.subr.mxu0 0.0
  %2742 = vmatpush2.msra.mxu0 0.0
  %2743 = vmatprep.mubr.f32.mxu0 0.0
  %2744 = vmatmul.mubr.f32.gmra.mxu0 %v2674
  %v2745 = vpop.f32.mrf.mxu0
  %v2746 = vadd.f32 %v2672, %v2745
  %v2747 = vpop.f32.mrf.mxu0
  %2748 = vmatprep.mubr.f32.mxu0 0.0
  %2749 = vmatmul.mubr.f32.gmra.mxu0 %v2677
  %v2750 = vpop.f32.mrf.mxu0
  %v2751 = vadd.f32 %v2672, %v2750
  %v2752 = vpop.f32.mrf.mxu0
  %2753 = vdwg.mxu0
  %v2754 = vmul.f32 %v2746, 0.5
  %v2755 = vmul.f32 %v2751, 0.5
  %v2756 = vmul.f32 %v2746, 0.044715
  %v2757 = vmul.f32 %v2751, 0.044715
  %v2758 = vmul.f32 %v2756, %v2746
  %v2759 = vmul.f32 %v2757, %v2751
  %v2760 = vmul.f32 %v2758, %v2746
  %v2761 = vmul.f32 %v2759, %v2751
  %v2762 = vadd.f32 %v2746, %v2760
  %v2763 = vadd.f32 %v2751, %v2761
  %v2764 = vmul.f32 %v2762, 0.7978846
  %v2765 = vmul.f32 %v2763, 0.7978846
  %v2766 = vtanh.pop %v2764
  %v2767 = vtanh.pop %v2765
  %v2768 = vadd.f32 %v2766, 1.0
  %v2769 = vadd.f32 %v2767, 1.0
  %v2770 = vmul.f32 %v2754, %v2768
  %v2771 = vmul.f32 %v2755, %v2769
  %v2772 = vld [vmem:[%s6 + $0x40] sm:$0xff]
  %v2773 = vld [vmem:[%s6 + $0x48] sm:$0xff]
  %v2774 = vld [vmem:[%s6 + $0x50] sm:$0xff]
  %v2775 = vld [vmem:[%s6 + $0x58] sm:$0xff]
  %v2776 = vld [vmem:[%s6 + $0x60] sm:$0xff]
  %v2777 = vld [vmem:[%s6 + $0x68] sm:$0xff]
  %v2778 = vld [vmem:[%s6 + $0x70] sm:$0xff]
  %v2779 = vld [vmem:[%s6 + $0x78] sm:$0xff]
  %v2780 = vlaneseq
  %v2781 = vshrl.u32 %v2780, 7
  %v2782 = vsub.s32 7, %v2781
  %v2783 = vrot.slane %v35, %v2782
  %v2785 = vsel %vm1513, %v2770, 0
  %v2788 = vsel %vm1513, %v2771, 0
  %2790 = vmatprep.subr.mxu0 0.0
  %2791 = vmatpush1.msra.mxu0 0.0
  %2792 = vmatprep.subr.mxu0 0.0
  %2793 = vmatpush1.msra.mxu0 0.0
  %2794 = vmatprep.subr.mxu0 0.0
  %2795 = vmatpush1.msra.mxu0 0.0
  %2796 = vmatprep.subr.mxu0 0.0
  %2797 = vmatpush1.msra.mxu0 0.0
  %2798 = vmatprep.subr.mxu0 0.0
  %2799 = vmatpush1.msra.mxu0 0.0
  %2800 = vmatprep.subr.mxu0 0.0
  %2801 = vmatpush1.msra.mxu0 0.0
  %2802 = vmatprep.subr.mxu0 0.0
  %2803 = vmatpush1.msra.mxu0 0.0
  %2804 = vmatprep.subr.mxu0 0.0
  %2805 = vmatpush1.msra.mxu0 0.0
  %2806 = vmatprep.subr.mxu0 0.0
  %2807 = vmatpush1.msra.mxu0 %v2779
  %2808 = vmatprep.subr.mxu0 0.0
  %2809 = vmatpush1.msra.mxu0 %v2778
  %2810 = vmatprep.subr.mxu0 0.0
  %2811 = vmatpush1.msra.mxu0 %v2777
  %2812 = vmatprep.subr.mxu0 0.0
  %2813 = vmatpush1.msra.mxu0 %v2776
  %2814 = vmatprep.subr.mxu0 0.0
  %2815 = vmatpush1.msra.mxu0 %v2775
  %2816 = vmatprep.subr.mxu0 0.0
  %2817 = vmatpush1.msra.mxu0 %v2774
  %2818 = vmatprep.subr.mxu0 0.0
  %2819 = vmatpush1.msra.mxu0 %v2773
  %2820 = vmatprep.subr.mxu0 0.0
  %2821 = vmatpush1.msra.mxu0 %v2772
  %2822 = vmatprep.subr.mxu0 0.0
  %2823 = vmatpush2.msra.mxu0 0.0
  %2824 = vmatprep.subr.mxu0 0.0
  %2825 = vmatpush2.msra.mxu0 0.0
  %2826 = vmatprep.subr.mxu0 0.0
  %2827 = vmatpush2.msra.mxu0 0.0
  %2828 = vmatprep.subr.mxu0 0.0
  %2829 = vmatpush2.msra.mxu0 0.0
  %2830 = vmatprep.subr.mxu0 0.0
  %2831 = vmatpush2.msra.mxu0 0.0
  %2832 = vmatprep.subr.mxu0 0.0
  %2833 = vmatpush2.msra.mxu0 0.0
  %2834 = vmatprep.subr.mxu0 0.0
  %2835 = vmatpush2.msra.mxu0 0.0
  %2836 = vmatprep.subr.mxu0 0.0
  %2837 = vmatpush2.msra.mxu0 0.0
  %2838 = vmatprep.subr.mxu0 0.0
  %2839 = vmatpush2.msra.mxu0 0.0
  %2840 = vmatprep.subr.mxu0 0.0
  %2841 = vmatpush2.msra.mxu0 0.0
  %2842 = vmatprep.subr.mxu0 0.0
  %2843 = vmatpush2.msra.mxu0 0.0
  %2844 = vmatprep.subr.mxu0 0.0
  %2845 = vmatpush2.msra.mxu0 0.0
  %2846 = vmatprep.subr.mxu0 0.0
  %2847 = vmatpush2.msra.mxu0 0.0
  %2848 = vmatprep.subr.mxu0 0.0
  %2849 = vmatpush2.msra.mxu0 0.0
  %2850 = vmatprep.subr.mxu0 0.0
  %2851 = vmatpush2.msra.mxu0 0.0
  %2852 = vmatprep.subr.mxu0 0.0
  %2853 = vmatpush2.msra.mxu0 0.0
  %2854 = vmatprep.mubr.f32.mxu0 0.0
  %2855 = vmatmul.mubr.f32.gmra.mxu0 %v2785
  %v2856 = vpop.f32.mrf.mxu0
  %v2857 = vadd.f32 %v2783, %v2856
  %v2858 = vpop.f32.mrf.mxu0
  %2859 = vmatprep.mubr.f32.mxu0 0.0
  %2860 = vmatmul.mubr.f32.gmra.mxu0 %v2788
  %v2861 = vpop.f32.mrf.mxu0
  %v2862 = vadd.f32 %v2783, %v2861
  %v2863 = vpop.f32.mrf.mxu0
  %2864 = vdwg.mxu0
  %v2865 = vadd.f32 %v2857, %v2663
  %v2866 = vadd.f32 %v2862, %v2664
  %v2867 = vsel %vm287, %v2865, 0.0
  %2868 = vadd.xlane.f32.xlu0 %v2867
  %v2869 = vpop.xlane.xlu0 %2868
  %v2870 = vsel %vm287, %v2866, 0.0
  %2871 = vadd.xlane.f32.xlu0 %v2870
  %v2872 = vpop.xlane.xlu0 %2871
  %v2873 = vmul.f32 %v2869, %v294
  %v2874 = vmul.f32 %v2872, %v294
  %v2875 = vsub.f32 %v2865, %v2873
  %v2876 = vsub.f32 %v2866, %v2874
  %v2877 = vmul.f32 %v2875, %v2875
  %v2878 = vmul.f32 %v2876, %v2876
  %v2879 = vsel %vm287, %v2877, 0.0
  %2880 = vadd.xlane.f32.xlu0 %v2879
  %v2881 = vpop.xlane.xlu0 %2880
  %v2882 = vsel %vm287, %v2878, 0.0
  %2883 = vadd.xlane.f32.xlu0 %v2882
  %v2884 = vpop.xlane.xlu0 %2883
  %v2885 = vmul.f32 %v2881, %v294
  %v2886 = vmul.f32 %v2884, %v294
  %v2887 = vadd.f32 %v2885, 1e-12
  %v2888 = vadd.f32 %v2886, 1e-12
  %v2889 = vrsqrt.pop %v2887
  %v2890 = vrsqrt.pop %v2888
  %v2891 = vmul.f32 %v2875, %v2889
  %v2892 = vmul.f32 %v2876, %v2890
  %v2893 = vlaneseq
  %v2894 = vshrl.u32 %v2893, 7
  %v2895 = vsub.s32 0, %v2894
  %v2896 = vrot.slane %v36, %v2895
  %v2897 = vmul.f32 %v2891, %v2896
  %v2898 = vmul.f32 %v2892, %v2896
  %v2899 = vlaneseq
  %v2900 = vshrl.u32 %v2899, 7
  %v2901 = vsub.s32 1, %v2900
  %v2902 = vrot.slane %v36, %v2901
  %v2903 = vadd.f32 %v2897, %v2902
  %v2904 = vadd.f32 %v2898, %v2902
  %v2905 = vld [vmem:[%s7] sm:$0xff]
  %v2906 = vld [vmem:[%s7 + $0x8] sm:$0xff]
  %v2907 = vld [vmem:[%s7 + $0x10] sm:$0xff]
  %v2908 = vld [vmem:[%s7 + $0x18] sm:$0xff]
  %v2909 = vlaneseq
  %v2910 = vshrl.u32 %v2909, 7
  %v2911 = vsub.s32 2, %v2910
  %v2912 = vrot.slane %v36, %v2911
  %v2914 = vsel %vm287, %v2903, 0
  %v2917 = vsel %vm287, %v2904, 0
  %2919 = vmatprep.subr.mxu0 0.0
  %2920 = vmatpush1.msra.mxu0 0.0
  %2921 = vmatprep.subr.mxu0 0.0
  %2922 = vmatpush1.msra.mxu0 0.0
  %2923 = vmatprep.subr.mxu0 0.0
  %2924 = vmatpush1.msra.mxu0 0.0
  %2925 = vmatprep.subr.mxu0 0.0
  %2926 = vmatpush1.msra.mxu0 0.0
  %2927 = vmatprep.subr.mxu0 0.0
  %2928 = vmatpush1.msra.mxu0 0.0
  %2929 = vmatprep.subr.mxu0 0.0
  %2930 = vmatpush1.msra.mxu0 0.0
  %2931 = vmatprep.subr.mxu0 0.0
  %2932 = vmatpush1.msra.mxu0 0.0
  %2933 = vmatprep.subr.mxu0 0.0
  %2934 = vmatpush1.msra.mxu0 0.0
  %2935 = vmatprep.subr.mxu0 0.0
  %2936 = vmatpush1.msra.mxu0 0.0
  %2937 = vmatprep.subr.mxu0 0.0
  %2938 = vmatpush1.msra.mxu0 0.0
  %2939 = vmatprep.subr.mxu0 0.0
  %2940 = vmatpush1.msra.mxu0 0.0
  %2941 = vmatprep.subr.mxu0 0.0
  %2942 = vmatpush1.msra.mxu0 0.0
  %2943 = vmatprep.subr.mxu0 0.0
  %2944 = vmatpush1.msra.mxu0 %v2908
  %2945 = vmatprep.subr.mxu0 0.0
  %2946 = vmatpush1.msra.mxu0 %v2907
  %2947 = vmatprep.subr.mxu0 0.0
  %2948 = vmatpush1.msra.mxu0 %v2906
  %2949 = vmatprep.subr.mxu0 0.0
  %2950 = vmatpush1.msra.mxu0 %v2905
  %2951 = vmatprep.subr.mxu0 0.0
  %2952 = vmatpush2.msra.mxu0 0.0
  %2953 = vmatprep.subr.mxu0 0.0
  %2954 = vmatpush2.msra.mxu0 0.0
  %2955 = vmatprep.subr.mxu0 0.0
  %2956 = vmatpush2.msra.mxu0 0.0
  %2957 = vmatprep.subr.mxu0 0.0
  %2958 = vmatpush2.msra.mxu0 0.0
  %2959 = vmatprep.subr.mxu0 0.0
  %2960 = vmatpush2.msra.mxu0 0.0
  %2961 = vmatprep.subr.mxu0 0.0
  %2962 = vmatpush2.msra.mxu0 0.0
  %2963 = vmatprep.subr.mxu0 0.0
  %2964 = vmatpush2.msra.mxu0 0.0
  %2965 = vmatprep.subr.mxu0 0.0
  %2966 = vmatpush2.msra.mxu0 0.0
  %2967 = vmatprep.subr.mxu0 0.0
  %2968 = vmatpush2.msra.mxu0 0.0
  %2969 = vmatprep.subr.mxu0 0.0
  %2970 = vmatpush2.msra.mxu0 0.0
  %2971 = vmatprep.subr.mxu0 0.0
  %2972 = vmatpush2.msra.mxu0 0.0
  %2973 = vmatprep.subr.mxu0 0.0
  %2974 = vmatpush2.msra.mxu0 0.0
  %2975 = vmatprep.subr.mxu0 0.0
  %2976 = vmatpush2.msra.mxu0 0.0
  %2977 = vmatprep.subr.mxu0 0.0
  %2978 = vmatpush2.msra.mxu0 0.0
  %2979 = vmatprep.subr.mxu0 0.0
  %2980 = vmatpush2.msra.mxu0 0.0
  %2981 = vmatprep.subr.mxu0 0.0
  %2982 = vmatpush2.msra.mxu0 0.0
  %2983 = vmatprep.mubr.f32.mxu0 0.0
  %2984 = vmatmul.mubr.f32.gmra.mxu0 %v2914
  %v2985 = vpop.f32.mrf.mxu0
  %v2986 = vadd.f32 %v2912, %v2985
  %v2987 = vpop.f32.mrf.mxu0
  %2988 = vmatprep.mubr.f32.mxu0 0.0
  %2989 = vmatmul.mubr.f32.gmra.mxu0 %v2917
  %v2990 = vpop.f32.mrf.mxu0
  %v2991 = vadd.f32 %v2912, %v2990
  %v2992 = vpop.f32.mrf.mxu0
  %2993 = vdwg.mxu0
  %v2994 = vtanh.pop %v2986
  %v2995 = vtanh.pop %v2991
  %v2996 = vlaneseq
  %v2997 = vshrl.u32 %v2996, 7
  %v2998 = vsub.s32 3, %v2997
  %v2999 = vrot.slane %v36, %v2998
  %3004 = vrot.lane.b32.xlu0 %v2905, 96
  %v3005 = vpop.permute.xlu0 %3004
  %3006 = vrot.lane.b32.xlu0 %v2906, 96
  %v3007 = vpop.permute.xlu0 %3006
  %3008 = vrot.lane.b32.xlu0 %v2907, 96
  %v3009 = vpop.permute.xlu0 %3008
  %3010 = vrot.lane.b32.xlu0 %v2908, 96
  %v3011 = vpop.permute.xlu0 %3010
  %v3017 = vsel %vm287, %v2994, 0
  %v3020 = vsel %vm287, %v2995, 0
  %3022 = vmatprep.subr.mxu0 0.0
  %3023 = vmatpush1.msra.mxu0 0.0
  %3024 = vmatprep.subr.mxu0 0.0
  %3025 = vmatpush1.msra.mxu0 0.0
  %3026 = vmatprep.subr.mxu0 0.0
  %3027 = vmatpush1.msra.mxu0 0.0
  %3028 = vmatprep.subr.mxu0 0.0
  %3029 = vmatpush1.msra.mxu0 0.0
  %3030 = vmatprep.subr.mxu0 0.0
  %3031 = vmatpush1.msra.mxu0 0.0
  %3032 = vmatprep.subr.mxu0 0.0
  %3033 = vmatpush1.msra.mxu0 0.0
  %3034 = vmatprep.subr.mxu0 0.0
  %3035 = vmatpush1.msra.mxu0 0.0
  %3036 = vmatprep.subr.mxu0 0.0
  %3037 = vmatpush1.msra.mxu0 0.0
  %3038 = vmatprep.subr.mxu0 0.0
  %3039 = vmatpush1.msra.mxu0 0.0
  %3040 = vmatprep.subr.mxu0 0.0
  %3041 = vmatpush1.msra.mxu0 0.0
  %3042 = vmatprep.subr.mxu0 0.0
  %3043 = vmatpush1.msra.mxu0 0.0
  %3044 = vmatprep.subr.mxu0 0.0
  %3045 = vmatpush1.msra.mxu0 0.0
  %3046 = vmatprep.subr.mxu0 0.0
  %3047 = vmatpush1.msra.mxu0 %v3011
  %3048 = vmatprep.subr.mxu0 0.0
  %3049 = vmatpush1.msra.mxu0 %v3009
  %3050 = vmatprep.subr.mxu0 0.0
  %3051 = vmatpush1.msra.mxu0 %v3007
  %3052 = vmatprep.subr.mxu0 0.0
  %3053 = vmatpush1.msra.mxu0 %v3005
  %3054 = vmatprep.subr.mxu0 0.0
  %3055 = vmatpush2.msra.mxu0 0.0
  %3056 = vmatprep.subr.mxu0 0.0
  %3057 = vmatpush2.msra.mxu0 0.0
  %3058 = vmatprep.subr.mxu0 0.0
  %3059 = vmatpush2.msra.mxu0 0.0
  %3060 = vmatprep.subr.mxu0 0.0
  %3061 = vmatpush2.msra.mxu0 0.0
  %3062 = vmatprep.subr.mxu0 0.0
  %3063 = vmatpush2.msra.mxu0 0.0
  %3064 = vmatprep.subr.mxu0 0.0
  %3065 = vmatpush2.msra.mxu0 0.0
  %3066 = vmatprep.subr.mxu0 0.0
  %3067 = vmatpush2.msra.mxu0 0.0
  %3068 = vmatprep.subr.mxu0 0.0
  %3069 = vmatpush2.msra.mxu0 0.0
  %3070 = vmatprep.subr.mxu0 0.0
  %3071 = vmatpush2.msra.mxu0 0.0
  %3072 = vmatprep.subr.mxu0 0.0
  %3073 = vmatpush2.msra.mxu0 0.0
  %3074 = vmatprep.subr.mxu0 0.0
  %3075 = vmatpush2.msra.mxu0 0.0
  %3076 = vmatprep.subr.mxu0 0.0
  %3077 = vmatpush2.msra.mxu0 0.0
  %3078 = vmatprep.subr.mxu0 0.0
  %3079 = vmatpush2.msra.mxu0 0.0
  %3080 = vmatprep.subr.mxu0 0.0
  %3081 = vmatpush2.msra.mxu0 0.0
  %3082 = vmatprep.subr.mxu0 0.0
  %3083 = vmatpush2.msra.mxu0 0.0
  %3084 = vmatprep.subr.mxu0 0.0
  %3085 = vmatpush2.msra.mxu0 0.0
  %3086 = vmatprep.mubr.f32.mxu0 0.0
  %3087 = vmatmul.mubr.f32.gmra.mxu0 %v3017
  %v3088 = vpop.f32.mrf.mxu0
  %v3089 = vadd.f32 %v2999, %v3088
  %v3090 = vpop.f32.mrf.mxu0
  %3091 = vmatprep.mubr.f32.mxu0 0.0
  %3092 = vmatmul.mubr.f32.gmra.mxu0 %v3020
  %v3093 = vpop.f32.mrf.mxu0
  %v3094 = vadd.f32 %v2999, %v3093
  %v3095 = vpop.f32.mrf.mxu0
  %3096 = vdwg.mxu0
  %vm3097 = vcmask 15360
  %v3098 = vsel %vm3097, %v3089, -inf
  %3099 = vmax.xlane.f32.xlu0 %v3098
  %v3100 = vpop.xlane.xlu0 %3099
  %v3101 = vsel %vm3097, %v3094, -inf
  %3102 = vmax.xlane.f32.xlu0 %v3101
  %v3103 = vpop.xlane.xlu0 %3102
  %v3104 = vsub.f32 %v3089, %v3100
  %v3105 = vsub.f32 %v3094, %v3103
  %v3106 = vmul.f32 %v3104, 1.442695
  %v3107 = vpow.pop %v3106
  %v3108 = vmul.f32 %v3105, 1.442695
  %v3109 = vpow.pop %v3108
  %v3110 = vsel %vm3097, %v3107, 0.0
  %3111 = vadd.xlane.f32.xlu0 %v3110
  %v3112 = vpop.xlane.xlu0 %3111
  %v3113 = vsel %vm3097, %v3109, 0.0
  %3114 = vadd.xlane.f32.xlu0 %v3113
  %v3115 = vpop.xlane.xlu0 %3114
  %v3116 = vlog2.pop %v3112
  %v3117 = vmul.f32 %v3116, 0.6931472
  %v3118 = vlog2.pop %v3115
  %v3119 = vmul.f32 %v3118, 0.6931472
  %v3120 = vsub.f32 %v3104, %v3117
  %v3121 = vsub.f32 %v3105, %v3119
  %v3122 = vrcp.pop %v3112
  %v3123 = vmul.f32 %v3107, %v3122
  %v3124 = vrcp.pop %v3115
  %v3125 = vmul.f32 %v3109, %v3124
  %3126 = vset.pattern.permute.xlu0 2
  %3127 = vperm.xlu0 %3126, %v32
  %v3128 = vpop.permute.xlu0 %3127
  %3129 = vset.pattern.permute.xlu0 2
  %3130 = vperm.xlu0 %3129, %v33
  %v3131 = vpop.permute.xlu0 %3130
  %vm3132 = vcmp.eq.s32.totalorder %v38, %v3128
  %vm3133 = vcmp.eq.s32.totalorder %v38, %v3131
  %v3134 = vsel %vm3132, 1, 0
  %v3135 = vsel %vm3133, 1, 0
  %v3136 = vcvt.s32.f32 %v3134
  %v3137 = vcvt.s32.f32 %v3135
  %v3138 = vmul.f32 %v3136, %v3120
  %v3139 = vmul.f32 %v3137, %v3121
  %v3140 = vsel %vm3097, %v3138, 0.0
  %3141 = vadd.xlane.f32.xlu0 %v3140
  %v3142 = vpop.xlane.xlu0 %3141
  %v3143 = vsel %vm3097, %v3139, 0.0
  %3144 = vadd.xlane.f32.xlu0 %v3143
  %v3145 = vpop.xlane.xlu0 %3144
  %v3146 = vsub.f32 0.0, %v3142
  %v3147 = vsub.f32 0.0, %v3145
  %3148 = vst [vmem:[%s9] sm:$0xff] 0.0
  %3149 = vst [vmem:[%s9 + $0x8] sm:$0xff] 0.0
  %3150 = vst.msk [vmem:[%s9] sm:$0xff] %vm3097, %v3089
  %3151 = vst.msk [vmem:[%s9 + $0x8] sm:$0xff] %vm3097, %v3094
  %3154 = vrot.lane.b32.xlu0 %v3123, 2
  %v3155 = vpop.permute.xlu0 %3154
  %3156 = vrot.lane.b32.xlu0 %v3125, 2
  %v3157 = vpop.permute.xlu0 %3156
  %vm3160 = vcmask 31760
  %3161 = vst.msk [vmem:[%s9] sm:$0xff] %vm3160, %v3155
  %3162 = vst.msk [vmem:[%s9 + $0x8] sm:$0xff] %vm3160, %v3157
  %vm3163 = vcmask 39968
  %3164 = vst.msk [vmem:[%s9] sm:$0xff] %vm3163, %v3146
  %3165 = vst.msk [vmem:[%s9 + $0x8] sm:$0xff] %vm3163, %v3147
  // Predicated region
  $region38: #{bert_model_test_forward.1} parent=0 // pred_check
    _
  $region39: #{bert_model_test_forward.1} parent=0 // pred_check_branch
    %3167 = sbr.rel (0) target = $region41
  $region40: #{bert_model_test_forward.1} parent=0 // pred_region
    _
  $region41: #{bert_model_test_forward.1} parent=0 // pred_fallthru
    _
  // Predicated region
  $region42: #{bert_model_test_forward.1} parent=0 // pred_check
    _
  $region43: #{bert_model_test_forward.1} parent=0 // pred_check_branch
    %3169 = sbr.rel (0) target = $region45
  $region44: #{bert_model_test_forward.1} parent=0 // pred_region
    _
  $region45: #{bert_model_test_forward.1} parent=0 // pred_fallthru
    _

</llo_original>
